<compile_context>
chip_gen: v7x
topology: tpu7x:2x2x1
jax: 0.10.0
libtpu: 0.0.40
codegen_flags: <defaults>
</compile_context>

<pallas_src>
import functools

import jax
import jax.numpy as jnp
from jax.experimental import pallas as pl
from jax.experimental.pallas import tpu as pltpu

NUM_CLASSES = 10
NA = 3                       # anchors per scale
NO = NUM_CLASSES + 5         # 15 real per-anchor channels
NO_PAD = 16                  # per-anchor channels padded 15 -> 16
ANCHORS = ((10.0, 13.0), (16.0, 30.0), (33.0, 23.0))


def _round_up(x, m):
    return (x + m - 1) // m * m


@functools.lru_cache(maxsize=None)
def _vmem_limit_bytes():
    cap = 64 * 1024 * 1024                      # conservative fallback (v7x physical)
    try:
        cap = int(pltpu.get_tpu_info().vmem_capacity_bytes)
    except Exception:
        pass
    # ~48 MiB on v7x (64 MiB physical), ~96-100 MiB on v5e/v6e (128 MiB).
    return max(32 * 1024 * 1024, min(3 * cap // 4, 100 * 1024 * 1024))


def _compiler_params():
    return pltpu.CompilerParams(dimension_semantics=("parallel",),
                                vmem_limit_bytes=_vmem_limit_bytes())


def _silu(v):
    return v * jax.nn.sigmoid(v)


def _gy_gx(hw, w):
    """Per-row (gy, gx) spatial coordinates as exact f32 (avoids int vector div)."""
    rowf = jax.lax.broadcasted_iota(jnp.int32, (hw, 1), 0).astype(jnp.float32)
    gy = jnp.floor(rowf / float(w))
    gx = rowf - gy * float(w)
    return gy, gx


# ----------------------------------------------------------------------------
# Pallas kernels
# ----------------------------------------------------------------------------
def _gemm_kernel(x_ref, w_ref, b_ref, o_ref, *, act):
    acc = jnp.dot(x_ref[...], w_ref[...],
                  preferred_element_type=jnp.float32) + b_ref[...]
    if act:
        acc = _silu(acc)
    o_ref[...] = acc.astype(o_ref.dtype)


def _c3_kernel(x_ref, wcv1, bcv1, wcv2, bcv2, wb1, bb1, wb2, bb2,
               wcv3m, wcv3y, bcv3, o_ref, shift_sc, *, H, W):
    """Whole C3(32,32) block for one image, resident in VMEM."""
    HW = H * W
    pad = (shift_sc.shape[0] - HW) // 2
    x = x_ref[...]                                                   # [HW, 32] bf16

    y1 = _silu(jnp.dot(x, wcv1[...], preferred_element_type=jnp.float32) + bcv1[...])
    y2 = _silu(jnp.dot(x, wcv2[...], preferred_element_type=jnp.float32) + bcv2[...])

    t = _silu(jnp.dot(y1.astype(jnp.bfloat16), wb1[...],
                      preferred_element_type=jnp.float32) + bb1[...])

    # Bottleneck cv2: 3x3 / s1 / p1 conv done in-VMEM via shifted row views
    # of the flat [HW, C] map (no im2col, no HBM round trip).
    shift_sc[...] = jnp.zeros_like(shift_sc)
    shift_sc[pad:pad + HW, :] = t
    gy, gx = _gy_gx(HW, W)
    cb = wb2.shape[0] // 9
    acc = jnp.zeros((HW, wb2.shape[1]), jnp.float32)
    k = 0
    for di in (-1, 0, 1):
        for dj in (-1, 0, 1):
            off = di * W + dj
            valid = ((gy + di >= 0.0) & (gy + di < float(H)) &
                     (gx + dj >= 0.0) & (gx + dj < float(W)))
            sh = jnp.where(valid, shift_sc[pad + off:pad + off + HW, :], 0.0)
            acc = acc + jnp.dot(sh.astype(jnp.bfloat16),
                                wb2[k * cb:(k + 1) * cb, :],
                                preferred_element_type=jnp.float32)
            k += 1
    m = y1 + _silu(acc + bb2[...])                                   # shortcut add

    # cv3 over concat(m, y2) expressed as two dots (no concat needed).
    out = _silu(jnp.dot(m.astype(jnp.bfloat16), wcv3m[...],
                        preferred_element_type=jnp.float32)
                + jnp.dot(y2.astype(jnp.bfloat16), wcv3y[...],
                          preferred_element_type=jnp.float32)
                + bcv3[...])
    o_ref[...] = out.astype(o_ref.dtype)


def _sppf_kernel(x_ref, wcv1, bcv1, w2s, w2p1, w2p2, w2p3, bcv2,
                 o_ref, shift_sc, *, H, W):
    """Whole SPPF(32,32) block for one image: cv1 + 3 chained separable
    5x5/s1/p2 max pools + cv2, all in VMEM (pools only the 16 real channels)."""
    HW = H * W
    pad = (shift_sc.shape[0] - HW) // 2
    x = x_ref[...]
    s = _silu(jnp.dot(x, wcv1[...], preferred_element_type=jnp.float32) + bcv1[...])

    gy, gx = _gy_gx(HW, W)
    shift_sc[...] = jnp.zeros_like(shift_sc)

    def pool5(v):
        # separable: 5-tap max along y, then 5-tap along x (8 maximums total)
        shift_sc[pad:pad + HW, :] = v
        acc = v
        for dy in (-2, -1, 1, 2):
            sh = shift_sc[pad + dy * W:pad + dy * W + HW, :]
            valid = (gy + dy >= 0.0) & (gy + dy < float(H))
            acc = jnp.maximum(acc, jnp.where(valid, sh, -jnp.inf))
        shift_sc[pad:pad + HW, :] = acc
        out = acc
        for dx in (-2, -1, 1, 2):
            sh = shift_sc[pad + dx:pad + dx + HW, :]
            valid = (gx + dx >= 0.0) & (gx + dx < float(W))
            out = jnp.maximum(out, jnp.where(valid, sh, -jnp.inf))
        return out

    p1 = pool5(s)
    p2 = pool5(p1)
    p3 = pool5(p2)

    # cv2 over concat(s, p1, p2, p3) as four partial dots (no concat, K=16 each)
    out = _silu(jnp.dot(s.astype(jnp.bfloat16), w2s[...], preferred_element_type=jnp.float32)
                + jnp.dot(p1.astype(jnp.bfloat16), w2p1[...], preferred_element_type=jnp.float32)
                + jnp.dot(p2.astype(jnp.bfloat16), w2p2[...], preferred_element_type=jnp.float32)
                + jnp.dot(p3.astype(jnp.bfloat16), w2p3[...], preferred_element_type=jnp.float32)
                + bcv2[...])
    o_ref[...] = out.astype(o_ref.dtype)


def _detect_kernel(x_ref, w_ref, b_ref, o_ref, *, H, W, stride, anchors, npa):
    """1x1 detect conv + YOLOv5 inference decode, fused.  Columns are laid out
    as a*npa + c (per-anchor channels padded 15 -> 16); grid xy / anchors are
    reconstructed in-kernel from iota with exact f32 arithmetic."""
    HW = H * W
    p = jnp.dot(x_ref[...], w_ref[...],
                preferred_element_type=jnp.float32) + b_ref[...]       # [HW, na*npa]
    y = jax.nn.sigmoid(p)

    cols = p.shape[1]
    rowf = jax.lax.broadcasted_iota(jnp.int32, (HW, cols), 0).astype(jnp.float32)
    colf = jax.lax.broadcasted_iota(jnp.int32, (HW, cols), 1).astype(jnp.float32)
    gy = jnp.floor(rowf / float(W))
    gx = rowf - gy * float(W)
    a = jnp.floor(colf / float(npa))
    c = colf - a * float(npa)

    gridv = jnp.where(c == 0.0, gx, gy)
    aw = jnp.where(a == 0.0, anchors[0][0],
                   jnp.where(a == 1.0, anchors[1][0], anchors[2][0]))
    ah = jnp.where(a == 0.0, anchors[0][1],
                   jnp.where(a == 1.0, anchors[1][1], anchors[2][1]))
    anchv = jnp.where(c == 2.0, aw, ah)

    xy = (y * 2.0 - 0.5 + gridv) * stride
    wh = (y * 2.0) ** 2 * anchv
    o_ref[...] = jnp.where(c < 2.0, xy, jnp.where(c < 4.0, wh, y))


# ----------------------------------------------------------------------------
# Kernel wrappers
# ----------------------------------------------------------------------------
def _pick_tm(M, tm_max=512):
    n = max(1, pl.cdiv(M, tm_max))
    if n == 1 and M >= 32:
        n = 2                        # >= 2 grid steps so both v7x TCs get work
    return _round_up(pl.cdiv(M, n), 16)


def gemm_bias_act(x, w, b, *, act=True, out_dtype=jnp.bfloat16, tm_max=512):
    """out = [silu](x @ w + b), x:[M,K] bf16, w:[K,Cout] bf16, b:[1,Cout] f32."""
    M, K = x.shape
    Kw, cout = w.shape
    assert K == Kw, (K, Kw)
    tm = _pick_tm(M, tm_max)
    Mp = _round_up(M, tm)
    xb = x.astype(jnp.bfloat16)
    if Mp != M:
        xb = jnp.pad(xb, ((0, Mp - M), (0, 0)))
    out = pl.pallas_call(
        functools.partial(_gemm_kernel, act=act),
        out_shape=jax.ShapeDtypeStruct((Mp, cout), out_dtype),
        grid=(Mp // tm,),
        in_specs=[pl.BlockSpec((tm, K), lambda i: (i, 0)),
                  pl.BlockSpec((Kw, cout), lambda i: (0, 0)),
                  pl.BlockSpec((1, cout), lambda i: (0, 0))],
        out_specs=pl.BlockSpec((tm, cout), lambda i: (i, 0)),
        compiler_params=_compiler_params(),
    )(xb, w, b)
    return out if Mp == M else out[:M]


def c3_block(h, p, H, W):
    N, HW, C = h.shape
    cmid = p["wb1"].shape[1]
    cout = p["wcv3m"].shape[1]
    ins = [h, p["wcv1"], p["bcv1"], p["wcv2"], p["bcv2"], p["wb1"], p["bb1"],
           p["wb2"], p["bb2"], p["wcv3m"], p["wcv3y"], p["bcv3"]]
    in_specs = ([pl.BlockSpec((None, HW, C), lambda n: (n, 0, 0))]
                + [pl.BlockSpec(a.shape, lambda n: (0, 0)) for a in ins[1:]])
    return pl.pallas_call(
        functools.partial(_c3_kernel, H=H, W=W),
        out_shape=jax.ShapeDtypeStruct((N, HW, cout), jnp.bfloat16),
        grid=(N,),
        in_specs=in_specs,
        out_specs=pl.BlockSpec((None, HW, cout), lambda n: (n, 0, 0)),
        scratch_shapes=[pltpu.VMEM((HW + 4 * W, cmid), jnp.float32)],
        compiler_params=_compiler_params(),
    )(*ins)


def sppf_block(h, p, H, W):
    N, HW, C = h.shape
    cmid = p["wcv1"].shape[1]
    cout = p["w2s"].shape[1]
    ins = [h, p["wcv1"], p["bcv1"], p["w2s"], p["w2p1"], p["w2p2"], p["w2p3"],
           p["bcv2"]]
    in_specs = ([pl.BlockSpec((None, HW, C), lambda n: (n, 0, 0))]
                + [pl.BlockSpec(a.shape, lambda n: (0, 0)) for a in ins[1:]])
    return pl.pallas_call(
        functools.partial(_sppf_kernel, H=H, W=W),
        out_shape=jax.ShapeDtypeStruct((N, HW, cout), jnp.bfloat16),
        grid=(N,),
        in_specs=in_specs,
        out_specs=pl.BlockSpec((None, HW, cout), lambda n: (n, 0, 0)),
        scratch_shapes=[pltpu.VMEM((HW + 4 * W, cmid), jnp.float32)],
        compiler_params=_compiler_params(),
    )(*ins)


def detect_block(h, det, H, W, stride):
    N, HW, C = h.shape
    w, b = det
    cout = w.shape[1]
    return pl.pallas_call(
        functools.partial(_detect_kernel, H=H, W=W, stride=stride,
                          anchors=ANCHORS, npa=NO_PAD),
        out_shape=jax.ShapeDtypeStruct((N, HW, cout), jnp.float32),
        grid=(N,),
        in_specs=[pl.BlockSpec((None, HW, C), lambda n: (n, 0, 0)),
                  pl.BlockSpec(w.shape, lambda n: (0, 0)),
                  pl.BlockSpec(b.shape, lambda n: (0, 0))],
        out_specs=pl.BlockSpec((None, HW, cout), lambda n: (n, 0, 0)),
        compiler_params=_compiler_params(),
    )(h, w, b)


# ----------------------------------------------------------------------------
# JAX glue: im2col for the two stride-2 backbone convs (tiny at these shapes)
# ----------------------------------------------------------------------------
def im2col(x_nhwc, kh, kw, stride, pad, k_rows):
    x = jnp.pad(x_nhwc, ((0, 0), (pad, pad), (pad, pad), (0, 0)))
    N, Hp, Wp, C = x.shape
    Ho = (Hp - kh) // stride + 1
    Wo = (Wp - kw) // stride + 1
    patches = [x[:, i:i + stride * Ho:stride, j:j + stride * Wo:stride, :]
               for i in range(kh) for j in range(kw)]
    cols = jnp.concatenate(patches, axis=-1).reshape(N * Ho * Wo, kh * kw * C)
    if k_rows > kh * kw * C:
        cols = jnp.pad(cols, ((0, 0), (0, k_rows - kh * kw * C)))
    return cols, (N, Ho, Wo)


# ----------------------------------------------------------------------------
# Parameter init (deterministic, BN folded).  K rows padded only to the real
# channel count rounded to 16; Cout kept at the real width.
# ----------------------------------------------------------------------------
def _conv_wb(key, kh, kw, cin, cout, k_rows=None, cout_pad=None):
    k_rows = k_rows or kh * kw * cin
    cout_pad = cout_pad or cout
    kw_, kb_ = jax.random.split(key)
    w = jnp.zeros((k_rows, cout_pad), jnp.float32)
    w = w.at[:kh * kw * cin, :cout].set(
        jax.random.normal(kw_, (kh * kw * cin, cout), jnp.float32) * 0.1)
    b = jnp.zeros((1, cout_pad), jnp.float32)
    b = b.at[0, :cout].set(jax.random.normal(kb_, (cout,), jnp.float32) * 0.1)
    return w.astype(jnp.bfloat16), b


def init_params(key):
    ks = jax.random.split(key, 10)
    p = {}
    # Backbone: Conv(3,16,k3,s2) + Conv(16,32,k3,s2)
    p["stem"] = _conv_wb(ks[0], 3, 3, 3, 16, k_rows=_round_up(27, 16))   # K 27->32
    p["down"] = _conv_wb(ks[1], 3, 3, 16, 32)                            # K 144

    # C3(32,32), c_=16
    c3 = {}
    c3["wcv1"], c3["bcv1"] = _conv_wb(ks[2], 1, 1, 32, 16)
    c3["wcv2"], c3["bcv2"] = _conv_wb(ks[3], 1, 1, 32, 16)
    c3["wb1"], c3["bb1"] = _conv_wb(ks[4], 1, 1, 16, 16)
    c3["wb2"], c3["bb2"] = _conv_wb(ks[5], 3, 3, 16, 16)                 # K 144
    wcv3, c3["bcv3"] = _conv_wb(ks[6], 1, 1, 32, 32)
    c3["wcv3m"], c3["wcv3y"] = wcv3[:16], wcv3[16:32]                    # rows: [m | y2]
    p["c3"] = c3

    # SPPF(32,32), c_=16 ; cv2 weight split per concat chunk (s, p1, p2, p3)
    sp = {}
    sp["wcv1"], sp["bcv1"] = _conv_wb(ks[7], 1, 1, 32, 16)
    w2, sp["bcv2"] = _conv_wb(ks[8], 1, 1, 64, 32)
    sp["w2s"], sp["w2p1"], sp["w2p2"], sp["w2p3"] = (
        w2[0:16], w2[16:32], w2[32:48], w2[48:64])
    p["sppf"] = sp

    # Detect: 1x1 conv 32 -> na*(nc+5)=45 (bias, no act); per-anchor channel
    # count padded 15 -> 16 so columns are a*16 + c (pad columns are zero).
    kw_, kb_ = jax.random.split(ks[9])
    w45 = jax.random.normal(kw_, (32, NA, NO), jnp.float32) * 0.1
    b45 = jax.random.normal(kb_, (NA, NO), jnp.float32) * 0.1
    wdet = jnp.pad(w45, ((0, 0), (0, 0), (0, NO_PAD - NO))).reshape(32, NA * NO_PAD)
    bdet = jnp.pad(b45, ((0, 0), (0, NO_PAD - NO))).reshape(1, NA * NO_PAD)
    p["det"] = (wdet.astype(jnp.bfloat16), bdet)
    return p


# ----------------------------------------------------------------------------
# Forward pass
# ----------------------------------------------------------------------------
def yolov5_forward(params, x_nchw):
    x = jnp.transpose(x_nchw, (0, 2, 3, 1)).astype(jnp.bfloat16)     # NCHW -> NHWC
    N, H_in, W_in, _ = x.shape

    # Backbone (two stride-2 3x3 conv GEMMs, K = real channels rounded to 16)
    cols, (N, H1, W1) = im2col(x, 3, 3, 2, 1, params["stem"][0].shape[0])
    h = gemm_bias_act(cols, *params["stem"])
    h = h.reshape(N, H1, W1, -1)

    cols, (N, H2, W2) = im2col(h, 3, 3, 2, 1, params["down"][0].shape[0])
    h = gemm_bias_act(cols, *params["down"])
    HW = H2 * W2
    h = h.reshape(N, HW, -1)

    # Fused C3 block (one pallas_call per image-batch)
    h = c3_block(h, params["c3"], H2, W2)

    # Fused SPPF block (cv1 + 3 separable 5x5 maxpools + cv2, one pallas_call)
    h = sppf_block(h, params["sppf"], H2, W2)

    # Fused Detect head: 1x1 conv + sigmoid decode in one kernel
    stride = float(H_in) / float(H2)
    z = detect_block(h, params["det"], H2, W2, stride)               # [N, HW, na*16] f32
    z = z.reshape(N, H2, W2, NA, NO_PAD)[..., :NO]
    z = jnp.transpose(z, (0, 3, 1, 2, 4)).reshape(N, NA * HW, NO)
    return z                                                         # [N, na*ny*nx, no]


# ----------------------------------------------------------------------------
if __name__ == "__main__":
    key = jax.random.PRNGKey(0)
    k_param, k_x = jax.random.split(key)
    params = init_params(k_param)

    # Small input consistent with the module (NCHW, 3 channels)
    x = jax.random.normal(k_x, (2, 3, 16, 16), jnp.float32)

    out = jax.block_until_ready(jax.jit(yolov5_forward)(params, x))
    assert out.shape == (2, NA * 4 * 4, NO), out.shape
    assert bool(jnp.all(jnp.isfinite(out)))
    print("KERNEL_OK")
</pallas_src>

<mosaic_0001>
module attributes {stable_mosaic.version = 11 : i64} {
  func.func @_gemm_kernel(%arg0: i32, %arg1: memref<64x32xbf16, #tpu.memory_space<vmem>>, %arg2: memref<32x16xbf16, #tpu.memory_space<vmem>>, %arg3: memref<1x16xf32, #tpu.memory_space<vmem>>, %arg4: memref<64x16xbf16, #tpu.memory_space<vmem>>) attributes {dimension_semantics = [#tpu.dimension_semantics<parallel>], iteration_bounds = array<i64: 2>, scalar_prefetch = 0 : i64, scratch_operands = 0 : i64, tpu.core_type = #tpu.core_type<tc>, window_params = [{transform_indices = @transform_0, window_bounds = array<i64: 64, 32>}, {pipeline_mode = #tpu.pipeline_mode<synchronous>, transform_indices = @transform_1, window_bounds = array<i64: 32, 16>}, {pipeline_mode = #tpu.pipeline_mode<synchronous>, transform_indices = @transform_2, window_bounds = array<i64: 1, 16>}, {transform_indices = @transform_3, window_bounds = array<i64: 64, 16>}]} {
    %c0 = arith.constant 0 : index
    %c0_0 = arith.constant 0 : index
    %0 = vector.load %arg1[%c0, %c0_0] : memref<64x32xbf16, #tpu.memory_space<vmem>>, vector<64x32xbf16>
    %c0_1 = arith.constant 0 : index
    %c0_2 = arith.constant 0 : index
    %1 = vector.load %arg2[%c0_1, %c0_2] : memref<32x16xbf16, #tpu.memory_space<vmem>>, vector<32x16xbf16>
    %cst = arith.constant dense<0.000000e+00> : vector<64x16xf32>
    %2 = tpu.matmul %0, %1, %cst {dimension_numbers = #tpu.dot_dimension_numbers<[1], [0], [0], [1], [0, 0, 1, 1], [], []>} : vector<64x32xbf16>, vector<32x16xbf16>, vector<64x16xf32> -> vector<64x16xf32>
    %c0_3 = arith.constant 0 : index
    %c0_4 = arith.constant 0 : index
    %3 = vector.load %arg3[%c0_3, %c0_4] : memref<1x16xf32, #tpu.memory_space<vmem>>, vector<1x16xf32>
    %4 = vector.broadcast %3 : vector<1x16xf32> to vector<64x16xf32>
    %5 = arith.addf %2, %4 : vector<64x16xf32>
    %6 = arith.negf %5 : vector<64x16xf32>
    %7 = math.exp %6 : vector<64x16xf32>
    %cst_5 = arith.constant 1.000000e+00 : f32
    %8 = vector.broadcast %cst_5 : f32 to vector<64x16xf32>
    %9 = arith.addf %8, %7 : vector<64x16xf32>
    %10 = arith.divf %8, %9 : vector<64x16xf32>
    %11 = arith.mulf %5, %10 : vector<64x16xf32>
    %12 = arith.truncf %11 : vector<64x16xf32> to vector<64x16xbf16>
    %c0_6 = arith.constant 0 : index
    %c0_7 = arith.constant 0 : index
    %13 = vector.load %arg4[%c0_6, %c0_7] : memref<64x16xbf16, #tpu.memory_space<vmem>>, vector<64x16xbf16>
    tpu.vector_store %arg4[%c0_6, %c0_7], %12 {strides = array<i32>} : memref<64x16xbf16, #tpu.memory_space<vmem>>, vector<64x16xbf16>,
    return
  }
  func.func @transform_0(%arg0: i32) -> (i32, i32) {
    %c0_i32 = arith.constant 0 : i32
    %c0_i32_0 = arith.constant 0 : i32
    return %arg0, %c0_i32 : i32, i32
  }
  func.func @transform_1(%arg0: i32) -> (i32, i32) {
    %c0_i32 = arith.constant 0 : i32
    %c0_i32_0 = arith.constant 0 : i32
    %c0_i32_1 = arith.constant 0 : i32
    return %c0_i32, %c0_i32_0 : i32, i32
  }
  func.func @transform_2(%arg0: i32) -> (i32, i32) {
    %c0_i32 = arith.constant 0 : i32
    %c0_i32_0 = arith.constant 0 : i32
    %c0_i32_1 = arith.constant 0 : i32
    return %c0_i32, %c0_i32_0 : i32, i32
  }
  func.func @transform_3(%arg0: i32) -> (i32, i32) {
    %c0_i32 = arith.constant 0 : i32
    %c0_i32_0 = arith.constant 0 : i32
    return %arg0, %c0_i32 : i32, i32
  }
}

module attributes {stable_mosaic.version = 11 : i64} {
  func.func @_gemm_kernel(%arg0: i32, %arg1: memref<16x144xbf16, #tpu.memory_space<vmem>>, %arg2: memref<144x32xbf16, #tpu.memory_space<vmem>>, %arg3: memref<1x32xf32, #tpu.memory_space<vmem>>, %arg4: memref<16x32xbf16, #tpu.memory_space<vmem>>) attributes {dimension_semantics = [#tpu.dimension_semantics<parallel>], iteration_bounds = array<i64: 2>, scalar_prefetch = 0 : i64, scratch_operands = 0 : i64, tpu.core_type = #tpu.core_type<tc>, window_params = [{transform_indices = @transform_0, window_bounds = array<i64: 16, 144>}, {pipeline_mode = #tpu.pipeline_mode<synchronous>, transform_indices = @transform_1, window_bounds = array<i64: 144, 32>}, {pipeline_mode = #tpu.pipeline_mode<synchronous>, transform_indices = @transform_2, window_bounds = array<i64: 1, 32>}, {transform_indices = @transform_3, window_bounds = array<i64: 16, 32>}]} {
    %c0 = arith.constant 0 : index
    %c0_0 = arith.constant 0 : index
    %0 = vector.load %arg1[%c0, %c0_0] : memref<16x144xbf16, #tpu.memory_space<vmem>>, vector<16x144xbf16>
    %c0_1 = arith.constant 0 : index
    %c0_2 = arith.constant 0 : index
    %1 = vector.load %arg2[%c0_1, %c0_2] : memref<144x32xbf16, #tpu.memory_space<vmem>>, vector<144x32xbf16>
    %cst = arith.constant dense<0.000000e+00> : vector<16x32xf32>
    %2 = tpu.matmul %0, %1, %cst {dimension_numbers = #tpu.dot_dimension_numbers<[1], [0], [0], [1], [0, 0, 1, 1], [], []>} : vector<16x144xbf16>, vector<144x32xbf16>, vector<16x32xf32> -> vector<16x32xf32>
    %c0_3 = arith.constant 0 : index
    %c0_4 = arith.constant 0 : index
    %3 = vector.load %arg3[%c0_3, %c0_4] : memref<1x32xf32, #tpu.memory_space<vmem>>, vector<1x32xf32>
    %4 = vector.broadcast %3 : vector<1x32xf32> to vector<16x32xf32>
    %5 = arith.addf %2, %4 : vector<16x32xf32>
    %6 = arith.negf %5 : vector<16x32xf32>
    %7 = math.exp %6 : vector<16x32xf32>
    %cst_5 = arith.constant 1.000000e+00 : f32
    %8 = vector.broadcast %cst_5 : f32 to vector<16x32xf32>
    %9 = arith.addf %8, %7 : vector<16x32xf32>
    %10 = arith.divf %8, %9 : vector<16x32xf32>
    %11 = arith.mulf %5, %10 : vector<16x32xf32>
    %12 = arith.truncf %11 : vector<16x32xf32> to vector<16x32xbf16>
    %c0_6 = arith.constant 0 : index
    %c0_7 = arith.constant 0 : index
    %13 = vector.load %arg4[%c0_6, %c0_7] : memref<16x32xbf16, #tpu.memory_space<vmem>>, vector<16x32xbf16>
    tpu.vector_store %arg4[%c0_6, %c0_7], %12 {strides = array<i32>} : memref<16x32xbf16, #tpu.memory_space<vmem>>, vector<16x32xbf16>,
    return
  }
  func.func @transform_0(%arg0: i32) -> (i32, i32) {
    %c0_i32 = arith.constant 0 : i32
    %c0_i32_0 = arith.constant 0 : i32
    return %arg0, %c0_i32 : i32, i32
  }
  func.func @transform_1(%arg0: i32) -> (i32, i32) {
    %c0_i32 = arith.constant 0 : i32
    %c0_i32_0 = arith.constant 0 : i32
    %c0_i32_1 = arith.constant 0 : i32
    return %c0_i32, %c0_i32_0 : i32, i32
  }
  func.func @transform_2(%arg0: i32) -> (i32, i32) {
    %c0_i32 = arith.constant 0 : i32
    %c0_i32_0 = arith.constant 0 : i32
    %c0_i32_1 = arith.constant 0 : i32
    return %c0_i32, %c0_i32_0 : i32, i32
  }
  func.func @transform_3(%arg0: i32) -> (i32, i32) {
    %c0_i32 = arith.constant 0 : i32
    %c0_i32_0 = arith.constant 0 : i32
    return %arg0, %c0_i32 : i32, i32
  }
}

module attributes {stable_mosaic.version = 11 : i64} {
  func.func @_detect_kernel(%arg0: i32, %arg1: memref<1x16x32xbf16, #tpu.memory_space<vmem>>, %arg2: memref<32x48xbf16, #tpu.memory_space<vmem>>, %arg3: memref<1x48xf32, #tpu.memory_space<vmem>>, %arg4: memref<1x16x48xf32, #tpu.memory_space<vmem>>) attributes {dimension_semantics = [#tpu.dimension_semantics<parallel>], iteration_bounds = array<i64: 2>, scalar_prefetch = 0 : i64, scratch_operands = 0 : i64, tpu.core_type = #tpu.core_type<tc>, window_params = [{transform_indices = @transform_0, window_bounds = array<i64: 1, 16, 32>}, {pipeline_mode = #tpu.pipeline_mode<synchronous>, transform_indices = @transform_1, window_bounds = array<i64: 32, 48>}, {pipeline_mode = #tpu.pipeline_mode<synchronous>, transform_indices = @transform_2, window_bounds = array<i64: 1, 48>}, {transform_indices = @transform_3, window_bounds = array<i64: 1, 16, 48>}]} {
    %c0 = arith.constant 0 : index
    %c0_0 = arith.constant 0 : index
    %c0_1 = arith.constant 0 : index
    %0 = vector.load %arg1[%c0, %c0_0, %c0_1] : memref<1x16x32xbf16, #tpu.memory_space<vmem>>, vector<1x16x32xbf16>
    %1 = vector.shape_cast %0 : vector<1x16x32xbf16> to vector<16x32xbf16>
    %c0_2 = arith.constant 0 : index
    %c0_3 = arith.constant 0 : index
    %2 = vector.load %arg2[%c0_2, %c0_3] : memref<32x48xbf16, #tpu.memory_space<vmem>>, vector<32x48xbf16>
    %cst = arith.constant dense<0.000000e+00> : vector<16x48xf32>
    %3 = tpu.matmul %1, %2, %cst {dimension_numbers = #tpu.dot_dimension_numbers<[1], [0], [0], [1], [0, 0, 1, 1], [], []>} : vector<16x32xbf16>, vector<32x48xbf16>, vector<16x48xf32> -> vector<16x48xf32>
    %c0_4 = arith.constant 0 : index
    %c0_5 = arith.constant 0 : index
    %4 = vector.load %arg3[%c0_4, %c0_5] : memref<1x48xf32, #tpu.memory_space<vmem>>, vector<1x48xf32>
    %5 = vector.broadcast %4 : vector<1x48xf32> to vector<16x48xf32>
    %6 = arith.addf %3, %5 : vector<16x48xf32>
    %7 = arith.negf %6 : vector<16x48xf32>
    %8 = math.exp %7 : vector<16x48xf32>
    %cst_6 = arith.constant 1.000000e+00 : f32
    %9 = vector.broadcast %cst_6 : f32 to vector<16x48xf32>
    %10 = arith.addf %9, %8 : vector<16x48xf32>
    %11 = arith.divf %9, %10 : vector<16x48xf32>
    %12 = tpu.iota {dimensions = array<i32: 0>} : vector<16x48xi32>
    %13 = arith.sitofp %12 : vector<16x48xi32> to vector<16x48xf32>
    %14 = tpu.iota {dimensions = array<i32: 1>} : vector<16x48xi32>
    %15 = arith.sitofp %14 : vector<16x48xi32> to vector<16x48xf32>
    %cst_7 = arith.constant 4.000000e+00 : f32
    %16 = vector.broadcast %cst_7 : f32 to vector<16x48xf32>
    %17 = arith.divf %13, %16 : vector<16x48xf32>
    %18 = math.floor %17 : vector<16x48xf32>
    %cst_8 = arith.constant 4.000000e+00 : f32
    %19 = vector.broadcast %cst_8 : f32 to vector<16x48xf32>
    %20 = arith.mulf %18, %19 : vector<16x48xf32>
    %21 = arith.subf %13, %20 : vector<16x48xf32>
    %cst_9 = arith.constant 1.600000e+01 : f32
    %22 = vector.broadcast %cst_9 : f32 to vector<16x48xf32>
    %23 = arith.divf %15, %22 : vector<16x48xf32>
    %24 = math.floor %23 : vector<16x48xf32>
    %cst_10 = arith.constant 1.600000e+01 : f32
    %25 = vector.broadcast %cst_10 : f32 to vector<16x48xf32>
    %26 = arith.mulf %24, %25 : vector<16x48xf32>
    %27 = arith.subf %15, %26 : vector<16x48xf32>
    %cst_11 = arith.constant 0.000000e+00 : f32
    %28 = vector.broadcast %cst_11 : f32 to vector<16x48xf32>
    %29 = arith.cmpf oeq, %27, %28 : vector<16x48xf32>
    %30 = arith.select %29, %21, %18 : vector<16x48xi1>, vector<16x48xf32>
    %cst_12 = arith.constant 0.000000e+00 : f32
    %31 = vector.broadcast %cst_12 : f32 to vector<16x48xf32>
    %32 = arith.cmpf oeq, %24, %31 : vector<16x48xf32>
    %cst_13 = arith.constant 1.000000e+00 : f32
    %33 = vector.broadcast %cst_13 : f32 to vector<16x48xf32>
    %34 = arith.cmpf oeq, %24, %33 : vector<16x48xf32>
    %cst_14 = arith.constant 1.600000e+01 : f32
    %cst_15 = arith.constant 3.300000e+01 : f32
    %35 = vector.broadcast %cst_14 : f32 to vector<16x48xf32>
    %36 = vector.broadcast %cst_15 : f32 to vector<16x48xf32>
    %37 = arith.select %34, %35, %36 : vector<16x48xi1>, vector<16x48xf32>
    %cst_16 = arith.constant 1.000000e+01 : f32
    %38 = vector.broadcast %cst_16 : f32 to vector<16x48xf32>
    %39 = arith.select %32, %38, %37 : vector<16x48xi1>, vector<16x48xf32>
    %cst_17 = arith.constant 0.000000e+00 : f32
    %40 = vector.broadcast %cst_17 : f32 to vector<16x48xf32>
    %41 = arith.cmpf oeq, %24, %40 : vector<16x48xf32>
    %cst_18 = arith.constant 1.000000e+00 : f32
    %42 = vector.broadcast %cst_18 : f32 to vector<16x48xf32>
    %43 = arith.cmpf oeq, %24, %42 : vector<16x48xf32>
    %cst_19 = arith.constant 3.000000e+01 : f32
    %cst_20 = arith.constant 2.300000e+01 : f32
    %44 = vector.broadcast %cst_19 : f32 to vector<16x48xf32>
    %45 = vector.broadcast %cst_20 : f32 to vector<16x48xf32>
    %46 = arith.select %43, %44, %45 : vector<16x48xi1>, vector<16x48xf32>
    %cst_21 = arith.constant 1.300000e+01 : f32
    %47 = vector.broadcast %cst_21 : f32 to vector<16x48xf32>
    %48 = arith.select %41, %47, %46 : vector<16x48xi1>, vector<16x48xf32>
    %cst_22 = arith.constant 2.000000e+00 : f32
    %49 = vector.broadcast %cst_22 : f32 to vector<16x48xf32>
    %50 = arith.cmpf oeq, %27, %49 : vector<16x48xf32>
    %51 = arith.select %50, %39, %48 : vector<16x48xi1>, vector<16x48xf32>
    %cst_23 = arith.constant 2.000000e+00 : f32
    %52 = vector.broadcast %cst_23 : f32 to vector<16x48xf32>
    %53 = arith.mulf %11, %52 : vector<16x48xf32>
    %cst_24 = arith.constant 5.000000e-01 : f32
    %54 = vector.broadcast %cst_24 : f32 to vector<16x48xf32>
    %55 = arith.subf %53, %54 : vector<16x48xf32>
    %56 = arith.addf %55, %30 : vector<16x48xf32>
    %cst_25 = arith.constant 4.000000e+00 : f32
    %57 = vector.broadcast %cst_25 : f32 to vector<16x48xf32>
    %58 = arith.mulf %56, %57 : vector<16x48xf32>
    %cst_26 = arith.constant 2.000000e+00 : f32
    %59 = vector.broadcast %cst_26 : f32 to vector<16x48xf32>
    %60 = arith.mulf %11, %59 : vector<16x48xf32>
    %61 = arith.mulf %60, %60 : vector<16x48xf32>
    %62 = arith.mulf %61, %51 : vector<16x48xf32>
    %cst_27 = arith.constant 2.000000e+00 : f32
    %63 = vector.broadcast %cst_27 : f32 to vector<16x48xf32>
    %64 = arith.cmpf olt, %27, %63 : vector<16x48xf32>
    %cst_28 = arith.constant 4.000000e+00 : f32
    %65 = vector.broadcast %cst_28 : f32 to vector<16x48xf32>
    %66 = arith.cmpf olt, %27, %65 : vector<16x48xf32>
    %67 = arith.select %66, %62, %11 : vector<16x48xi1>, vector<16x48xf32>
    %68 = arith.select %64, %58, %67 : vector<16x48xi1>, vector<16x48xf32>
    %c0_29 = arith.constant 0 : index
    %c0_30 = arith.constant 0 : index
    %c0_31 = arith.constant 0 : index
    %69 = vector.load %arg4[%c0_29, %c0_30, %c0_31] : memref<1x16x48xf32, #tpu.memory_space<vmem>>, vector<1x16x48xf32>
    %70 = vector.shape_cast %69 : vector<1x16x48xf32> to vector<16x48xf32>
    %71 = vector.shape_cast %68 : vector<16x48xf32> to vector<1x16x48xf32>
    tpu.vector_store %arg4[%c0_29, %c0_30, %c0_31], %71 {strides = array<i32>} : memref<1x16x48xf32, #tpu.memory_space<vmem>>, vector<1x16x48xf32>,
    return
  }
  func.func @transform_0(%arg0: i32) -> (i32, i32, i32) {
    %c0_i32 = arith.constant 0 : i32
    %c0_i32_0 = arith.constant 0 : i32
    %c0_i32_1 = arith.constant 0 : i32
    return %arg0, %c0_i32, %c0_i32_0 : i32, i32, i32
  }
  func.func @transform_1(%arg0: i32) -> (i32, i32) {
    %c0_i32 = arith.constant 0 : i32
    %c0_i32_0 = arith.constant 0 : i32
    %c0_i32_1 = arith.constant 0 : i32
    return %c0_i32, %c0_i32_0 : i32, i32
  }
  func.func @transform_2(%arg0: i32) -> (i32, i32) {
    %c0_i32 = arith.constant 0 : i32
    %c0_i32_0 = arith.constant 0 : i32
    %c0_i32_1 = arith.constant 0 : i32
    return %c0_i32, %c0_i32_0 : i32, i32
  }
  func.func @transform_3(%arg0: i32) -> (i32, i32, i32) {
    %c0_i32 = arith.constant 0 : i32
    %c0_i32_0 = arith.constant 0 : i32
    %c0_i32_1 = arith.constant 0 : i32
    return %arg0, %c0_i32, %c0_i32_0 : i32, i32, i32
  }
}

module attributes {stable_mosaic.version = 11 : i64} {
  func.func @_c3_kernel(%arg0: i32, %arg1: memref<1x16x32xbf16, #tpu.memory_space<vmem>>, %arg2: memref<32x16xbf16, #tpu.memory_space<vmem>>, %arg3: memref<1x16xf32, #tpu.memory_space<vmem>>, %arg4: memref<32x16xbf16, #tpu.memory_space<vmem>>, %arg5: memref<1x16xf32, #tpu.memory_space<vmem>>, %arg6: memref<16x16xbf16, #tpu.memory_space<vmem>>, %arg7: memref<1x16xf32, #tpu.memory_space<vmem>>, %arg8: memref<144x16xbf16, #tpu.memory_space<vmem>>, %arg9: memref<1x16xf32, #tpu.memory_space<vmem>>, %arg10: memref<16x32xbf16, #tpu.memory_space<vmem>>, %arg11: memref<16x32xbf16, #tpu.memory_space<vmem>>, %arg12: memref<1x32xf32, #tpu.memory_space<vmem>>, %arg13: memref<1x16x32xbf16, #tpu.memory_space<vmem>>, %arg14: memref<32x16xf32, #tpu.memory_space<vmem>>) attributes {dimension_semantics = [#tpu.dimension_semantics<parallel>], iteration_bounds = array<i64: 2>, scalar_prefetch = 0 : i64, scratch_operands = 1 : i64, tpu.core_type = #tpu.core_type<tc>, window_params = [{transform_indices = @transform_0, window_bounds = array<i64: 1, 16, 32>}, {pipeline_mode = #tpu.pipeline_mode<synchronous>, transform_indices = @transform_1, window_bounds = array<i64: 32, 16>}, {pipeline_mode = #tpu.pipeline_mode<synchronous>, transform_indices = @transform_2, window_bounds = array<i64: 1, 16>}, {pipeline_mode = #tpu.pipeline_mode<synchronous>, transform_indices = @transform_3, window_bounds = array<i64: 32, 16>}, {pipeline_mode = #tpu.pipeline_mode<synchronous>, transform_indices = @transform_4, window_bounds = array<i64: 1, 16>}, {pipeline_mode = #tpu.pipeline_mode<synchronous>, transform_indices = @transform_5, window_bounds = array<i64: 16, 16>}, {pipeline_mode = #tpu.pipeline_mode<synchronous>, transform_indices = @transform_6, window_bounds = array<i64: 1, 16>}, {pipeline_mode = #tpu.pipeline_mode<synchronous>, transform_indices = @transform_7, window_bounds = array<i64: 144, 16>}, {pipeline_mode = #tpu.pipeline_mode<synchronous>, transform_indices = @transform_8, window_bounds = array<i64: 1, 16>}, {pipeline_mode = #tpu.pipeline_mode<synchronous>, transform_indices = @transform_9, window_bounds = array<i64: 16, 32>}, {pipeline_mode = #tpu.pipeline_mode<synchronous>, transform_indices = @transform_10, window_bounds = array<i64: 16, 32>}, {pipeline_mode = #tpu.pipeline_mode<synchronous>, transform_indices = @transform_11, window_bounds = array<i64: 1, 32>}, {transform_indices = @transform_12, window_bounds = array<i64: 1, 16, 32>}]} {
    %c0 = arith.constant 0 : index
    %c0_0 = arith.constant 0 : index
    %c0_1 = arith.constant 0 : index
    %0 = vector.load %arg1[%c0, %c0_0, %c0_1] : memref<1x16x32xbf16, #tpu.memory_space<vmem>>, vector<1x16x32xbf16>
    %1 = vector.shape_cast %0 : vector<1x16x32xbf16> to vector<16x32xbf16>
    %c0_2 = arith.constant 0 : index
    %c0_3 = arith.constant 0 : index
    %2 = vector.load %arg2[%c0_2, %c0_3] : memref<32x16xbf16, #tpu.memory_space<vmem>>, vector<32x16xbf16>
    %cst = arith.constant dense<0.000000e+00> : vector<16x16xf32>
    %3 = tpu.matmul %1, %2, %cst {dimension_numbers = #tpu.dot_dimension_numbers<[1], [0], [0], [1], [0, 0, 1, 1], [], []>} : vector<16x32xbf16>, vector<32x16xbf16>, vector<16x16xf32> -> vector<16x16xf32>
    %c0_4 = arith.constant 0 : index
    %c0_5 = arith.constant 0 : index
    %4 = vector.load %arg3[%c0_4, %c0_5] : memref<1x16xf32, #tpu.memory_space<vmem>>, vector<1x16xf32>
    %5 = vector.broadcast %4 : vector<1x16xf32> to vector<16x16xf32>
    %6 = arith.addf %3, %5 : vector<16x16xf32>
    %7 = arith.negf %6 : vector<16x16xf32>
    %8 = math.exp %7 : vector<16x16xf32>
    %cst_6 = arith.constant 1.000000e+00 : f32
    %9 = vector.broadcast %cst_6 : f32 to vector<16x16xf32>
    %10 = arith.addf %9, %8 : vector<16x16xf32>
    %11 = arith.divf %9, %10 : vector<16x16xf32>
    %12 = arith.mulf %6, %11 : vector<16x16xf32>
    %c0_7 = arith.constant 0 : index
    %c0_8 = arith.constant 0 : index
    %13 = vector.load %arg4[%c0_7, %c0_8] : memref<32x16xbf16, #tpu.memory_space<vmem>>, vector<32x16xbf16>
    %cst_9 = arith.constant dense<0.000000e+00> : vector<16x16xf32>
    %14 = tpu.matmul %1, %13, %cst_9 {dimension_numbers = #tpu.dot_dimension_numbers<[1], [0], [0], [1], [0, 0, 1, 1], [], []>} : vector<16x32xbf16>, vector<32x16xbf16>, vector<16x16xf32> -> vector<16x16xf32>
    %c0_10 = arith.constant 0 : index
    %c0_11 = arith.constant 0 : index
    %15 = vector.load %arg5[%c0_10, %c0_11] : memref<1x16xf32, #tpu.memory_space<vmem>>, vector<1x16xf32>
    %16 = vector.broadcast %15 : vector<1x16xf32> to vector<16x16xf32>
    %17 = arith.addf %14, %16 : vector<16x16xf32>
    %18 = arith.negf %17 : vector<16x16xf32>
    %19 = math.exp %18 : vector<16x16xf32>
    %cst_12 = arith.constant 1.000000e+00 : f32
    %20 = vector.broadcast %cst_12 : f32 to vector<16x16xf32>
    %21 = arith.addf %20, %19 : vector<16x16xf32>
    %22 = arith.divf %20, %21 : vector<16x16xf32>
    %23 = arith.mulf %17, %22 : vector<16x16xf32>
    %24 = arith.truncf %12 : vector<16x16xf32> to vector<16x16xbf16>
    %c0_13 = arith.constant 0 : index
    %c0_14 = arith.constant 0 : index
    %25 = vector.load %arg6[%c0_13, %c0_14] : memref<16x16xbf16, #tpu.memory_space<vmem>>, vector<16x16xbf16>
    %cst_15 = arith.constant dense<0.000000e+00> : vector<16x16xf32>
    %26 = tpu.matmul %24, %25, %cst_15 {dimension_numbers = #tpu.dot_dimension_numbers<[1], [0], [0], [1], [0, 0, 1, 1], [], []>} : vector<16x16xbf16>, vector<16x16xbf16>, vector<16x16xf32> -> vector<16x16xf32>
    %c0_16 = arith.constant 0 : index
    %c0_17 = arith.constant 0 : index
    %27 = vector.load %arg7[%c0_16, %c0_17] : memref<1x16xf32, #tpu.memory_space<vmem>>, vector<1x16xf32>
    %28 = vector.broadcast %27 : vector<1x16xf32> to vector<16x16xf32>
    %29 = arith.addf %26, %28 : vector<16x16xf32>
    %30 = arith.negf %29 : vector<16x16xf32>
    %31 = math.exp %30 : vector<16x16xf32>
    %cst_18 = arith.constant 1.000000e+00 : f32
    %32 = vector.broadcast %cst_18 : f32 to vector<16x16xf32>
    %33 = arith.addf %32, %31 : vector<16x16xf32>
    %34 = arith.divf %32, %33 : vector<16x16xf32>
    %35 = arith.mulf %29, %34 : vector<16x16xf32>
    %cst_19 = arith.constant 0.000000e+00 : f32
    %36 = vector.broadcast %cst_19 : f32 to vector<32x16xf32>
    %c0_20 = arith.constant 0 : index
    %c0_21 = arith.constant 0 : index
    %37 = vector.load %arg14[%c0_20, %c0_21] : memref<32x16xf32, #tpu.memory_space<vmem>>, vector<32x16xf32>
    tpu.vector_store %arg14[%c0_20, %c0_21], %36 {strides = array<i32>} : memref<32x16xf32, #tpu.memory_space<vmem>>, vector<32x16xf32>,
    %c8 = arith.constant 8 : index
    %c0_22 = arith.constant 0 : index
    %38 = vector.load %arg14[%c8, %c0_22] : memref<32x16xf32, #tpu.memory_space<vmem>>, vector<16x16xf32>
    tpu.vector_store %arg14[%c8, %c0_22], %35 {strides = array<i32>} : memref<32x16xf32, #tpu.memory_space<vmem>>, vector<16x16xf32>,
    %39 = tpu.iota {dimensions = array<i32: 0>} : vector<16x1xi32>
    %40 = arith.sitofp %39 : vector<16x1xi32> to vector<16x1xf32>
    %cst_23 = arith.constant 4.000000e+00 : f32
    %41 = vector.broadcast %cst_23 : f32 to vector<16x1xf32>
    %42 = arith.divf %40, %41 : vector<16x1xf32>
    %43 = math.floor %42 : vector<16x1xf32>
    %cst_24 = arith.constant 4.000000e+00 : f32
    %44 = vector.broadcast %cst_24 : f32 to vector<16x1xf32>
    %45 = arith.mulf %43, %44 : vector<16x1xf32>
    %46 = arith.subf %40, %45 : vector<16x1xf32>
    %cst_25 = arith.constant 0.000000e+00 : f32
    %47 = vector.broadcast %cst_25 : f32 to vector<16x16xf32>
    %cst_26 = arith.constant -1.000000e+00 : f32
    %48 = vector.broadcast %cst_26 : f32 to vector<16x1xf32>
    %49 = arith.addf %43, %48 : vector<16x1xf32>
    %cst_27 = arith.constant 0.000000e+00 : f32
    %50 = vector.broadcast %cst_27 : f32 to vector<16x1xf32>
    %51 = arith.cmpf oge, %49, %50 : vector<16x1xf32>
    %cst_28 = arith.constant -1.000000e+00 : f32
    %52 = vector.broadcast %cst_28 : f32 to vector<16x1xf32>
    %53 = arith.addf %43, %52 : vector<16x1xf32>
    %cst_29 = arith.constant 4.000000e+00 : f32
    %54 = vector.broadcast %cst_29 : f32 to vector<16x1xf32>
    %55 = arith.cmpf olt, %53, %54 : vector<16x1xf32>
    %56 = arith.andi %51, %55 : vector<16x1xi1>
    %cst_30 = arith.constant -1.000000e+00 : f32
    %57 = vector.broadcast %cst_30 : f32 to vector<16x1xf32>
    %58 = arith.addf %46, %57 : vector<16x1xf32>
    %cst_31 = arith.constant 0.000000e+00 : f32
    %59 = vector.broadcast %cst_31 : f32 to vector<16x1xf32>
    %60 = arith.cmpf oge, %58, %59 : vector<16x1xf32>
    %61 = arith.andi %56, %60 : vector<16x1xi1>
    %cst_32 = arith.constant -1.000000e+00 : f32
    %62 = vector.broadcast %cst_32 : f32 to vector<16x1xf32>
    %63 = arith.addf %46, %62 : vector<16x1xf32>
    %cst_33 = arith.constant 4.000000e+00 : f32
    %64 = vector.broadcast %cst_33 : f32 to vector<16x1xf32>
    %65 = arith.cmpf olt, %63, %64 : vector<16x1xf32>
    %66 = arith.andi %61, %65 : vector<16x1xi1>
    %c3 = arith.constant 3 : index
    %c0_34 = arith.constant 0 : index
    %67 = vector.load %arg14[%c3, %c0_34] : memref<32x16xf32, #tpu.memory_space<vmem>>, vector<16x16xf32>
    %cst_35 = arith.constant 0.000000e+00 : f32
    %68 = vector.shape_cast %66 : vector<16x1xi1> to vector<16x1xi1>
    %69 = vector.broadcast %68 : vector<16x1xi1> to vector<16x16xi1>
    %70 = vector.broadcast %cst_35 : f32 to vector<16x16xf32>
    %71 = arith.select %69, %67, %70 : vector<16x16xi1>, vector<16x16xf32>
    %72 = arith.truncf %71 : vector<16x16xf32> to vector<16x16xbf16>
    %c0_36 = arith.constant 0 : index
    %c0_37 = arith.constant 0 : index
    %73 = vector.load %arg8[%c0_36, %c0_37] : memref<144x16xbf16, #tpu.memory_space<vmem>>, vector<16x16xbf16>
    %cst_38 = arith.constant dense<0.000000e+00> : vector<16x16xf32>
    %74 = tpu.matmul %72, %73, %cst_38 {dimension_numbers = #tpu.dot_dimension_numbers<[1], [0], [0], [1], [0, 0, 1, 1], [], []>} : vector<16x16xbf16>, vector<16x16xbf16>, vector<16x16xf32> -> vector<16x16xf32>
    %75 = arith.addf %47, %74 : vector<16x16xf32>
    %cst_39 = arith.constant -1.000000e+00 : f32
    %76 = vector.broadcast %cst_39 : f32 to vector<16x1xf32>
    %77 = arith.addf %43, %76 : vector<16x1xf32>
    %cst_40 = arith.constant 0.000000e+00 : f32
    %78 = vector.broadcast %cst_40 : f32 to vector<16x1xf32>
    %79 = arith.cmpf oge, %77, %78 : vector<16x1xf32>
    %cst_41 = arith.constant -1.000000e+00 : f32
    %80 = vector.broadcast %cst_41 : f32 to vector<16x1xf32>
    %81 = arith.addf %43, %80 : vector<16x1xf32>
    %cst_42 = arith.constant 4.000000e+00 : f32
    %82 = vector.broadcast %cst_42 : f32 to vector<16x1xf32>
    %83 = arith.cmpf olt, %81, %82 : vector<16x1xf32>
    %84 = arith.andi %79, %83 : vector<16x1xi1>
    %cst_43 = arith.constant 0.000000e+00 : f32
    %85 = vector.broadcast %cst_43 : f32 to vector<16x1xf32>
    %86 = arith.addf %46, %85 : vector<16x1xf32>
    %cst_44 = arith.constant 0.000000e+00 : f32
    %87 = vector.broadcast %cst_44 : f32 to vector<16x1xf32>
    %88 = arith.cmpf oge, %86, %87 : vector<16x1xf32>
    %89 = arith.andi %84, %88 : vector<16x1xi1>
    %cst_45 = arith.constant 0.000000e+00 : f32
    %90 = vector.broadcast %cst_45 : f32 to vector<16x1xf32>
    %91 = arith.addf %46, %90 : vector<16x1xf32>
    %cst_46 = arith.constant 4.000000e+00 : f32
    %92 = vector.broadcast %cst_46 : f32 to vector<16x1xf32>
    %93 = arith.cmpf olt, %91, %92 : vector<16x1xf32>
    %94 = arith.andi %89, %93 : vector<16x1xi1>
    %c4 = arith.constant 4 : index
    %c0_47 = arith.constant 0 : index
    %95 = vector.load %arg14[%c4, %c0_47] : memref<32x16xf32, #tpu.memory_space<vmem>>, vector<16x16xf32>
    %cst_48 = arith.constant 0.000000e+00 : f32
    %96 = vector.shape_cast %94 : vector<16x1xi1> to vector<16x1xi1>
    %97 = vector.broadcast %96 : vector<16x1xi1> to vector<16x16xi1>
    %98 = vector.broadcast %cst_48 : f32 to vector<16x16xf32>
    %99 = arith.select %97, %95, %98 : vector<16x16xi1>, vector<16x16xf32>
    %100 = arith.truncf %99 : vector<16x16xf32> to vector<16x16xbf16>
    %c16 = arith.constant 16 : index
    %c0_49 = arith.constant 0 : index
    %101 = vector.load %arg8[%c16, %c0_49] : memref<144x16xbf16, #tpu.memory_space<vmem>>, vector<16x16xbf16>
    %cst_50 = arith.constant dense<0.000000e+00> : vector<16x16xf32>
    %102 = tpu.matmul %100, %101, %cst_50 {dimension_numbers = #tpu.dot_dimension_numbers<[1], [0], [0], [1], [0, 0, 1, 1], [], []>} : vector<16x16xbf16>, vector<16x16xbf16>, vector<16x16xf32> -> vector<16x16xf32>
    %103 = arith.addf %75, %102 : vector<16x16xf32>
    %cst_51 = arith.constant -1.000000e+00 : f32
    %104 = vector.broadcast %cst_51 : f32 to vector<16x1xf32>
    %105 = arith.addf %43, %104 : vector<16x1xf32>
    %cst_52 = arith.constant 0.000000e+00 : f32
    %106 = vector.broadcast %cst_52 : f32 to vector<16x1xf32>
    %107 = arith.cmpf oge, %105, %106 : vector<16x1xf32>
    %cst_53 = arith.constant -1.000000e+00 : f32
    %108 = vector.broadcast %cst_53 : f32 to vector<16x1xf32>
    %109 = arith.addf %43, %108 : vector<16x1xf32>
    %cst_54 = arith.constant 4.000000e+00 : f32
    %110 = vector.broadcast %cst_54 : f32 to vector<16x1xf32>
    %111 = arith.cmpf olt, %109, %110 : vector<16x1xf32>
    %112 = arith.andi %107, %111 : vector<16x1xi1>
    %cst_55 = arith.constant 1.000000e+00 : f32
    %113 = vector.broadcast %cst_55 : f32 to vector<16x1xf32>
    %114 = arith.addf %46, %113 : vector<16x1xf32>
    %cst_56 = arith.constant 0.000000e+00 : f32
    %115 = vector.broadcast %cst_56 : f32 to vector<16x1xf32>
    %116 = arith.cmpf oge, %114, %115 : vector<16x1xf32>
    %117 = arith.andi %112, %116 : vector<16x1xi1>
    %cst_57 = arith.constant 1.000000e+00 : f32
    %118 = vector.broadcast %cst_57 : f32 to vector<16x1xf32>
    %119 = arith.addf %46, %118 : vector<16x1xf32>
    %cst_58 = arith.constant 4.000000e+00 : f32
    %120 = vector.broadcast %cst_58 : f32 to vector<16x1xf32>
    %121 = arith.cmpf olt, %119, %120 : vector<16x1xf32>
    %122 = arith.andi %117, %121 : vector<16x1xi1>
    %c5 = arith.constant 5 : index
    %c0_59 = arith.constant 0 : index
    %123 = vector.load %arg14[%c5, %c0_59] : memref<32x16xf32, #tpu.memory_space<vmem>>, vector<16x16xf32>
    %cst_60 = arith.constant 0.000000e+00 : f32
    %124 = vector.shape_cast %122 : vector<16x1xi1> to vector<16x1xi1>
    %125 = vector.broadcast %124 : vector<16x1xi1> to vector<16x16xi1>
    %126 = vector.broadcast %cst_60 : f32 to vector<16x16xf32>
    %127 = arith.select %125, %123, %126 : vector<16x16xi1>, vector<16x16xf32>
    %128 = arith.truncf %127 : vector<16x16xf32> to vector<16x16xbf16>
    %c32 = arith.constant 32 : index
    %c0_61 = arith.constant 0 : index
    %129 = vector.load %arg8[%c32, %c0_61] : memref<144x16xbf16, #tpu.memory_space<vmem>>, vector<16x16xbf16>
    %cst_62 = arith.constant dense<0.000000e+00> : vector<16x16xf32>
    %130 = tpu.matmul %128, %129, %cst_62 {dimension_numbers = #tpu.dot_dimension_numbers<[1], [0], [0], [1], [0, 0, 1, 1], [], []>} : vector<16x16xbf16>, vector<16x16xbf16>, vector<16x16xf32> -> vector<16x16xf32>
    %131 = arith.addf %103, %130 : vector<16x16xf32>
    %cst_63 = arith.constant 0.000000e+00 : f32
    %132 = vector.broadcast %cst_63 : f32 to vector<16x1xf32>
    %133 = arith.addf %43, %132 : vector<16x1xf32>
    %cst_64 = arith.constant 0.000000e+00 : f32
    %134 = vector.broadcast %cst_64 : f32 to vector<16x1xf32>
    %135 = arith.cmpf oge, %133, %134 : vector<16x1xf32>
    %cst_65 = arith.constant 0.000000e+00 : f32
    %136 = vector.broadcast %cst_65 : f32 to vector<16x1xf32>
    %137 = arith.addf %43, %136 : vector<16x1xf32>
    %cst_66 = arith.constant 4.000000e+00 : f32
    %138 = vector.broadcast %cst_66 : f32 to vector<16x1xf32>
    %139 = arith.cmpf olt, %137, %138 : vector<16x1xf32>
    %140 = arith.andi %135, %139 : vector<16x1xi1>
    %cst_67 = arith.constant -1.000000e+00 : f32
    %141 = vector.broadcast %cst_67 : f32 to vector<16x1xf32>
    %142 = arith.addf %46, %141 : vector<16x1xf32>
    %cst_68 = arith.constant 0.000000e+00 : f32
    %143 = vector.broadcast %cst_68 : f32 to vector<16x1xf32>
    %144 = arith.cmpf oge, %142, %143 : vector<16x1xf32>
    %145 = arith.andi %140, %144 : vector<16x1xi1>
    %cst_69 = arith.constant -1.000000e+00 : f32
    %146 = vector.broadcast %cst_69 : f32 to vector<16x1xf32>
    %147 = arith.addf %46, %146 : vector<16x1xf32>
    %cst_70 = arith.constant 4.000000e+00 : f32
    %148 = vector.broadcast %cst_70 : f32 to vector<16x1xf32>
    %149 = arith.cmpf olt, %147, %148 : vector<16x1xf32>
    %150 = arith.andi %145, %149 : vector<16x1xi1>
    %c7 = arith.constant 7 : index
    %c0_71 = arith.constant 0 : index
    %151 = vector.load %arg14[%c7, %c0_71] : memref<32x16xf32, #tpu.memory_space<vmem>>, vector<16x16xf32>
    %cst_72 = arith.constant 0.000000e+00 : f32
    %152 = vector.shape_cast %150 : vector<16x1xi1> to vector<16x1xi1>
    %153 = vector.broadcast %152 : vector<16x1xi1> to vector<16x16xi1>
    %154 = vector.broadcast %cst_72 : f32 to vector<16x16xf32>
    %155 = arith.select %153, %151, %154 : vector<16x16xi1>, vector<16x16xf32>
    %156 = arith.truncf %155 : vector<16x16xf32> to vector<16x16xbf16>
    %c48 = arith.constant 48 : index
    %c0_73 = arith.constant 0 : index
    %157 = vector.load %arg8[%c48, %c0_73] : memref<144x16xbf16, #tpu.memory_space<vmem>>, vector<16x16xbf16>
    %cst_74 = arith.constant dense<0.000000e+00> : vector<16x16xf32>
    %158 = tpu.matmul %156, %157, %cst_74 {dimension_numbers = #tpu.dot_dimension_numbers<[1], [0], [0], [1], [0, 0, 1, 1], [], []>} : vector<16x16xbf16>, vector<16x16xbf16>, vector<16x16xf32> -> vector<16x16xf32>
    %159 = arith.addf %131, %158 : vector<16x16xf32>
    %cst_75 = arith.constant 0.000000e+00 : f32
    %160 = vector.broadcast %cst_75 : f32 to vector<16x1xf32>
    %161 = arith.addf %43, %160 : vector<16x1xf32>
    %cst_76 = arith.constant 0.000000e+00 : f32
    %162 = vector.broadcast %cst_76 : f32 to vector<16x1xf32>
    %163 = arith.cmpf oge, %161, %162 : vector<16x1xf32>
    %cst_77 = arith.constant 0.000000e+00 : f32
    %164 = vector.broadcast %cst_77 : f32 to vector<16x1xf32>
    %165 = arith.addf %43, %164 : vector<16x1xf32>
    %cst_78 = arith.constant 4.000000e+00 : f32
    %166 = vector.broadcast %cst_78 : f32 to vector<16x1xf32>
    %167 = arith.cmpf olt, %165, %166 : vector<16x1xf32>
    %168 = arith.andi %163, %167 : vector<16x1xi1>
    %cst_79 = arith.constant 0.000000e+00 : f32
    %169 = vector.broadcast %cst_79 : f32 to vector<16x1xf32>
    %170 = arith.addf %46, %169 : vector<16x1xf32>
    %cst_80 = arith.constant 0.000000e+00 : f32
    %171 = vector.broadcast %cst_80 : f32 to vector<16x1xf32>
    %172 = arith.cmpf oge, %170, %171 : vector<16x1xf32>
    %173 = arith.andi %168, %172 : vector<16x1xi1>
    %cst_81 = arith.constant 0.000000e+00 : f32
    %174 = vector.broadcast %cst_81 : f32 to vector<16x1xf32>
    %175 = arith.addf %46, %174 : vector<16x1xf32>
    %cst_82 = arith.constant 4.000000e+00 : f32
    %176 = vector.broadcast %cst_82 : f32 to vector<16x1xf32>
    %177 = arith.cmpf olt, %175, %176 : vector<16x1xf32>
    %178 = arith.andi %173, %177 : vector<16x1xi1>
    %c8_83 = arith.constant 8 : index
    %c0_84 = arith.constant 0 : index
    %179 = vector.load %arg14[%c8_83, %c0_84] : memref<32x16xf32, #tpu.memory_space<vmem>>, vector<16x16xf32>
    %cst_85 = arith.constant 0.000000e+00 : f32
    %180 = vector.shape_cast %178 : vector<16x1xi1> to vector<16x1xi1>
    %181 = vector.broadcast %180 : vector<16x1xi1> to vector<16x16xi1>
    %182 = vector.broadcast %cst_85 : f32 to vector<16x16xf32>
    %183 = arith.select %181, %179, %182 : vector<16x16xi1>, vector<16x16xf32>
    %184 = arith.truncf %183 : vector<16x16xf32> to vector<16x16xbf16>
    %c64 = arith.constant 64 : index
    %c0_86 = arith.constant 0 : index
    %185 = vector.load %arg8[%c64, %c0_86] : memref<144x16xbf16, #tpu.memory_space<vmem>>, vector<16x16xbf16>
    %cst_87 = arith.constant dense<0.000000e+00> : vector<16x16xf32>
    %186 = tpu.matmul %184, %185, %cst_87 {dimension_numbers = #tpu.dot_dimension_numbers<[1], [0], [0], [1], [0, 0, 1, 1], [], []>} : vector<16x16xbf16>, vector<16x16xbf16>, vector<16x16xf32> -> vector<16x16xf32>
    %187 = arith.addf %159, %186 : vector<16x16xf32>
    %cst_88 = arith.constant 0.000000e+00 : f32
    %188 = vector.broadcast %cst_88 : f32 to vector<16x1xf32>
    %189 = arith.addf %43, %188 : vector<16x1xf32>
    %cst_89 = arith.constant 0.000000e+00 : f32
    %190 = vector.broadcast %cst_89 : f32 to vector<16x1xf32>
    %191 = arith.cmpf oge, %189, %190 : vector<16x1xf32>
    %cst_90 = arith.constant 0.000000e+00 : f32
    %192 = vector.broadcast %cst_90 : f32 to vector<16x1xf32>
    %193 = arith.addf %43, %192 : vector<16x1xf32>
    %cst_91 = arith.constant 4.000000e+00 : f32
    %194 = vector.broadcast %cst_91 : f32 to vector<16x1xf32>
    %195 = arith.cmpf olt, %193, %194 : vector<16x1xf32>
    %196 = arith.andi %191, %195 : vector<16x1xi1>
    %cst_92 = arith.constant 1.000000e+00 : f32
    %197 = vector.broadcast %cst_92 : f32 to vector<16x1xf32>
    %198 = arith.addf %46, %197 : vector<16x1xf32>
    %cst_93 = arith.constant 0.000000e+00 : f32
    %199 = vector.broadcast %cst_93 : f32 to vector<16x1xf32>
    %200 = arith.cmpf oge, %198, %199 : vector<16x1xf32>
    %201 = arith.andi %196, %200 : vector<16x1xi1>
    %cst_94 = arith.constant 1.000000e+00 : f32
    %202 = vector.broadcast %cst_94 : f32 to vector<16x1xf32>
    %203 = arith.addf %46, %202 : vector<16x1xf32>
    %cst_95 = arith.constant 4.000000e+00 : f32
    %204 = vector.broadcast %cst_95 : f32 to vector<16x1xf32>
    %205 = arith.cmpf olt, %203, %204 : vector<16x1xf32>
    %206 = arith.andi %201, %205 : vector<16x1xi1>
    %c9 = arith.constant 9 : index
    %c0_96 = arith.constant 0 : index
    %207 = vector.load %arg14[%c9, %c0_96] : memref<32x16xf32, #tpu.memory_space<vmem>>, vector<16x16xf32>
    %cst_97 = arith.constant 0.000000e+00 : f32
    %208 = vector.shape_cast %206 : vector<16x1xi1> to vector<16x1xi1>
    %209 = vector.broadcast %208 : vector<16x1xi1> to vector<16x16xi1>
    %210 = vector.broadcast %cst_97 : f32 to vector<16x16xf32>
    %211 = arith.select %209, %207, %210 : vector<16x16xi1>, vector<16x16xf32>
    %212 = arith.truncf %211 : vector<16x16xf32> to vector<16x16xbf16>
    %c80 = arith.constant 80 : index
    %c0_98 = arith.constant 0 : index
    %213 = vector.load %arg8[%c80, %c0_98] : memref<144x16xbf16, #tpu.memory_space<vmem>>, vector<16x16xbf16>
    %cst_99 = arith.constant dense<0.000000e+00> : vector<16x16xf32>
    %214 = tpu.matmul %212, %213, %cst_99 {dimension_numbers = #tpu.dot_dimension_numbers<[1], [0], [0], [1], [0, 0, 1, 1], [], []>} : vector<16x16xbf16>, vector<16x16xbf16>, vector<16x16xf32> -> vector<16x16xf32>
    %215 = arith.addf %187, %214 : vector<16x16xf32>
    %cst_100 = arith.constant 1.000000e+00 : f32
    %216 = vector.broadcast %cst_100 : f32 to vector<16x1xf32>
    %217 = arith.addf %43, %216 : vector<16x1xf32>
    %cst_101 = arith.constant 0.000000e+00 : f32
    %218 = vector.broadcast %cst_101 : f32 to vector<16x1xf32>
    %219 = arith.cmpf oge, %217, %218 : vector<16x1xf32>
    %cst_102 = arith.constant 1.000000e+00 : f32
    %220 = vector.broadcast %cst_102 : f32 to vector<16x1xf32>
    %221 = arith.addf %43, %220 : vector<16x1xf32>
    %cst_103 = arith.constant 4.000000e+00 : f32
    %222 = vector.broadcast %cst_103 : f32 to vector<16x1xf32>
    %223 = arith.cmpf olt, %221, %222 : vector<16x1xf32>
    %224 = arith.andi %219, %223 : vector<16x1xi1>
    %cst_104 = arith.constant -1.000000e+00 : f32
    %225 = vector.broadcast %cst_104 : f32 to vector<16x1xf32>
    %226 = arith.addf %46, %225 : vector<16x1xf32>
    %cst_105 = arith.constant 0.000000e+00 : f32
    %227 = vector.broadcast %cst_105 : f32 to vector<16x1xf32>
    %228 = arith.cmpf oge, %226, %227 : vector<16x1xf32>
    %229 = arith.andi %224, %228 : vector<16x1xi1>
    %cst_106 = arith.constant -1.000000e+00 : f32
    %230 = vector.broadcast %cst_106 : f32 to vector<16x1xf32>
    %231 = arith.addf %46, %230 : vector<16x1xf32>
    %cst_107 = arith.constant 4.000000e+00 : f32
    %232 = vector.broadcast %cst_107 : f32 to vector<16x1xf32>
    %233 = arith.cmpf olt, %231, %232 : vector<16x1xf32>
    %234 = arith.andi %229, %233 : vector<16x1xi1>
    %c11 = arith.constant 11 : index
    %c0_108 = arith.constant 0 : index
    %235 = vector.load %arg14[%c11, %c0_108] : memref<32x16xf32, #tpu.memory_space<vmem>>, vector<16x16xf32>
    %cst_109 = arith.constant 0.000000e+00 : f32
    %236 = vector.shape_cast %234 : vector<16x1xi1> to vector<16x1xi1>
    %237 = vector.broadcast %236 : vector<16x1xi1> to vector<16x16xi1>
    %238 = vector.broadcast %cst_109 : f32 to vector<16x16xf32>
    %239 = arith.select %237, %235, %238 : vector<16x16xi1>, vector<16x16xf32>
    %240 = arith.truncf %239 : vector<16x16xf32> to vector<16x16xbf16>
    %c96 = arith.constant 96 : index
    %c0_110 = arith.constant 0 : index
    %241 = vector.load %arg8[%c96, %c0_110] : memref<144x16xbf16, #tpu.memory_space<vmem>>, vector<16x16xbf16>
    %cst_111 = arith.constant dense<0.000000e+00> : vector<16x16xf32>
    %242 = tpu.matmul %240, %241, %cst_111 {dimension_numbers = #tpu.dot_dimension_numbers<[1], [0], [0], [1], [0, 0, 1, 1], [], []>} : vector<16x16xbf16>, vector<16x16xbf16>, vector<16x16xf32> -> vector<16x16xf32>
    %243 = arith.addf %215, %242 : vector<16x16xf32>
    %cst_112 = arith.constant 1.000000e+00 : f32
    %244 = vector.broadcast %cst_112 : f32 to vector<16x1xf32>
    %245 = arith.addf %43, %244 : vector<16x1xf32>
    %cst_113 = arith.constant 0.000000e+00 : f32
    %246 = vector.broadcast %cst_113 : f32 to vector<16x1xf32>
    %247 = arith.cmpf oge, %245, %246 : vector<16x1xf32>
    %cst_114 = arith.constant 1.000000e+00 : f32
    %248 = vector.broadcast %cst_114 : f32 to vector<16x1xf32>
    %249 = arith.addf %43, %248 : vector<16x1xf32>
    %cst_115 = arith.constant 4.000000e+00 : f32
    %250 = vector.broadcast %cst_115 : f32 to vector<16x1xf32>
    %251 = arith.cmpf olt, %249, %250 : vector<16x1xf32>
    %252 = arith.andi %247, %251 : vector<16x1xi1>
    %cst_116 = arith.constant 0.000000e+00 : f32
    %253 = vector.broadcast %cst_116 : f32 to vector<16x1xf32>
    %254 = arith.addf %46, %253 : vector<16x1xf32>
    %cst_117 = arith.constant 0.000000e+00 : f32
    %255 = vector.broadcast %cst_117 : f32 to vector<16x1xf32>
    %256 = arith.cmpf oge, %254, %255 : vector<16x1xf32>
    %257 = arith.andi %252, %256 : vector<16x1xi1>
    %cst_118 = arith.constant 0.000000e+00 : f32
    %258 = vector.broadcast %cst_118 : f32 to vector<16x1xf32>
    %259 = arith.addf %46, %258 : vector<16x1xf32>
    %cst_119 = arith.constant 4.000000e+00 : f32
    %260 = vector.broadcast %cst_119 : f32 to vector<16x1xf32>
    %261 = arith.cmpf olt, %259, %260 : vector<16x1xf32>
    %262 = arith.andi %257, %261 : vector<16x1xi1>
    %c12 = arith.constant 12 : index
    %c0_120 = arith.constant 0 : index
    %263 = vector.load %arg14[%c12, %c0_120] : memref<32x16xf32, #tpu.memory_space<vmem>>, vector<16x16xf32>
    %cst_121 = arith.constant 0.000000e+00 : f32
    %264 = vector.shape_cast %262 : vector<16x1xi1> to vector<16x1xi1>
    %265 = vector.broadcast %264 : vector<16x1xi1> to vector<16x16xi1>
    %266 = vector.broadcast %cst_121 : f32 to vector<16x16xf32>
    %267 = arith.select %265, %263, %266 : vector<16x16xi1>, vector<16x16xf32>
    %268 = arith.truncf %267 : vector<16x16xf32> to vector<16x16xbf16>
    %c112 = arith.constant 112 : index
    %c0_122 = arith.constant 0 : index
    %269 = vector.load %arg8[%c112, %c0_122] : memref<144x16xbf16, #tpu.memory_space<vmem>>, vector<16x16xbf16>
    %cst_123 = arith.constant dense<0.000000e+00> : vector<16x16xf32>
    %270 = tpu.matmul %268, %269, %cst_123 {dimension_numbers = #tpu.dot_dimension_numbers<[1], [0], [0], [1], [0, 0, 1, 1], [], []>} : vector<16x16xbf16>, vector<16x16xbf16>, vector<16x16xf32> -> vector<16x16xf32>
    %271 = arith.addf %243, %270 : vector<16x16xf32>
    %cst_124 = arith.constant 1.000000e+00 : f32
    %272 = vector.broadcast %cst_124 : f32 to vector<16x1xf32>
    %273 = arith.addf %43, %272 : vector<16x1xf32>
    %cst_125 = arith.constant 0.000000e+00 : f32
    %274 = vector.broadcast %cst_125 : f32 to vector<16x1xf32>
    %275 = arith.cmpf oge, %273, %274 : vector<16x1xf32>
    %cst_126 = arith.constant 1.000000e+00 : f32
    %276 = vector.broadcast %cst_126 : f32 to vector<16x1xf32>
    %277 = arith.addf %43, %276 : vector<16x1xf32>
    %cst_127 = arith.constant 4.000000e+00 : f32
    %278 = vector.broadcast %cst_127 : f32 to vector<16x1xf32>
    %279 = arith.cmpf olt, %277, %278 : vector<16x1xf32>
    %280 = arith.andi %275, %279 : vector<16x1xi1>
    %cst_128 = arith.constant 1.000000e+00 : f32
    %281 = vector.broadcast %cst_128 : f32 to vector<16x1xf32>
    %282 = arith.addf %46, %281 : vector<16x1xf32>
    %cst_129 = arith.constant 0.000000e+00 : f32
    %283 = vector.broadcast %cst_129 : f32 to vector<16x1xf32>
    %284 = arith.cmpf oge, %282, %283 : vector<16x1xf32>
    %285 = arith.andi %280, %284 : vector<16x1xi1>
    %cst_130 = arith.constant 1.000000e+00 : f32
    %286 = vector.broadcast %cst_130 : f32 to vector<16x1xf32>
    %287 = arith.addf %46, %286 : vector<16x1xf32>
    %cst_131 = arith.constant 4.000000e+00 : f32
    %288 = vector.broadcast %cst_131 : f32 to vector<16x1xf32>
    %289 = arith.cmpf olt, %287, %288 : vector<16x1xf32>
    %290 = arith.andi %285, %289 : vector<16x1xi1>
    %c13 = arith.constant 13 : index
    %c0_132 = arith.constant 0 : index
    %291 = vector.load %arg14[%c13, %c0_132] : memref<32x16xf32, #tpu.memory_space<vmem>>, vector<16x16xf32>
    %cst_133 = arith.constant 0.000000e+00 : f32
    %292 = vector.shape_cast %290 : vector<16x1xi1> to vector<16x1xi1>
    %293 = vector.broadcast %292 : vector<16x1xi1> to vector<16x16xi1>
    %294 = vector.broadcast %cst_133 : f32 to vector<16x16xf32>
    %295 = arith.select %293, %291, %294 : vector<16x16xi1>, vector<16x16xf32>
    %296 = arith.truncf %295 : vector<16x16xf32> to vector<16x16xbf16>
    %c128 = arith.constant 128 : index
    %c0_134 = arith.constant 0 : index
    %297 = vector.load %arg8[%c128, %c0_134] : memref<144x16xbf16, #tpu.memory_space<vmem>>, vector<16x16xbf16>
    %cst_135 = arith.constant dense<0.000000e+00> : vector<16x16xf32>
    %298 = tpu.matmul %296, %297, %cst_135 {dimension_numbers = #tpu.dot_dimension_numbers<[1], [0], [0], [1], [0, 0, 1, 1], [], []>} : vector<16x16xbf16>, vector<16x16xbf16>, vector<16x16xf32> -> vector<16x16xf32>
    %299 = arith.addf %271, %298 : vector<16x16xf32>
    %c0_136 = arith.constant 0 : index
    %c0_137 = arith.constant 0 : index
    %300 = vector.load %arg9[%c0_136, %c0_137] : memref<1x16xf32, #tpu.memory_space<vmem>>, vector<1x16xf32>
    %301 = vector.broadcast %300 : vector<1x16xf32> to vector<16x16xf32>
    %302 = arith.addf %299, %301 : vector<16x16xf32>
    %303 = arith.negf %302 : vector<16x16xf32>
    %304 = math.exp %303 : vector<16x16xf32>
    %cst_138 = arith.constant 1.000000e+00 : f32
    %305 = vector.broadcast %cst_138 : f32 to vector<16x16xf32>
    %306 = arith.addf %305, %304 : vector<16x16xf32>
    %307 = arith.divf %305, %306 : vector<16x16xf32>
    %308 = arith.mulf %302, %307 : vector<16x16xf32>
    %309 = arith.addf %12, %308 : vector<16x16xf32>
    %310 = arith.truncf %309 : vector<16x16xf32> to vector<16x16xbf16>
    %c0_139 = arith.constant 0 : index
    %c0_140 = arith.constant 0 : index
    %311 = vector.load %arg10[%c0_139, %c0_140] : memref<16x32xbf16, #tpu.memory_space<vmem>>, vector<16x32xbf16>
    %cst_141 = arith.constant dense<0.000000e+00> : vector<16x32xf32>
    %312 = tpu.matmul %310, %311, %cst_141 {dimension_numbers = #tpu.dot_dimension_numbers<[1], [0], [0], [1], [0, 0, 1, 1], [], []>} : vector<16x16xbf16>, vector<16x32xbf16>, vector<16x32xf32> -> vector<16x32xf32>
    %313 = arith.truncf %23 : vector<16x16xf32> to vector<16x16xbf16>
    %c0_142 = arith.constant 0 : index
    %c0_143 = arith.constant 0 : index
    %314 = vector.load %arg11[%c0_142, %c0_143] : memref<16x32xbf16, #tpu.memory_space<vmem>>, vector<16x32xbf16>
    %cst_144 = arith.constant dense<0.000000e+00> : vector<16x32xf32>
    %315 = tpu.matmul %313, %314, %cst_144 {dimension_numbers = #tpu.dot_dimension_numbers<[1], [0], [0], [1], [0, 0, 1, 1], [], []>} : vector<16x16xbf16>, vector<16x32xbf16>, vector<16x32xf32> -> vector<16x32xf32>
    %316 = arith.addf %312, %315 : vector<16x32xf32>
    %c0_145 = arith.constant 0 : index
    %c0_146 = arith.constant 0 : index
    %317 = vector.load %arg12[%c0_145, %c0_146] : memref<1x32xf32, #tpu.memory_space<vmem>>, vector<1x32xf32>
    %318 = vector.broadcast %317 : vector<1x32xf32> to vector<16x32xf32>
    %319 = arith.addf %316, %318 : vector<16x32xf32>
    %320 = arith.negf %319 : vector<16x32xf32>
    %321 = math.exp %320 : vector<16x32xf32>
    %cst_147 = arith.constant 1.000000e+00 : f32
    %322 = vector.broadcast %cst_147 : f32 to vector<16x32xf32>
    %323 = arith.addf %322, %321 : vector<16x32xf32>
    %324 = arith.divf %322, %323 : vector<16x32xf32>
    %325 = arith.mulf %319, %324 : vector<16x32xf32>
    %326 = arith.truncf %325 : vector<16x32xf32> to vector<16x32xbf16>
    %c0_148 = arith.constant 0 : index
    %c0_149 = arith.constant 0 : index
    %c0_150 = arith.constant 0 : index
    %327 = vector.load %arg13[%c0_148, %c0_149, %c0_150] : memref<1x16x32xbf16, #tpu.memory_space<vmem>>, vector<1x16x32xbf16>
    %328 = vector.shape_cast %327 : vector<1x16x32xbf16> to vector<16x32xbf16>
    %329 = vector.shape_cast %326 : vector<16x32xbf16> to vector<1x16x32xbf16>
    tpu.vector_store %arg13[%c0_148, %c0_149, %c0_150], %329 {strides = array<i32>} : memref<1x16x32xbf16, #tpu.memory_space<vmem>>, vector<1x16x32xbf16>,
    return
  }
  func.func @transform_0(%arg0: i32) -> (i32, i32, i32) {
    %c0_i32 = arith.constant 0 : i32
    %c0_i32_0 = arith.constant 0 : i32
    %c0_i32_1 = arith.constant 0 : i32
    return %arg0, %c0_i32, %c0_i32_0 : i32, i32, i32
  }
  func.func @transform_1(%arg0: i32) -> (i32, i32) {
    %c0_i32 = arith.constant 0 : i32
    %c0_i32_0 = arith.constant 0 : i32
    %c0_i32_1 = arith.constant 0 : i32
    return %c0_i32, %c0_i32_0 : i32, i32
  }
  func.func @transform_2(%arg0: i32) -> (i32, i32) {
    %c0_i32 = arith.constant 0 : i32
    %c0_i32_0 = arith.constant 0 : i32
    %c0_i32_1 = arith.constant 0 : i32
    return %c0_i32, %c0_i32_0 : i32, i32
  }
  func.func @transform_3(%arg0: i32) -> (i32, i32) {
    %c0_i32 = arith.constant 0 : i32
    %c0_i32_0 = arith.constant 0 : i32
    %c0_i32_1 = arith.constant 0 : i32
    return %c0_i32, %c0_i32_0 : i32, i32
  }
  func.func @transform_4(%arg0: i32) -> (i32, i32) {
    %c0_i32 = arith.constant 0 : i32
    %c0_i32_0 = arith.constant 0 : i32
    %c0_i32_1 = arith.constant 0 : i32
    return %c0_i32, %c0_i32_0 : i32, i32
  }
  func.func @transform_5(%arg0: i32) -> (i32, i32) {
    %c0_i32 = arith.constant 0 : i32
    %c0_i32_0 = arith.constant 0 : i32
    %c0_i32_1 = arith.constant 0 : i32
    return %c0_i32, %c0_i32_0 : i32, i32
  }
  func.func @transform_6(%arg0: i32) -> (i32, i32) {
    %c0_i32 = arith.constant 0 : i32
    %c0_i32_0 = arith.constant 0 : i32
    %c0_i32_1 = arith.constant 0 : i32
    return %c0_i32, %c0_i32_0 : i32, i32
  }
  func.func @transform_7(%arg0: i32) -> (i32, i32) {
    %c0_i32 = arith.constant 0 : i32
    %c0_i32_0 = arith.constant 0 : i32
    %c0_i32_1 = arith.constant 0 : i32
    return %c0_i32, %c0_i32_0 : i32, i32
  }
  func.func @transform_8(%arg0: i32) -> (i32, i32) {
    %c0_i32 = arith.constant 0 : i32
    %c0_i32_0 = arith.constant 0 : i32
    %c0_i32_1 = arith.constant 0 : i32
    return %c0_i32, %c0_i32_0 : i32, i32
  }
  func.func @transform_9(%arg0: i32) -> (i32, i32) {
    %c0_i32 = arith.constant 0 : i32
    %c0_i32_0 = arith.constant 0 : i32
    %c0_i32_1 = arith.constant 0 : i32
    return %c0_i32, %c0_i32_0 : i32, i32
  }
  func.func @transform_10(%arg0: i32) -> (i32, i32) {
    %c0_i32 = arith.constant 0 : i32
    %c0_i32_0 = arith.constant 0 : i32
    %c0_i32_1 = arith.constant 0 : i32
    return %c0_i32, %c0_i32_0 : i32, i32
  }
  func.func @transform_11(%arg0: i32) -> (i32, i32) {
    %c0_i32 = arith.constant 0 : i32
    %c0_i32_0 = arith.constant 0 : i32
    %c0_i32_1 = arith.constant 0 : i32
    return %c0_i32, %c0_i32_0 : i32, i32
  }
  func.func @transform_12(%arg0: i32) -> (i32, i32, i32) {
    %c0_i32 = arith.constant 0 : i32
    %c0_i32_0 = arith.constant 0 : i32
    %c0_i32_1 = arith.constant 0 : i32
    return %arg0, %c0_i32, %c0_i32_0 : i32, i32, i32
  }
}

module attributes {stable_mosaic.version = 11 : i64} {
  func.func @_sppf_kernel(%arg0: i32, %arg1: memref<1x16x32xbf16, #tpu.memory_space<vmem>>, %arg2: memref<32x16xbf16, #tpu.memory_space<vmem>>, %arg3: memref<1x16xf32, #tpu.memory_space<vmem>>, %arg4: memref<16x32xbf16, #tpu.memory_space<vmem>>, %arg5: memref<16x32xbf16, #tpu.memory_space<vmem>>, %arg6: memref<16x32xbf16, #tpu.memory_space<vmem>>, %arg7: memref<16x32xbf16, #tpu.memory_space<vmem>>, %arg8: memref<1x32xf32, #tpu.memory_space<vmem>>, %arg9: memref<1x16x32xbf16, #tpu.memory_space<vmem>>, %arg10: memref<32x16xf32, #tpu.memory_space<vmem>>) attributes {dimension_semantics = [#tpu.dimension_semantics<parallel>], iteration_bounds = array<i64: 2>, scalar_prefetch = 0 : i64, scratch_operands = 1 : i64, tpu.core_type = #tpu.core_type<tc>, window_params = [{transform_indices = @transform_0, window_bounds = array<i64: 1, 16, 32>}, {pipeline_mode = #tpu.pipeline_mode<synchronous>, transform_indices = @transform_1, window_bounds = array<i64: 32, 16>}, {pipeline_mode = #tpu.pipeline_mode<synchronous>, transform_indices = @transform_2, window_bounds = array<i64: 1, 16>}, {pipeline_mode = #tpu.pipeline_mode<synchronous>, transform_indices = @transform_3, window_bounds = array<i64: 16, 32>}, {pipeline_mode = #tpu.pipeline_mode<synchronous>, transform_indices = @transform_4, window_bounds = array<i64: 16, 32>}, {pipeline_mode = #tpu.pipeline_mode<synchronous>, transform_indices = @transform_5, window_bounds = array<i64: 16, 32>}, {pipeline_mode = #tpu.pipeline_mode<synchronous>, transform_indices = @transform_6, window_bounds = array<i64: 16, 32>}, {pipeline_mode = #tpu.pipeline_mode<synchronous>, transform_indices = @transform_7, window_bounds = array<i64: 1, 32>}, {transform_indices = @transform_8, window_bounds = array<i64: 1, 16, 32>}]} {
    %c0 = arith.constant 0 : index
    %c0_0 = arith.constant 0 : index
    %c0_1 = arith.constant 0 : index
    %0 = vector.load %arg1[%c0, %c0_0, %c0_1] : memref<1x16x32xbf16, #tpu.memory_space<vmem>>, vector<1x16x32xbf16>
    %1 = vector.shape_cast %0 : vector<1x16x32xbf16> to vector<16x32xbf16>
    %c0_2 = arith.constant 0 : index
    %c0_3 = arith.constant 0 : index
    %2 = vector.load %arg2[%c0_2, %c0_3] : memref<32x16xbf16, #tpu.memory_space<vmem>>, vector<32x16xbf16>
    %cst = arith.constant dense<0.000000e+00> : vector<16x16xf32>
    %3 = tpu.matmul %1, %2, %cst {dimension_numbers = #tpu.dot_dimension_numbers<[1], [0], [0], [1], [0, 0, 1, 1], [], []>} : vector<16x32xbf16>, vector<32x16xbf16>, vector<16x16xf32> -> vector<16x16xf32>
    %c0_4 = arith.constant 0 : index
    %c0_5 = arith.constant 0 : index
    %4 = vector.load %arg3[%c0_4, %c0_5] : memref<1x16xf32, #tpu.memory_space<vmem>>, vector<1x16xf32>
    %5 = vector.broadcast %4 : vector<1x16xf32> to vector<16x16xf32>
    %6 = arith.addf %3, %5 : vector<16x16xf32>
    %7 = arith.negf %6 : vector<16x16xf32>
    %8 = math.exp %7 : vector<16x16xf32>
    %cst_6 = arith.constant 1.000000e+00 : f32
    %9 = vector.broadcast %cst_6 : f32 to vector<16x16xf32>
    %10 = arith.addf %9, %8 : vector<16x16xf32>
    %11 = arith.divf %9, %10 : vector<16x16xf32>
    %12 = arith.mulf %6, %11 : vector<16x16xf32>
    %13 = tpu.iota {dimensions = array<i32: 0>} : vector<16x1xi32>
    %14 = arith.sitofp %13 : vector<16x1xi32> to vector<16x1xf32>
    %cst_7 = arith.constant 4.000000e+00 : f32
    %15 = vector.broadcast %cst_7 : f32 to vector<16x1xf32>
    %16 = arith.divf %14, %15 : vector<16x1xf32>
    %17 = math.floor %16 : vector<16x1xf32>
    %cst_8 = arith.constant 4.000000e+00 : f32
    %18 = vector.broadcast %cst_8 : f32 to vector<16x1xf32>
    %19 = arith.mulf %17, %18 : vector<16x1xf32>
    %20 = arith.subf %14, %19 : vector<16x1xf32>
    %cst_9 = arith.constant 0.000000e+00 : f32
    %21 = vector.broadcast %cst_9 : f32 to vector<32x16xf32>
    %c0_10 = arith.constant 0 : index
    %c0_11 = arith.constant 0 : index
    %22 = vector.load %arg10[%c0_10, %c0_11] : memref<32x16xf32, #tpu.memory_space<vmem>>, vector<32x16xf32>
    tpu.vector_store %arg10[%c0_10, %c0_11], %21 {strides = array<i32>} : memref<32x16xf32, #tpu.memory_space<vmem>>, vector<32x16xf32>,
    %c8 = arith.constant 8 : index
    %c0_12 = arith.constant 0 : index
    %23 = vector.load %arg10[%c8, %c0_12] : memref<32x16xf32, #tpu.memory_space<vmem>>, vector<16x16xf32>
    tpu.vector_store %arg10[%c8, %c0_12], %12 {strides = array<i32>} : memref<32x16xf32, #tpu.memory_space<vmem>>, vector<16x16xf32>,
    %c0_13 = arith.constant 0 : index
    %c0_14 = arith.constant 0 : index
    %24 = vector.load %arg10[%c0_13, %c0_14] : memref<32x16xf32, #tpu.memory_space<vmem>>, vector<16x16xf32>
    %cst_15 = arith.constant -2.000000e+00 : f32
    %25 = vector.broadcast %cst_15 : f32 to vector<16x1xf32>
    %26 = arith.addf %17, %25 : vector<16x1xf32>
    %cst_16 = arith.constant 0.000000e+00 : f32
    %27 = vector.broadcast %cst_16 : f32 to vector<16x1xf32>
    %28 = arith.cmpf oge, %26, %27 : vector<16x1xf32>
    %cst_17 = arith.constant -2.000000e+00 : f32
    %29 = vector.broadcast %cst_17 : f32 to vector<16x1xf32>
    %30 = arith.addf %17, %29 : vector<16x1xf32>
    %cst_18 = arith.constant 4.000000e+00 : f32
    %31 = vector.broadcast %cst_18 : f32 to vector<16x1xf32>
    %32 = arith.cmpf olt, %30, %31 : vector<16x1xf32>
    %33 = arith.andi %28, %32 : vector<16x1xi1>
    %cst_19 = arith.constant 0xFF800000 : f32
    %34 = vector.shape_cast %33 : vector<16x1xi1> to vector<16x1xi1>
    %35 = vector.broadcast %34 : vector<16x1xi1> to vector<16x16xi1>
    %36 = vector.broadcast %cst_19 : f32 to vector<16x16xf32>
    %37 = arith.select %35, %24, %36 : vector<16x16xi1>, vector<16x16xf32>
    %38 = arith.maximumf %12, %37 : vector<16x16xf32>
    %c4 = arith.constant 4 : index
    %c0_20 = arith.constant 0 : index
    %39 = vector.load %arg10[%c4, %c0_20] : memref<32x16xf32, #tpu.memory_space<vmem>>, vector<16x16xf32>
    %cst_21 = arith.constant -1.000000e+00 : f32
    %40 = vector.broadcast %cst_21 : f32 to vector<16x1xf32>
    %41 = arith.addf %17, %40 : vector<16x1xf32>
    %cst_22 = arith.constant 0.000000e+00 : f32
    %42 = vector.broadcast %cst_22 : f32 to vector<16x1xf32>
    %43 = arith.cmpf oge, %41, %42 : vector<16x1xf32>
    %cst_23 = arith.constant -1.000000e+00 : f32
    %44 = vector.broadcast %cst_23 : f32 to vector<16x1xf32>
    %45 = arith.addf %17, %44 : vector<16x1xf32>
    %cst_24 = arith.constant 4.000000e+00 : f32
    %46 = vector.broadcast %cst_24 : f32 to vector<16x1xf32>
    %47 = arith.cmpf olt, %45, %46 : vector<16x1xf32>
    %48 = arith.andi %43, %47 : vector<16x1xi1>
    %cst_25 = arith.constant 0xFF800000 : f32
    %49 = vector.shape_cast %48 : vector<16x1xi1> to vector<16x1xi1>
    %50 = vector.broadcast %49 : vector<16x1xi1> to vector<16x16xi1>
    %51 = vector.broadcast %cst_25 : f32 to vector<16x16xf32>
    %52 = arith.select %50, %39, %51 : vector<16x16xi1>, vector<16x16xf32>
    %53 = arith.maximumf %38, %52 : vector<16x16xf32>
    %c12 = arith.constant 12 : index
    %c0_26 = arith.constant 0 : index
    %54 = vector.load %arg10[%c12, %c0_26] : memref<32x16xf32, #tpu.memory_space<vmem>>, vector<16x16xf32>
    %cst_27 = arith.constant 1.000000e+00 : f32
    %55 = vector.broadcast %cst_27 : f32 to vector<16x1xf32>
    %56 = arith.addf %17, %55 : vector<16x1xf32>
    %cst_28 = arith.constant 0.000000e+00 : f32
    %57 = vector.broadcast %cst_28 : f32 to vector<16x1xf32>
    %58 = arith.cmpf oge, %56, %57 : vector<16x1xf32>
    %cst_29 = arith.constant 1.000000e+00 : f32
    %59 = vector.broadcast %cst_29 : f32 to vector<16x1xf32>
    %60 = arith.addf %17, %59 : vector<16x1xf32>
    %cst_30 = arith.constant 4.000000e+00 : f32
    %61 = vector.broadcast %cst_30 : f32 to vector<16x1xf32>
    %62 = arith.cmpf olt, %60, %61 : vector<16x1xf32>
    %63 = arith.andi %58, %62 : vector<16x1xi1>
    %cst_31 = arith.constant 0xFF800000 : f32
    %64 = vector.shape_cast %63 : vector<16x1xi1> to vector<16x1xi1>
    %65 = vector.broadcast %64 : vector<16x1xi1> to vector<16x16xi1>
    %66 = vector.broadcast %cst_31 : f32 to vector<16x16xf32>
    %67 = arith.select %65, %54, %66 : vector<16x16xi1>, vector<16x16xf32>
    %68 = arith.maximumf %53, %67 : vector<16x16xf32>
    %c16 = arith.constant 16 : index
    %c0_32 = arith.constant 0 : index
    %69 = vector.load %arg10[%c16, %c0_32] : memref<32x16xf32, #tpu.memory_space<vmem>>, vector<16x16xf32>
    %cst_33 = arith.constant 2.000000e+00 : f32
    %70 = vector.broadcast %cst_33 : f32 to vector<16x1xf32>
    %71 = arith.addf %17, %70 : vector<16x1xf32>
    %cst_34 = arith.constant 0.000000e+00 : f32
    %72 = vector.broadcast %cst_34 : f32 to vector<16x1xf32>
    %73 = arith.cmpf oge, %71, %72 : vector<16x1xf32>
    %cst_35 = arith.constant 2.000000e+00 : f32
    %74 = vector.broadcast %cst_35 : f32 to vector<16x1xf32>
    %75 = arith.addf %17, %74 : vector<16x1xf32>
    %cst_36 = arith.constant 4.000000e+00 : f32
    %76 = vector.broadcast %cst_36 : f32 to vector<16x1xf32>
    %77 = arith.cmpf olt, %75, %76 : vector<16x1xf32>
    %78 = arith.andi %73, %77 : vector<16x1xi1>
    %cst_37 = arith.constant 0xFF800000 : f32
    %79 = vector.shape_cast %78 : vector<16x1xi1> to vector<16x1xi1>
    %80 = vector.broadcast %79 : vector<16x1xi1> to vector<16x16xi1>
    %81 = vector.broadcast %cst_37 : f32 to vector<16x16xf32>
    %82 = arith.select %80, %69, %81 : vector<16x16xi1>, vector<16x16xf32>
    %83 = arith.maximumf %68, %82 : vector<16x16xf32>
    %c8_38 = arith.constant 8 : index
    %c0_39 = arith.constant 0 : index
    %84 = vector.load %arg10[%c8_38, %c0_39] : memref<32x16xf32, #tpu.memory_space<vmem>>, vector<16x16xf32>
    tpu.vector_store %arg10[%c8_38, %c0_39], %83 {strides = array<i32>} : memref<32x16xf32, #tpu.memory_space<vmem>>, vector<16x16xf32>,
    %c6 = arith.constant 6 : index
    %c0_40 = arith.constant 0 : index
    %85 = vector.load %arg10[%c6, %c0_40] : memref<32x16xf32, #tpu.memory_space<vmem>>, vector<16x16xf32>
    %cst_41 = arith.constant -2.000000e+00 : f32
    %86 = vector.broadcast %cst_41 : f32 to vector<16x1xf32>
    %87 = arith.addf %20, %86 : vector<16x1xf32>
    %cst_42 = arith.constant 0.000000e+00 : f32
    %88 = vector.broadcast %cst_42 : f32 to vector<16x1xf32>
    %89 = arith.cmpf oge, %87, %88 : vector<16x1xf32>
    %cst_43 = arith.constant -2.000000e+00 : f32
    %90 = vector.broadcast %cst_43 : f32 to vector<16x1xf32>
    %91 = arith.addf %20, %90 : vector<16x1xf32>
    %cst_44 = arith.constant 4.000000e+00 : f32
    %92 = vector.broadcast %cst_44 : f32 to vector<16x1xf32>
    %93 = arith.cmpf olt, %91, %92 : vector<16x1xf32>
    %94 = arith.andi %89, %93 : vector<16x1xi1>
    %cst_45 = arith.constant 0xFF800000 : f32
    %95 = vector.shape_cast %94 : vector<16x1xi1> to vector<16x1xi1>
    %96 = vector.broadcast %95 : vector<16x1xi1> to vector<16x16xi1>
    %97 = vector.broadcast %cst_45 : f32 to vector<16x16xf32>
    %98 = arith.select %96, %85, %97 : vector<16x16xi1>, vector<16x16xf32>
    %99 = arith.maximumf %83, %98 : vector<16x16xf32>
    %c7 = arith.constant 7 : index
    %c0_46 = arith.constant 0 : index
    %100 = vector.load %arg10[%c7, %c0_46] : memref<32x16xf32, #tpu.memory_space<vmem>>, vector<16x16xf32>
    %cst_47 = arith.constant -1.000000e+00 : f32
    %101 = vector.broadcast %cst_47 : f32 to vector<16x1xf32>
    %102 = arith.addf %20, %101 : vector<16x1xf32>
    %cst_48 = arith.constant 0.000000e+00 : f32
    %103 = vector.broadcast %cst_48 : f32 to vector<16x1xf32>
    %104 = arith.cmpf oge, %102, %103 : vector<16x1xf32>
    %cst_49 = arith.constant -1.000000e+00 : f32
    %105 = vector.broadcast %cst_49 : f32 to vector<16x1xf32>
    %106 = arith.addf %20, %105 : vector<16x1xf32>
    %cst_50 = arith.constant 4.000000e+00 : f32
    %107 = vector.broadcast %cst_50 : f32 to vector<16x1xf32>
    %108 = arith.cmpf olt, %106, %107 : vector<16x1xf32>
    %109 = arith.andi %104, %108 : vector<16x1xi1>
    %cst_51 = arith.constant 0xFF800000 : f32
    %110 = vector.shape_cast %109 : vector<16x1xi1> to vector<16x1xi1>
    %111 = vector.broadcast %110 : vector<16x1xi1> to vector<16x16xi1>
    %112 = vector.broadcast %cst_51 : f32 to vector<16x16xf32>
    %113 = arith.select %111, %100, %112 : vector<16x16xi1>, vector<16x16xf32>
    %114 = arith.maximumf %99, %113 : vector<16x16xf32>
    %c9 = arith.constant 9 : index
    %c0_52 = arith.constant 0 : index
    %115 = vector.load %arg10[%c9, %c0_52] : memref<32x16xf32, #tpu.memory_space<vmem>>, vector<16x16xf32>
    %cst_53 = arith.constant 1.000000e+00 : f32
    %116 = vector.broadcast %cst_53 : f32 to vector<16x1xf32>
    %117 = arith.addf %20, %116 : vector<16x1xf32>
    %cst_54 = arith.constant 0.000000e+00 : f32
    %118 = vector.broadcast %cst_54 : f32 to vector<16x1xf32>
    %119 = arith.cmpf oge, %117, %118 : vector<16x1xf32>
    %cst_55 = arith.constant 1.000000e+00 : f32
    %120 = vector.broadcast %cst_55 : f32 to vector<16x1xf32>
    %121 = arith.addf %20, %120 : vector<16x1xf32>
    %cst_56 = arith.constant 4.000000e+00 : f32
    %122 = vector.broadcast %cst_56 : f32 to vector<16x1xf32>
    %123 = arith.cmpf olt, %121, %122 : vector<16x1xf32>
    %124 = arith.andi %119, %123 : vector<16x1xi1>
    %cst_57 = arith.constant 0xFF800000 : f32
    %125 = vector.shape_cast %124 : vector<16x1xi1> to vector<16x1xi1>
    %126 = vector.broadcast %125 : vector<16x1xi1> to vector<16x16xi1>
    %127 = vector.broadcast %cst_57 : f32 to vector<16x16xf32>
    %128 = arith.select %126, %115, %127 : vector<16x16xi1>, vector<16x16xf32>
    %129 = arith.maximumf %114, %128 : vector<16x16xf32>
    %c10 = arith.constant 10 : index
    %c0_58 = arith.constant 0 : index
    %130 = vector.load %arg10[%c10, %c0_58] : memref<32x16xf32, #tpu.memory_space<vmem>>, vector<16x16xf32>
    %cst_59 = arith.constant 2.000000e+00 : f32
    %131 = vector.broadcast %cst_59 : f32 to vector<16x1xf32>
    %132 = arith.addf %20, %131 : vector<16x1xf32>
    %cst_60 = arith.constant 0.000000e+00 : f32
    %133 = vector.broadcast %cst_60 : f32 to vector<16x1xf32>
    %134 = arith.cmpf oge, %132, %133 : vector<16x1xf32>
    %cst_61 = arith.constant 2.000000e+00 : f32
    %135 = vector.broadcast %cst_61 : f32 to vector<16x1xf32>
    %136 = arith.addf %20, %135 : vector<16x1xf32>
    %cst_62 = arith.constant 4.000000e+00 : f32
    %137 = vector.broadcast %cst_62 : f32 to vector<16x1xf32>
    %138 = arith.cmpf olt, %136, %137 : vector<16x1xf32>
    %139 = arith.andi %134, %138 : vector<16x1xi1>
    %cst_63 = arith.constant 0xFF800000 : f32
    %140 = vector.shape_cast %139 : vector<16x1xi1> to vector<16x1xi1>
    %141 = vector.broadcast %140 : vector<16x1xi1> to vector<16x16xi1>
    %142 = vector.broadcast %cst_63 : f32 to vector<16x16xf32>
    %143 = arith.select %141, %130, %142 : vector<16x16xi1>, vector<16x16xf32>
    %144 = arith.maximumf %129, %143 : vector<16x16xf32>
    %c8_64 = arith.constant 8 : index
    %c0_65 = arith.constant 0 : index
    %145 = vector.load %arg10[%c8_64, %c0_65] : memref<32x16xf32, #tpu.memory_space<vmem>>, vector<16x16xf32>
    tpu.vector_store %arg10[%c8_64, %c0_65], %144 {strides = array<i32>} : memref<32x16xf32, #tpu.memory_space<vmem>>, vector<16x16xf32>,
    %c0_66 = arith.constant 0 : index
    %c0_67 = arith.constant 0 : index
    %146 = vector.load %arg10[%c0_66, %c0_67] : memref<32x16xf32, #tpu.memory_space<vmem>>, vector<16x16xf32>
    %cst_68 = arith.constant -2.000000e+00 : f32
    %147 = vector.broadcast %cst_68 : f32 to vector<16x1xf32>
    %148 = arith.addf %17, %147 : vector<16x1xf32>
    %cst_69 = arith.constant 0.000000e+00 : f32
    %149 = vector.broadcast %cst_69 : f32 to vector<16x1xf32>
    %150 = arith.cmpf oge, %148, %149 : vector<16x1xf32>
    %cst_70 = arith.constant -2.000000e+00 : f32
    %151 = vector.broadcast %cst_70 : f32 to vector<16x1xf32>
    %152 = arith.addf %17, %151 : vector<16x1xf32>
    %cst_71 = arith.constant 4.000000e+00 : f32
    %153 = vector.broadcast %cst_71 : f32 to vector<16x1xf32>
    %154 = arith.cmpf olt, %152, %153 : vector<16x1xf32>
    %155 = arith.andi %150, %154 : vector<16x1xi1>
    %cst_72 = arith.constant 0xFF800000 : f32
    %156 = vector.shape_cast %155 : vector<16x1xi1> to vector<16x1xi1>
    %157 = vector.broadcast %156 : vector<16x1xi1> to vector<16x16xi1>
    %158 = vector.broadcast %cst_72 : f32 to vector<16x16xf32>
    %159 = arith.select %157, %146, %158 : vector<16x16xi1>, vector<16x16xf32>
    %160 = arith.maximumf %144, %159 : vector<16x16xf32>
    %c4_73 = arith.constant 4 : index
    %c0_74 = arith.constant 0 : index
    %161 = vector.load %arg10[%c4_73, %c0_74] : memref<32x16xf32, #tpu.memory_space<vmem>>, vector<16x16xf32>
    %cst_75 = arith.constant -1.000000e+00 : f32
    %162 = vector.broadcast %cst_75 : f32 to vector<16x1xf32>
    %163 = arith.addf %17, %162 : vector<16x1xf32>
    %cst_76 = arith.constant 0.000000e+00 : f32
    %164 = vector.broadcast %cst_76 : f32 to vector<16x1xf32>
    %165 = arith.cmpf oge, %163, %164 : vector<16x1xf32>
    %cst_77 = arith.constant -1.000000e+00 : f32
    %166 = vector.broadcast %cst_77 : f32 to vector<16x1xf32>
    %167 = arith.addf %17, %166 : vector<16x1xf32>
    %cst_78 = arith.constant 4.000000e+00 : f32
    %168 = vector.broadcast %cst_78 : f32 to vector<16x1xf32>
    %169 = arith.cmpf olt, %167, %168 : vector<16x1xf32>
    %170 = arith.andi %165, %169 : vector<16x1xi1>
    %cst_79 = arith.constant 0xFF800000 : f32
    %171 = vector.shape_cast %170 : vector<16x1xi1> to vector<16x1xi1>
    %172 = vector.broadcast %171 : vector<16x1xi1> to vector<16x16xi1>
    %173 = vector.broadcast %cst_79 : f32 to vector<16x16xf32>
    %174 = arith.select %172, %161, %173 : vector<16x16xi1>, vector<16x16xf32>
    %175 = arith.maximumf %160, %174 : vector<16x16xf32>
    %c12_80 = arith.constant 12 : index
    %c0_81 = arith.constant 0 : index
    %176 = vector.load %arg10[%c12_80, %c0_81] : memref<32x16xf32, #tpu.memory_space<vmem>>, vector<16x16xf32>
    %cst_82 = arith.constant 1.000000e+00 : f32
    %177 = vector.broadcast %cst_82 : f32 to vector<16x1xf32>
    %178 = arith.addf %17, %177 : vector<16x1xf32>
    %cst_83 = arith.constant 0.000000e+00 : f32
    %179 = vector.broadcast %cst_83 : f32 to vector<16x1xf32>
    %180 = arith.cmpf oge, %178, %179 : vector<16x1xf32>
    %cst_84 = arith.constant 1.000000e+00 : f32
    %181 = vector.broadcast %cst_84 : f32 to vector<16x1xf32>
    %182 = arith.addf %17, %181 : vector<16x1xf32>
    %cst_85 = arith.constant 4.000000e+00 : f32
    %183 = vector.broadcast %cst_85 : f32 to vector<16x1xf32>
    %184 = arith.cmpf olt, %182, %183 : vector<16x1xf32>
    %185 = arith.andi %180, %184 : vector<16x1xi1>
    %cst_86 = arith.constant 0xFF800000 : f32
    %186 = vector.shape_cast %185 : vector<16x1xi1> to vector<16x1xi1>
    %187 = vector.broadcast %186 : vector<16x1xi1> to vector<16x16xi1>
    %188 = vector.broadcast %cst_86 : f32 to vector<16x16xf32>
    %189 = arith.select %187, %176, %188 : vector<16x16xi1>, vector<16x16xf32>
    %190 = arith.maximumf %175, %189 : vector<16x16xf32>
    %c16_87 = arith.constant 16 : index
    %c0_88 = arith.constant 0 : index
    %191 = vector.load %arg10[%c16_87, %c0_88] : memref<32x16xf32, #tpu.memory_space<vmem>>, vector<16x16xf32>
    %cst_89 = arith.constant 2.000000e+00 : f32
    %192 = vector.broadcast %cst_89 : f32 to vector<16x1xf32>
    %193 = arith.addf %17, %192 : vector<16x1xf32>
    %cst_90 = arith.constant 0.000000e+00 : f32
    %194 = vector.broadcast %cst_90 : f32 to vector<16x1xf32>
    %195 = arith.cmpf oge, %193, %194 : vector<16x1xf32>
    %cst_91 = arith.constant 2.000000e+00 : f32
    %196 = vector.broadcast %cst_91 : f32 to vector<16x1xf32>
    %197 = arith.addf %17, %196 : vector<16x1xf32>
    %cst_92 = arith.constant 4.000000e+00 : f32
    %198 = vector.broadcast %cst_92 : f32 to vector<16x1xf32>
    %199 = arith.cmpf olt, %197, %198 : vector<16x1xf32>
    %200 = arith.andi %195, %199 : vector<16x1xi1>
    %cst_93 = arith.constant 0xFF800000 : f32
    %201 = vector.shape_cast %200 : vector<16x1xi1> to vector<16x1xi1>
    %202 = vector.broadcast %201 : vector<16x1xi1> to vector<16x16xi1>
    %203 = vector.broadcast %cst_93 : f32 to vector<16x16xf32>
    %204 = arith.select %202, %191, %203 : vector<16x16xi1>, vector<16x16xf32>
    %205 = arith.maximumf %190, %204 : vector<16x16xf32>
    %c8_94 = arith.constant 8 : index
    %c0_95 = arith.constant 0 : index
    %206 = vector.load %arg10[%c8_94, %c0_95] : memref<32x16xf32, #tpu.memory_space<vmem>>, vector<16x16xf32>
    tpu.vector_store %arg10[%c8_94, %c0_95], %205 {strides = array<i32>} : memref<32x16xf32, #tpu.memory_space<vmem>>, vector<16x16xf32>,
    %c6_96 = arith.constant 6 : index
    %c0_97 = arith.constant 0 : index
    %207 = vector.load %arg10[%c6_96, %c0_97] : memref<32x16xf32, #tpu.memory_space<vmem>>, vector<16x16xf32>
    %cst_98 = arith.constant -2.000000e+00 : f32
    %208 = vector.broadcast %cst_98 : f32 to vector<16x1xf32>
    %209 = arith.addf %20, %208 : vector<16x1xf32>
    %cst_99 = arith.constant 0.000000e+00 : f32
    %210 = vector.broadcast %cst_99 : f32 to vector<16x1xf32>
    %211 = arith.cmpf oge, %209, %210 : vector<16x1xf32>
    %cst_100 = arith.constant -2.000000e+00 : f32
    %212 = vector.broadcast %cst_100 : f32 to vector<16x1xf32>
    %213 = arith.addf %20, %212 : vector<16x1xf32>
    %cst_101 = arith.constant 4.000000e+00 : f32
    %214 = vector.broadcast %cst_101 : f32 to vector<16x1xf32>
    %215 = arith.cmpf olt, %213, %214 : vector<16x1xf32>
    %216 = arith.andi %211, %215 : vector<16x1xi1>
    %cst_102 = arith.constant 0xFF800000 : f32
    %217 = vector.shape_cast %216 : vector<16x1xi1> to vector<16x1xi1>
    %218 = vector.broadcast %217 : vector<16x1xi1> to vector<16x16xi1>
    %219 = vector.broadcast %cst_102 : f32 to vector<16x16xf32>
    %220 = arith.select %218, %207, %219 : vector<16x16xi1>, vector<16x16xf32>
    %221 = arith.maximumf %205, %220 : vector<16x16xf32>
    %c7_103 = arith.constant 7 : index
    %c0_104 = arith.constant 0 : index
    %222 = vector.load %arg10[%c7_103, %c0_104] : memref<32x16xf32, #tpu.memory_space<vmem>>, vector<16x16xf32>
    %cst_105 = arith.constant -1.000000e+00 : f32
    %223 = vector.broadcast %cst_105 : f32 to vector<16x1xf32>
    %224 = arith.addf %20, %223 : vector<16x1xf32>
    %cst_106 = arith.constant 0.000000e+00 : f32
    %225 = vector.broadcast %cst_106 : f32 to vector<16x1xf32>
    %226 = arith.cmpf oge, %224, %225 : vector<16x1xf32>
    %cst_107 = arith.constant -1.000000e+00 : f32
    %227 = vector.broadcast %cst_107 : f32 to vector<16x1xf32>
    %228 = arith.addf %20, %227 : vector<16x1xf32>
    %cst_108 = arith.constant 4.000000e+00 : f32
    %229 = vector.broadcast %cst_108 : f32 to vector<16x1xf32>
    %230 = arith.cmpf olt, %228, %229 : vector<16x1xf32>
    %231 = arith.andi %226, %230 : vector<16x1xi1>
    %cst_109 = arith.constant 0xFF800000 : f32
    %232 = vector.shape_cast %231 : vector<16x1xi1> to vector<16x1xi1>
    %233 = vector.broadcast %232 : vector<16x1xi1> to vector<16x16xi1>
    %234 = vector.broadcast %cst_109 : f32 to vector<16x16xf32>
    %235 = arith.select %233, %222, %234 : vector<16x16xi1>, vector<16x16xf32>
    %236 = arith.maximumf %221, %235 : vector<16x16xf32>
    %c9_110 = arith.constant 9 : index
    %c0_111 = arith.constant 0 : index
    %237 = vector.load %arg10[%c9_110, %c0_111] : memref<32x16xf32, #tpu.memory_space<vmem>>, vector<16x16xf32>
    %cst_112 = arith.constant 1.000000e+00 : f32
    %238 = vector.broadcast %cst_112 : f32 to vector<16x1xf32>
    %239 = arith.addf %20, %238 : vector<16x1xf32>
    %cst_113 = arith.constant 0.000000e+00 : f32
    %240 = vector.broadcast %cst_113 : f32 to vector<16x1xf32>
    %241 = arith.cmpf oge, %239, %240 : vector<16x1xf32>
    %cst_114 = arith.constant 1.000000e+00 : f32
    %242 = vector.broadcast %cst_114 : f32 to vector<16x1xf32>
    %243 = arith.addf %20, %242 : vector<16x1xf32>
    %cst_115 = arith.constant 4.000000e+00 : f32
    %244 = vector.broadcast %cst_115 : f32 to vector<16x1xf32>
    %245 = arith.cmpf olt, %243, %244 : vector<16x1xf32>
    %246 = arith.andi %241, %245 : vector<16x1xi1>
    %cst_116 = arith.constant 0xFF800000 : f32
    %247 = vector.shape_cast %246 : vector<16x1xi1> to vector<16x1xi1>
    %248 = vector.broadcast %247 : vector<16x1xi1> to vector<16x16xi1>
    %249 = vector.broadcast %cst_116 : f32 to vector<16x16xf32>
    %250 = arith.select %248, %237, %249 : vector<16x16xi1>, vector<16x16xf32>
    %251 = arith.maximumf %236, %250 : vector<16x16xf32>
    %c10_117 = arith.constant 10 : index
    %c0_118 = arith.constant 0 : index
    %252 = vector.load %arg10[%c10_117, %c0_118] : memref<32x16xf32, #tpu.memory_space<vmem>>, vector<16x16xf32>
    %cst_119 = arith.constant 2.000000e+00 : f32
    %253 = vector.broadcast %cst_119 : f32 to vector<16x1xf32>
    %254 = arith.addf %20, %253 : vector<16x1xf32>
    %cst_120 = arith.constant 0.000000e+00 : f32
    %255 = vector.broadcast %cst_120 : f32 to vector<16x1xf32>
    %256 = arith.cmpf oge, %254, %255 : vector<16x1xf32>
    %cst_121 = arith.constant 2.000000e+00 : f32
    %257 = vector.broadcast %cst_121 : f32 to vector<16x1xf32>
    %258 = arith.addf %20, %257 : vector<16x1xf32>
    %cst_122 = arith.constant 4.000000e+00 : f32
    %259 = vector.broadcast %cst_122 : f32 to vector<16x1xf32>
    %260 = arith.cmpf olt, %258, %259 : vector<16x1xf32>
    %261 = arith.andi %256, %260 : vector<16x1xi1>
    %cst_123 = arith.constant 0xFF800000 : f32
    %262 = vector.shape_cast %261 : vector<16x1xi1> to vector<16x1xi1>
    %263 = vector.broadcast %262 : vector<16x1xi1> to vector<16x16xi1>
    %264 = vector.broadcast %cst_123 : f32 to vector<16x16xf32>
    %265 = arith.select %263, %252, %264 : vector<16x16xi1>, vector<16x16xf32>
    %266 = arith.maximumf %251, %265 : vector<16x16xf32>
    %c8_124 = arith.constant 8 : index
    %c0_125 = arith.constant 0 : index
    %267 = vector.load %arg10[%c8_124, %c0_125] : memref<32x16xf32, #tpu.memory_space<vmem>>, vector<16x16xf32>
    tpu.vector_store %arg10[%c8_124, %c0_125], %266 {strides = array<i32>} : memref<32x16xf32, #tpu.memory_space<vmem>>, vector<16x16xf32>,
    %c0_126 = arith.constant 0 : index
    %c0_127 = arith.constant 0 : index
    %268 = vector.load %arg10[%c0_126, %c0_127] : memref<32x16xf32, #tpu.memory_space<vmem>>, vector<16x16xf32>
    %cst_128 = arith.constant -2.000000e+00 : f32
    %269 = vector.broadcast %cst_128 : f32 to vector<16x1xf32>
    %270 = arith.addf %17, %269 : vector<16x1xf32>
    %cst_129 = arith.constant 0.000000e+00 : f32
    %271 = vector.broadcast %cst_129 : f32 to vector<16x1xf32>
    %272 = arith.cmpf oge, %270, %271 : vector<16x1xf32>
    %cst_130 = arith.constant -2.000000e+00 : f32
    %273 = vector.broadcast %cst_130 : f32 to vector<16x1xf32>
    %274 = arith.addf %17, %273 : vector<16x1xf32>
    %cst_131 = arith.constant 4.000000e+00 : f32
    %275 = vector.broadcast %cst_131 : f32 to vector<16x1xf32>
    %276 = arith.cmpf olt, %274, %275 : vector<16x1xf32>
    %277 = arith.andi %272, %276 : vector<16x1xi1>
    %cst_132 = arith.constant 0xFF800000 : f32
    %278 = vector.shape_cast %277 : vector<16x1xi1> to vector<16x1xi1>
    %279 = vector.broadcast %278 : vector<16x1xi1> to vector<16x16xi1>
    %280 = vector.broadcast %cst_132 : f32 to vector<16x16xf32>
    %281 = arith.select %279, %268, %280 : vector<16x16xi1>, vector<16x16xf32>
    %282 = arith.maximumf %266, %281 : vector<16x16xf32>
    %c4_133 = arith.constant 4 : index
    %c0_134 = arith.constant 0 : index
    %283 = vector.load %arg10[%c4_133, %c0_134] : memref<32x16xf32, #tpu.memory_space<vmem>>, vector<16x16xf32>
    %cst_135 = arith.constant -1.000000e+00 : f32
    %284 = vector.broadcast %cst_135 : f32 to vector<16x1xf32>
    %285 = arith.addf %17, %284 : vector<16x1xf32>
    %cst_136 = arith.constant 0.000000e+00 : f32
    %286 = vector.broadcast %cst_136 : f32 to vector<16x1xf32>
    %287 = arith.cmpf oge, %285, %286 : vector<16x1xf32>
    %cst_137 = arith.constant -1.000000e+00 : f32
    %288 = vector.broadcast %cst_137 : f32 to vector<16x1xf32>
    %289 = arith.addf %17, %288 : vector<16x1xf32>
    %cst_138 = arith.constant 4.000000e+00 : f32
    %290 = vector.broadcast %cst_138 : f32 to vector<16x1xf32>
    %291 = arith.cmpf olt, %289, %290 : vector<16x1xf32>
    %292 = arith.andi %287, %291 : vector<16x1xi1>
    %cst_139 = arith.constant 0xFF800000 : f32
    %293 = vector.shape_cast %292 : vector<16x1xi1> to vector<16x1xi1>
    %294 = vector.broadcast %293 : vector<16x1xi1> to vector<16x16xi1>
    %295 = vector.broadcast %cst_139 : f32 to vector<16x16xf32>
    %296 = arith.select %294, %283, %295 : vector<16x16xi1>, vector<16x16xf32>
    %297 = arith.maximumf %282, %296 : vector<16x16xf32>
    %c12_140 = arith.constant 12 : index
    %c0_141 = arith.constant 0 : index
    %298 = vector.load %arg10[%c12_140, %c0_141] : memref<32x16xf32, #tpu.memory_space<vmem>>, vector<16x16xf32>
    %cst_142 = arith.constant 1.000000e+00 : f32
    %299 = vector.broadcast %cst_142 : f32 to vector<16x1xf32>
    %300 = arith.addf %17, %299 : vector<16x1xf32>
    %cst_143 = arith.constant 0.000000e+00 : f32
    %301 = vector.broadcast %cst_143 : f32 to vector<16x1xf32>
    %302 = arith.cmpf oge, %300, %301 : vector<16x1xf32>
    %cst_144 = arith.constant 1.000000e+00 : f32
    %303 = vector.broadcast %cst_144 : f32 to vector<16x1xf32>
    %304 = arith.addf %17, %303 : vector<16x1xf32>
    %cst_145 = arith.constant 4.000000e+00 : f32
    %305 = vector.broadcast %cst_145 : f32 to vector<16x1xf32>
    %306 = arith.cmpf olt, %304, %305 : vector<16x1xf32>
    %307 = arith.andi %302, %306 : vector<16x1xi1>
    %cst_146 = arith.constant 0xFF800000 : f32
    %308 = vector.shape_cast %307 : vector<16x1xi1> to vector<16x1xi1>
    %309 = vector.broadcast %308 : vector<16x1xi1> to vector<16x16xi1>
    %310 = vector.broadcast %cst_146 : f32 to vector<16x16xf32>
    %311 = arith.select %309, %298, %310 : vector<16x16xi1>, vector<16x16xf32>
    %312 = arith.maximumf %297, %311 : vector<16x16xf32>
    %c16_147 = arith.constant 16 : index
    %c0_148 = arith.constant 0 : index
    %313 = vector.load %arg10[%c16_147, %c0_148] : memref<32x16xf32, #tpu.memory_space<vmem>>, vector<16x16xf32>
    %cst_149 = arith.constant 2.000000e+00 : f32
    %314 = vector.broadcast %cst_149 : f32 to vector<16x1xf32>
    %315 = arith.addf %17, %314 : vector<16x1xf32>
    %cst_150 = arith.constant 0.000000e+00 : f32
    %316 = vector.broadcast %cst_150 : f32 to vector<16x1xf32>
    %317 = arith.cmpf oge, %315, %316 : vector<16x1xf32>
    %cst_151 = arith.constant 2.000000e+00 : f32
    %318 = vector.broadcast %cst_151 : f32 to vector<16x1xf32>
    %319 = arith.addf %17, %318 : vector<16x1xf32>
    %cst_152 = arith.constant 4.000000e+00 : f32
    %320 = vector.broadcast %cst_152 : f32 to vector<16x1xf32>
    %321 = arith.cmpf olt, %319, %320 : vector<16x1xf32>
    %322 = arith.andi %317, %321 : vector<16x1xi1>
    %cst_153 = arith.constant 0xFF800000 : f32
    %323 = vector.shape_cast %322 : vector<16x1xi1> to vector<16x1xi1>
    %324 = vector.broadcast %323 : vector<16x1xi1> to vector<16x16xi1>
    %325 = vector.broadcast %cst_153 : f32 to vector<16x16xf32>
    %326 = arith.select %324, %313, %325 : vector<16x16xi1>, vector<16x16xf32>
    %327 = arith.maximumf %312, %326 : vector<16x16xf32>
    %c8_154 = arith.constant 8 : index
    %c0_155 = arith.constant 0 : index
    %328 = vector.load %arg10[%c8_154, %c0_155] : memref<32x16xf32, #tpu.memory_space<vmem>>, vector<16x16xf32>
    tpu.vector_store %arg10[%c8_154, %c0_155], %327 {strides = array<i32>} : memref<32x16xf32, #tpu.memory_space<vmem>>, vector<16x16xf32>,
    %c6_156 = arith.constant 6 : index
    %c0_157 = arith.constant 0 : index
    %329 = vector.load %arg10[%c6_156, %c0_157] : memref<32x16xf32, #tpu.memory_space<vmem>>, vector<16x16xf32>
    %cst_158 = arith.constant -2.000000e+00 : f32
    %330 = vector.broadcast %cst_158 : f32 to vector<16x1xf32>
    %331 = arith.addf %20, %330 : vector<16x1xf32>
    %cst_159 = arith.constant 0.000000e+00 : f32
    %332 = vector.broadcast %cst_159 : f32 to vector<16x1xf32>
    %333 = arith.cmpf oge, %331, %332 : vector<16x1xf32>
    %cst_160 = arith.constant -2.000000e+00 : f32
    %334 = vector.broadcast %cst_160 : f32 to vector<16x1xf32>
    %335 = arith.addf %20, %334 : vector<16x1xf32>
    %cst_161 = arith.constant 4.000000e+00 : f32
    %336 = vector.broadcast %cst_161 : f32 to vector<16x1xf32>
    %337 = arith.cmpf olt, %335, %336 : vector<16x1xf32>
    %338 = arith.andi %333, %337 : vector<16x1xi1>
    %cst_162 = arith.constant 0xFF800000 : f32
    %339 = vector.shape_cast %338 : vector<16x1xi1> to vector<16x1xi1>
    %340 = vector.broadcast %339 : vector<16x1xi1> to vector<16x16xi1>
    %341 = vector.broadcast %cst_162 : f32 to vector<16x16xf32>
    %342 = arith.select %340, %329, %341 : vector<16x16xi1>, vector<16x16xf32>
    %343 = arith.maximumf %327, %342 : vector<16x16xf32>
    %c7_163 = arith.constant 7 : index
    %c0_164 = arith.constant 0 : index
    %344 = vector.load %arg10[%c7_163, %c0_164] : memref<32x16xf32, #tpu.memory_space<vmem>>, vector<16x16xf32>
    %cst_165 = arith.constant -1.000000e+00 : f32
    %345 = vector.broadcast %cst_165 : f32 to vector<16x1xf32>
    %346 = arith.addf %20, %345 : vector<16x1xf32>
    %cst_166 = arith.constant 0.000000e+00 : f32
    %347 = vector.broadcast %cst_166 : f32 to vector<16x1xf32>
    %348 = arith.cmpf oge, %346, %347 : vector<16x1xf32>
    %cst_167 = arith.constant -1.000000e+00 : f32
    %349 = vector.broadcast %cst_167 : f32 to vector<16x1xf32>
    %350 = arith.addf %20, %349 : vector<16x1xf32>
    %cst_168 = arith.constant 4.000000e+00 : f32
    %351 = vector.broadcast %cst_168 : f32 to vector<16x1xf32>
    %352 = arith.cmpf olt, %350, %351 : vector<16x1xf32>
    %353 = arith.andi %348, %352 : vector<16x1xi1>
    %cst_169 = arith.constant 0xFF800000 : f32
    %354 = vector.shape_cast %353 : vector<16x1xi1> to vector<16x1xi1>
    %355 = vector.broadcast %354 : vector<16x1xi1> to vector<16x16xi1>
    %356 = vector.broadcast %cst_169 : f32 to vector<16x16xf32>
    %357 = arith.select %355, %344, %356 : vector<16x16xi1>, vector<16x16xf32>
    %358 = arith.maximumf %343, %357 : vector<16x16xf32>
    %c9_170 = arith.constant 9 : index
    %c0_171 = arith.constant 0 : index
    %359 = vector.load %arg10[%c9_170, %c0_171] : memref<32x16xf32, #tpu.memory_space<vmem>>, vector<16x16xf32>
    %cst_172 = arith.constant 1.000000e+00 : f32
    %360 = vector.broadcast %cst_172 : f32 to vector<16x1xf32>
    %361 = arith.addf %20, %360 : vector<16x1xf32>
    %cst_173 = arith.constant 0.000000e+00 : f32
    %362 = vector.broadcast %cst_173 : f32 to vector<16x1xf32>
    %363 = arith.cmpf oge, %361, %362 : vector<16x1xf32>
    %cst_174 = arith.constant 1.000000e+00 : f32
    %364 = vector.broadcast %cst_174 : f32 to vector<16x1xf32>
    %365 = arith.addf %20, %364 : vector<16x1xf32>
    %cst_175 = arith.constant 4.000000e+00 : f32
    %366 = vector.broadcast %cst_175 : f32 to vector<16x1xf32>
    %367 = arith.cmpf olt, %365, %366 : vector<16x1xf32>
    %368 = arith.andi %363, %367 : vector<16x1xi1>
    %cst_176 = arith.constant 0xFF800000 : f32
    %369 = vector.shape_cast %368 : vector<16x1xi1> to vector<16x1xi1>
    %370 = vector.broadcast %369 : vector<16x1xi1> to vector<16x16xi1>
    %371 = vector.broadcast %cst_176 : f32 to vector<16x16xf32>
    %372 = arith.select %370, %359, %371 : vector<16x16xi1>, vector<16x16xf32>
    %373 = arith.maximumf %358, %372 : vector<16x16xf32>
    %c10_177 = arith.constant 10 : index
    %c0_178 = arith.constant 0 : index
    %374 = vector.load %arg10[%c10_177, %c0_178] : memref<32x16xf32, #tpu.memory_space<vmem>>, vector<16x16xf32>
    %cst_179 = arith.constant 2.000000e+00 : f32
    %375 = vector.broadcast %cst_179 : f32 to vector<16x1xf32>
    %376 = arith.addf %20, %375 : vector<16x1xf32>
    %cst_180 = arith.constant 0.000000e+00 : f32
    %377 = vector.broadcast %cst_180 : f32 to vector<16x1xf32>
    %378 = arith.cmpf oge, %376, %377 : vector<16x1xf32>
    %cst_181 = arith.constant 2.000000e+00 : f32
    %379 = vector.broadcast %cst_181 : f32 to vector<16x1xf32>
    %380 = arith.addf %20, %379 : vector<16x1xf32>
    %cst_182 = arith.constant 4.000000e+00 : f32
    %381 = vector.broadcast %cst_182 : f32 to vector<16x1xf32>
    %382 = arith.cmpf olt, %380, %381 : vector<16x1xf32>
    %383 = arith.andi %378, %382 : vector<16x1xi1>
    %cst_183 = arith.constant 0xFF800000 : f32
    %384 = vector.shape_cast %383 : vector<16x1xi1> to vector<16x1xi1>
    %385 = vector.broadcast %384 : vector<16x1xi1> to vector<16x16xi1>
    %386 = vector.broadcast %cst_183 : f32 to vector<16x16xf32>
    %387 = arith.select %385, %374, %386 : vector<16x16xi1>, vector<16x16xf32>
    %388 = arith.maximumf %373, %387 : vector<16x16xf32>
    %389 = arith.truncf %12 : vector<16x16xf32> to vector<16x16xbf16>
    %c0_184 = arith.constant 0 : index
    %c0_185 = arith.constant 0 : index
    %390 = vector.load %arg4[%c0_184, %c0_185] : memref<16x32xbf16, #tpu.memory_space<vmem>>, vector<16x32xbf16>
    %cst_186 = arith.constant dense<0.000000e+00> : vector<16x32xf32>
    %391 = tpu.matmul %389, %390, %cst_186 {dimension_numbers = #tpu.dot_dimension_numbers<[1], [0], [0], [1], [0, 0, 1, 1], [], []>} : vector<16x16xbf16>, vector<16x32xbf16>, vector<16x32xf32> -> vector<16x32xf32>
    %392 = arith.truncf %144 : vector<16x16xf32> to vector<16x16xbf16>
    %c0_187 = arith.constant 0 : index
    %c0_188 = arith.constant 0 : index
    %393 = vector.load %arg5[%c0_187, %c0_188] : memref<16x32xbf16, #tpu.memory_space<vmem>>, vector<16x32xbf16>
    %cst_189 = arith.constant dense<0.000000e+00> : vector<16x32xf32>
    %394 = tpu.matmul %392, %393, %cst_189 {dimension_numbers = #tpu.dot_dimension_numbers<[1], [0], [0], [1], [0, 0, 1, 1], [], []>} : vector<16x16xbf16>, vector<16x32xbf16>, vector<16x32xf32> -> vector<16x32xf32>
    %395 = arith.addf %391, %394 : vector<16x32xf32>
    %396 = arith.truncf %266 : vector<16x16xf32> to vector<16x16xbf16>
    %c0_190 = arith.constant 0 : index
    %c0_191 = arith.constant 0 : index
    %397 = vector.load %arg6[%c0_190, %c0_191] : memref<16x32xbf16, #tpu.memory_space<vmem>>, vector<16x32xbf16>
    %cst_192 = arith.constant dense<0.000000e+00> : vector<16x32xf32>
    %398 = tpu.matmul %396, %397, %cst_192 {dimension_numbers = #tpu.dot_dimension_numbers<[1], [0], [0], [1], [0, 0, 1, 1], [], []>} : vector<16x16xbf16>, vector<16x32xbf16>, vector<16x32xf32> -> vector<16x32xf32>
    %399 = arith.addf %395, %398 : vector<16x32xf32>
    %400 = arith.truncf %388 : vector<16x16xf32> to vector<16x16xbf16>
    %c0_193 = arith.constant 0 : index
    %c0_194 = arith.constant 0 : index
    %401 = vector.load %arg7[%c0_193, %c0_194] : memref<16x32xbf16, #tpu.memory_space<vmem>>, vector<16x32xbf16>
    %cst_195 = arith.constant dense<0.000000e+00> : vector<16x32xf32>
    %402 = tpu.matmul %400, %401, %cst_195 {dimension_numbers = #tpu.dot_dimension_numbers<[1], [0], [0], [1], [0, 0, 1, 1], [], []>} : vector<16x16xbf16>, vector<16x32xbf16>, vector<16x32xf32> -> vector<16x32xf32>
    %403 = arith.addf %399, %402 : vector<16x32xf32>
    %c0_196 = arith.constant 0 : index
    %c0_197 = arith.constant 0 : index
    %404 = vector.load %arg8[%c0_196, %c0_197] : memref<1x32xf32, #tpu.memory_space<vmem>>, vector<1x32xf32>
    %405 = vector.broadcast %404 : vector<1x32xf32> to vector<16x32xf32>
    %406 = arith.addf %403, %405 : vector<16x32xf32>
    %407 = arith.negf %406 : vector<16x32xf32>
    %408 = math.exp %407 : vector<16x32xf32>
    %cst_198 = arith.constant 1.000000e+00 : f32
    %409 = vector.broadcast %cst_198 : f32 to vector<16x32xf32>
    %410 = arith.addf %409, %408 : vector<16x32xf32>
    %411 = arith.divf %409, %410 : vector<16x32xf32>
    %412 = arith.mulf %406, %411 : vector<16x32xf32>
    %413 = arith.truncf %412 : vector<16x32xf32> to vector<16x32xbf16>
    %c0_199 = arith.constant 0 : index
    %c0_200 = arith.constant 0 : index
    %c0_201 = arith.constant 0 : index
    %414 = vector.load %arg9[%c0_199, %c0_200, %c0_201] : memref<1x16x32xbf16, #tpu.memory_space<vmem>>, vector<1x16x32xbf16>
    %415 = vector.shape_cast %414 : vector<1x16x32xbf16> to vector<16x32xbf16>
    %416 = vector.shape_cast %413 : vector<16x32xbf16> to vector<1x16x32xbf16>
    tpu.vector_store %arg9[%c0_199, %c0_200, %c0_201], %416 {strides = array<i32>} : memref<1x16x32xbf16, #tpu.memory_space<vmem>>, vector<1x16x32xbf16>,
    return
  }
  func.func @transform_0(%arg0: i32) -> (i32, i32, i32) {
    %c0_i32 = arith.constant 0 : i32
    %c0_i32_0 = arith.constant 0 : i32
    %c0_i32_1 = arith.constant 0 : i32
    return %arg0, %c0_i32, %c0_i32_0 : i32, i32, i32
  }
  func.func @transform_1(%arg0: i32) -> (i32, i32) {
    %c0_i32 = arith.constant 0 : i32
    %c0_i32_0 = arith.constant 0 : i32
    %c0_i32_1 = arith.constant 0 : i32
    return %c0_i32, %c0_i32_0 : i32, i32
  }
  func.func @transform_2(%arg0: i32) -> (i32, i32) {
    %c0_i32 = arith.constant 0 : i32
    %c0_i32_0 = arith.constant 0 : i32
    %c0_i32_1 = arith.constant 0 : i32
    return %c0_i32, %c0_i32_0 : i32, i32
  }
  func.func @transform_3(%arg0: i32) -> (i32, i32) {
    %c0_i32 = arith.constant 0 : i32
    %c0_i32_0 = arith.constant 0 : i32
    %c0_i32_1 = arith.constant 0 : i32
    return %c0_i32, %c0_i32_0 : i32, i32
  }
  func.func @transform_4(%arg0: i32) -> (i32, i32) {
    %c0_i32 = arith.constant 0 : i32
    %c0_i32_0 = arith.constant 0 : i32
    %c0_i32_1 = arith.constant 0 : i32
    return %c0_i32, %c0_i32_0 : i32, i32
  }
  func.func @transform_5(%arg0: i32) -> (i32, i32) {
    %c0_i32 = arith.constant 0 : i32
    %c0_i32_0 = arith.constant 0 : i32
    %c0_i32_1 = arith.constant 0 : i32
    return %c0_i32, %c0_i32_0 : i32, i32
  }
  func.func @transform_6(%arg0: i32) -> (i32, i32) {
    %c0_i32 = arith.constant 0 : i32
    %c0_i32_0 = arith.constant 0 : i32
    %c0_i32_1 = arith.constant 0 : i32
    return %c0_i32, %c0_i32_0 : i32, i32
  }
  func.func @transform_7(%arg0: i32) -> (i32, i32) {
    %c0_i32 = arith.constant 0 : i32
    %c0_i32_0 = arith.constant 0 : i32
    %c0_i32_1 = arith.constant 0 : i32
    return %c0_i32, %c0_i32_0 : i32, i32
  }
  func.func @transform_8(%arg0: i32) -> (i32, i32, i32) {
    %c0_i32 = arith.constant 0 : i32
    %c0_i32_0 = arith.constant 0 : i32
    %c0_i32_1 = arith.constant 0 : i32
    return %arg0, %c0_i32, %c0_i32_0 : i32, i32, i32
  }
}

</mosaic_0001>

<llo_original>
// kernel: yolov5_forward.5
$region0: #{yolov5_forward.5}
  #allocation0 [shape = 'u32[]', space=smem, size = 0x4, offset = 0x4, fixed_abs, tag = 'smem constant byte address 0x4 - core index']
  #allocation1 [shape = 'u32[144,128]{1,0:T(1,128)}', space=vmem, size = 0x12000, scoped, tag = 'internal scratch']
  %s0 = inlined_call_operand.vmem [shape: bf16[128,32], index: 0, kind: input, shape index: {}]
  %s1 = inlined_call_operand.vmem [shape: bf16[32,16], index: 1, kind: input, shape index: {}]
  %s2 = inlined_call_operand.vmem [shape: f32[1,16], index: 2, kind: input, shape index: {}]
  %s3 = inlined_call_operand.vmem [shape: bf16[128,16], index: 3, kind: output, shape index: {}]
  %s4 = sld [smem:[#allocation0]]
  $region45: #{yolov5_forward.5} parent=0
    _
  %s6 = ssub.s32 1, %s4
  %s7 = scalar_select 0, %s6, %s4
  loop: start=0, step=1, limit=4
  $region2: #{yolov5_forward.5} parent=0 // loop_pre_header
    _
  $region3: #{yolov5_forward.5} parent=0 // loop_header
    %s9 = sphi 0, %s13
    %p10 = scmp.ge.s32.totalorder %s9, 4
    %s19 = sphi 0, %s21
    %s22 = sphi 0, %s19
    %s23 = sphi 0, %s22
    %s39 = sphi 0, %s23
    %s43 = sphi 0, %s43
    %s45 = sphi 0, %s43
    %s46 = sphi 0, %s45
    %s60 = sphi 0, %s46
    %s64 = sphi 0, %s64
    %s66 = sphi 0, %s64
    %s67 = sphi 0, %s66
    %s81 = sphi 0, %s67
    %s87 = sphi 0, %s89
    %s90 = sphi 0, %s87
    %s91 = sphi 0, %s90
    %s107 = sphi 0, %s91
  $region4: #{yolov5_forward.5} parent=0 // loop_header_branch
    %12 = sbr.rel (%p10) target = $region8
  $region5: #{yolov5_forward.5} parent=0 // loop_body
    %s14 = ssub.s32 %s9, 1
    %s15 = ssub.s32 %s9, 2
    %s16 = sadd.s32 %s9, 1
    %s17 = ssub.s32 %s9, %s16
    %p18 = scmp.eq.s32.totalorder %s17, 0
    %s20 = sadd.s32 %s19, 1
    %s21 = scalar_select %p18, %s19, %s20
    %p24 = pneg %p18
    %p25 = scmp.eq.s32.totalorder %s9, 1
    %p26 = por %p24, %p25
    %p27 = scmp.ne.s32.totalorder %s19, %s22
    %p28 = scmp.eq.s32.totalorder %s9, 0
    %p29 = por %p27, %p28
    %p30 = scmp.ne.s32.totalorder %s19, %s22
    %p31 = scmp.eq.s32.totalorder %s14, 1
    %p32 = por %p30, %p31
    %p33 = scmp.ne.s32.totalorder %s22, %s23
    %p34 = scmp.eq.s32.totalorder %s14, 0
    %p35 = por %p33, %p34
    %p36 = scmp.ne.s32.totalorder %s22, %s23
    %p37 = scmp.eq.s32.totalorder %s15, 1
    %p38 = por %p36, %p37
    %p40 = scmp.ne.s32.totalorder %s23, %s39
    %p41 = scmp.eq.s32.totalorder %s15, 0
    %p42 = por %p40, %p41
    %s44 = sadd.s32 %s43, 1
    %p47 = scmp.eq.s32.totalorder %s9, 1
    %p48 = scmp.ne.s32.totalorder %s43, %s45
    %p49 = scmp.eq.s32.totalorder %s9, 0
    %p50 = por %p48, %p49
    %p51 = scmp.ne.s32.totalorder %s43, %s45
    %p52 = scmp.eq.s32.totalorder %s14, 1
    %p53 = por %p51, %p52
    %p54 = scmp.ne.s32.totalorder %s45, %s46
    %p55 = scmp.eq.s32.totalorder %s14, 0
    %p56 = por %p54, %p55
    %p57 = scmp.ne.s32.totalorder %s45, %s46
    %p58 = scmp.eq.s32.totalorder %s15, 1
    %p59 = por %p57, %p58
    %p61 = scmp.ne.s32.totalorder %s46, %s60
    %p62 = scmp.eq.s32.totalorder %s15, 0
    %p63 = por %p61, %p62
    %s65 = sadd.s32 %s64, 1
    %p68 = scmp.eq.s32.totalorder %s9, 1
    %p69 = scmp.ne.s32.totalorder %s64, %s66
    %p70 = scmp.eq.s32.totalorder %s9, 0
    %p71 = por %p69, %p70
    %p72 = scmp.ne.s32.totalorder %s64, %s66
    %p73 = scmp.eq.s32.totalorder %s14, 1
    %p74 = por %p72, %p73
    %p75 = scmp.ne.s32.totalorder %s66, %s67
    %p76 = scmp.eq.s32.totalorder %s14, 0
    %p77 = por %p75, %p76
    %p78 = scmp.ne.s32.totalorder %s66, %s67
    %p79 = scmp.eq.s32.totalorder %s15, 1
    %p80 = por %p78, %p79
    %p82 = scmp.ne.s32.totalorder %s67, %s81
    %p83 = scmp.eq.s32.totalorder %s15, 0
    %p84 = por %p82, %p83
    %s85 = ssub.s32 %s9, %s16
    %p86 = scmp.eq.s32.totalorder %s85, 0
    %s88 = sadd.s32 %s87, 1
    %s89 = scalar_select %p86, %s87, %s88
    %p92 = pneg %p86
    %p93 = scmp.eq.s32.totalorder %s9, 1
    %p94 = por %p92, %p93
    %p95 = scmp.ne.s32.totalorder %s87, %s90
    %p96 = scmp.eq.s32.totalorder %s9, 0
    %p97 = por %p95, %p96
    %p98 = scmp.ne.s32.totalorder %s87, %s90
    %p99 = scmp.eq.s32.totalorder %s14, 1
    %p100 = por %p98, %p99
    %p101 = scmp.ne.s32.totalorder %s90, %s91
    %p102 = scmp.eq.s32.totalorder %s14, 0
    %p103 = por %p101, %p102
    %p104 = scmp.ne.s32.totalorder %s90, %s91
    %p105 = scmp.eq.s32.totalorder %s15, 1
    %p106 = por %p104, %p105
    %p108 = scmp.ne.s32.totalorder %s91, %s107
    %p109 = scmp.eq.s32.totalorder %s15, 0
    %p110 = por %p108, %p109
    %p111 = scmp.le.s32.totalorder 1, %s9
    %p112 = scmp.lt.s32.totalorder %s9, 3
    %p113 = pnand %p111, %p112
    %p114 = pneg %p113
    // Predicated region
    $region9: #{yolov5_forward.5} parent=5 // pred_check
      _
    $region10: #{yolov5_forward.5} parent=5 // pred_check_branch
      %116 = sbr.rel (%p113) target = $region12
    $region11: #{yolov5_forward.5} parent=5 // pred_region
      %s117 = ssub.s32 %s9, 1
      // Predicated region
      $region13: #{yolov5_forward.5} parent=11 // pred_check
        %p118 = pneg %p56
      $region14: #{yolov5_forward.5} parent=11 // pred_check_branch
        %120 = sbr.rel (%p118) target = $region16
      $region15: #{yolov5_forward.5} parent=11 // pred_region
        _
      $region16: #{yolov5_forward.5} parent=11 // pred_fallthru
        _
      // Predicated region
      $region17: #{yolov5_forward.5} parent=11 // pred_check
        %p121 = pneg %p77
      $region18: #{yolov5_forward.5} parent=11 // pred_check_branch
        %123 = sbr.rel (%p121) target = $region20
      $region19: #{yolov5_forward.5} parent=11 // pred_region
        _
      $region20: #{yolov5_forward.5} parent=11 // pred_fallthru
        _
    $region12: #{yolov5_forward.5} parent=5 // pred_fallthru
      _
    %p124 = scmp.lt.s32.totalorder %s9, 2
    // Predicated region
    $region21: #{yolov5_forward.5} parent=5 // pred_check
      %p125 = pneg %p124
    $region22: #{yolov5_forward.5} parent=5 // pred_check_branch
      %127 = sbr.rel (%p125) target = $region24
    $region23: #{yolov5_forward.5} parent=5 // pred_region
      // Predicated region
      $region25: #{yolov5_forward.5} parent=23 // pred_check
        %p128 = pneg %p29
      $region26: #{yolov5_forward.5} parent=23 // pred_check_branch
        %130 = sbr.rel (%p128) target = $region28
      $region27: #{yolov5_forward.5} parent=23 // pred_region
        %s131 = smul.u32 8, %s9
        %p132 = scmp.lt.s32.totalorder %s131, 15
        %s133 = scalar_select %p132, %s131, 15
        %s134 = smul.addr %s133, 4
        %s135 = scalar_lea.vmem %s0, %s134
        %s136 = smul.u32 8, %s9
      $region28: #{yolov5_forward.5} parent=23 // pred_fallthru
        _
    $region24: #{yolov5_forward.5} parent=5 // pred_fallthru
      _
    %p137 = scmp.le.s32.totalorder 1, %s9
    %p138 = scmp.lt.s32.totalorder %s9, 3
    %p139 = pnand %p137, %p138
    %p140 = pneg %p139
    // Predicated region
    $region29: #{yolov5_forward.5} parent=5 // pred_check
      _
    $region30: #{yolov5_forward.5} parent=5 // pred_check_branch
      %142 = sbr.rel (%p139) target = $region32
    $region31: #{yolov5_forward.5} parent=5 // pred_region
      %s143 = ssub.s32 %s9, 1
      %s144 = smul.u32 8, %s14
      %p145 = scmp.lt.s32.totalorder %s144, 15
      %s146 = scalar_select %p145, %s144, 15
      %s147 = smul.addr %s146, 4
      %s148 = scalar_lea.vmem %s0, %s147
      %p149 = pneg %p35
      %p150 = pneg %p32
      %p151 = pneg %p56
      %p152 = pneg %p53
      %p153 = pneg %p77
      %p154 = pneg %p74
      %p155 = pneg %p103
      %p156 = pneg %p100
      %s157 = smul.u32 8, %s14
      %p158 = scmp.lt.s32.totalorder %s157, 15
      %s159 = scalar_select %p158, %s157, 15
      %s160 = smul.addr %s159, 4
      %s161 = scalar_lea.vmem %s3, %s160
      %s162 = smul.u32 8, %s14
      %p163 = scmp.lt.s32.totalorder %s162, 15
      %s164 = scalar_select %p163, %s162, 15
      %s165 = smul.addr %s164, 4
      %s166 = scalar_lea.vmem %s0, %s165
      %s167 = smul.u32 8, %s14
      %s168 = smul.u32 8, %s14
      %p169 = scmp.lt.s32.totalorder %s168, 15
      %s170 = scalar_select %p169, %s168, 15
      %s171 = smul.addr %s170, 4
      %s172 = scalar_lea.vmem %s3, %s171
      %s173 = smul.u32 8, %s14
      %v175 = vld [vmem:[%s166] sm:$0xf]
      %v176 = vld [vmem:[%s166 + $0x4] sm:$0xf]
      %v177 = vld [vmem:[%s166 + $0x8] sm:$0xf]
      %v178 = vld [vmem:[%s166 + $0xc] sm:$0xf]
      %v179 = vld [vmem:[%s166 + $0x10] sm:$0xf]
      %v180 = vld [vmem:[%s166 + $0x14] sm:$0xf]
      %v181 = vld [vmem:[%s166 + $0x18] sm:$0xf]
      %v182 = vld [vmem:[%s166 + $0x1c] sm:$0xf]
      %v183 = vld [vmem:[%s1] sm:$0xf]
      %v184 = vld [vmem:[%s1 + $0x4] sm:$0xf]
      %v185 = vld [vmem:[%s1 + $0x8] sm:$0xf]
      %v186 = vld [vmem:[%s1 + $0xc] sm:$0xf]
      %v187 = vld [vmem:[%s2] sm:$0x1]
      %v189 = vlaneseq
      %v190 = vshrl.u32 %v189, 7
      %v191 = vsub.s32 0, %v190
      %v192 = vrot.slane %v187, %v191
      %v202 = vunpack.c.l.b16 %v175
      %v203 = vunpack.c.l.b16 %v176
      %v204 = vunpack.c.l.b16 %v177
      %v205 = vunpack.c.l.b16 %v178
      %v206 = vunpack.c.l.b16 %v179
      %v207 = vunpack.c.l.b16 %v180
      %v208 = vunpack.c.l.b16 %v181
      %v209 = vunpack.c.l.b16 %v182
      %v210 = vpack.c.b16 %v203, %v202
      %v211 = vpack.c.b16 %v205, %v204
      %v212 = vpack.c.b16 %v207, %v206
      %v213 = vpack.c.b16 %v209, %v208
      %v218 = vunpack.c.l.b16 %v183
      %v219 = vunpack.c.l.b16 %v184
      %v220 = vunpack.c.l.b16 %v185
      %v221 = vunpack.c.l.b16 %v186
      %v222 = vpack.c.b16 %v219, %v218
      %v223 = vpack.c.b16 %v221, %v220
      %vm226 = vcmask 261120
      %v228 = vsel %vm226, %v210, 0
      %v231 = vsel %vm226, %v211, 0
      %v234 = vsel %vm226, %v212, 0
      %v237 = vsel %vm226, %v213, 0
      %239 = vmatprep.subr.bf16.mxu0 0
      %240 = vmatpush1.bf16.msra.mxu0 %v222
      %241 = vmatprep.subr.bf16.mxu0 0
      %242 = vmatpush1.bf16.msra.mxu0 %v223
      %243 = vmatprep.subr.bf16.mxu0 0
      %244 = vmatpush1.bf16.msra.mxu0 0
      %245 = vmatprep.subr.bf16.mxu0 0
      %246 = vmatpush1.bf16.msra.mxu0 0
      %247 = vmatprep.subr.bf16.mxu0 0
      %248 = vmatpush1.bf16.msra.mxu0 0
      %249 = vmatprep.subr.bf16.mxu0 0
      %250 = vmatpush1.bf16.msra.mxu0 0
      %251 = vmatprep.subr.bf16.mxu0 0
      %252 = vmatpush1.bf16.msra.mxu0 0
      %253 = vmatprep.subr.bf16.mxu0 0
      %254 = vmatpush1.bf16.msra.mxu0 0
      %255 = vmatprep.subr.bf16.mxu0 0
      %256 = vmatpush1.bf16.msra.mxu0 0
      %257 = vmatprep.subr.bf16.mxu0 0
      %258 = vmatpush1.bf16.msra.mxu0 0
      %259 = vmatprep.subr.bf16.mxu0 0
      %260 = vmatpush1.bf16.msra.mxu0 0
      %261 = vmatprep.subr.bf16.mxu0 0
      %262 = vmatpush1.bf16.msra.mxu0 0
      %263 = vmatprep.subr.bf16.mxu0 0
      %264 = vmatpush1.bf16.msra.mxu0 0
      %265 = vmatprep.subr.bf16.mxu0 0
      %266 = vmatpush1.bf16.msra.mxu0 0
      %267 = vmatprep.subr.bf16.mxu0 0
      %268 = vmatpush1.bf16.msra.mxu0 0
      %269 = vmatprep.subr.bf16.mxu0 0
      %270 = vmatpush1.bf16.msra.mxu0 0
      %271 = vmatprep.mubr.bf16.mxu0 0
      %272 = vmatmul.mubr.bf16.gmra.mrb[0].mxu0 %v228
      %v273 = vpop.f32.mrb[0].mxu0
      %v274 = vadd.f32 %v192, %v273
      %v275 = vpop.f32.mrb[0].mxu0
      %v276 = vpop.f32.mrb[0].mxu0
      %v277 = vadd.f32 %v192, %v276
      %v278 = vpop.f32.mrb[0].mxu0
      %279 = vmatprep.mubr.bf16.mxu0 0
      %280 = vmatmul.mubr.bf16.gmra.mrb[0].mxu0 %v231
      %v281 = vpop.f32.mrb[0].mxu0
      %v282 = vadd.f32 %v192, %v281
      %v283 = vpop.f32.mrb[0].mxu0
      %v284 = vpop.f32.mrb[0].mxu0
      %v285 = vadd.f32 %v192, %v284
      %v286 = vpop.f32.mrb[0].mxu0
      %287 = vmatprep.mubr.bf16.mxu0 0
      %288 = vmatmul.mubr.bf16.gmra.mrb[0].mxu0 %v234
      %v289 = vpop.f32.mrb[0].mxu0
      %v290 = vadd.f32 %v192, %v289
      %v291 = vpop.f32.mrb[0].mxu0
      %v292 = vpop.f32.mrb[0].mxu0
      %v293 = vadd.f32 %v192, %v292
      %v294 = vpop.f32.mrb[0].mxu0
      %295 = vmatprep.mubr.bf16.mxu0 0
      %296 = vmatmul.mubr.bf16.gmra.mrb[0].mxu0 %v237
      %v297 = vpop.f32.mrb[0].mxu0
      %v298 = vadd.f32 %v192, %v297
      %v299 = vpop.f32.mrb[0].mxu0
      %v300 = vpop.f32.mrb[0].mxu0
      %v301 = vadd.f32 %v192, %v300
      %v302 = vpop.f32.mrb[0].mxu0
      %303 = vdwg.mxu0
      %v304 = vxor.u32 %v274, 2147483648
      %v305 = vxor.u32 %v277, 2147483648
      %v306 = vxor.u32 %v282, 2147483648
      %v307 = vxor.u32 %v285, 2147483648
      %v308 = vxor.u32 %v290, 2147483648
      %v309 = vxor.u32 %v293, 2147483648
      %v310 = vxor.u32 %v298, 2147483648
      %v311 = vxor.u32 %v301, 2147483648
      %v312 = vmul.f32 %v304, 1.442695
      %v313 = vpow.pop %v312
      %v314 = vmul.f32 %v305, 1.442695
      %v315 = vpow.pop %v314
      %v316 = vmul.f32 %v306, 1.442695
      %v317 = vpow.pop %v316
      %v318 = vmul.f32 %v307, 1.442695
      %v319 = vpow.pop %v318
      %v320 = vmul.f32 %v308, 1.442695
      %v321 = vpow.pop %v320
      %v322 = vmul.f32 %v309, 1.442695
      %v323 = vpow.pop %v322
      %v324 = vmul.f32 %v310, 1.442695
      %v325 = vpow.pop %v324
      %v326 = vmul.f32 %v311, 1.442695
      %v327 = vpow.pop %v326
      %v328 = vadd.f32 %v313, 1.0
      %v329 = vadd.f32 %v315, 1.0
      %v330 = vadd.f32 %v317, 1.0
      %v331 = vadd.f32 %v319, 1.0
      %v332 = vadd.f32 %v321, 1.0
      %v333 = vadd.f32 %v323, 1.0
      %v334 = vadd.f32 %v325, 1.0
      %v335 = vadd.f32 %v327, 1.0
      %v336 = vrcp.pop %v328
      %v337 = vmul.f32 1.0, %v336
      %v338 = vrcp.pop %v329
      %v339 = vmul.f32 1.0, %v338
      %v340 = vrcp.pop %v330
      %v341 = vmul.f32 1.0, %v340
      %v342 = vrcp.pop %v331
      %v343 = vmul.f32 1.0, %v342
      %v344 = vrcp.pop %v332
      %v345 = vmul.f32 1.0, %v344
      %v346 = vrcp.pop %v333
      %v347 = vmul.f32 1.0, %v346
      %v348 = vrcp.pop %v334
      %v349 = vmul.f32 1.0, %v348
      %v350 = vrcp.pop %v335
      %v351 = vmul.f32 1.0, %v350
      %v352 = vmul.f32 %v274, %v337
      %v353 = vmul.f32 %v277, %v339
      %v354 = vmul.f32 %v282, %v341
      %v355 = vmul.f32 %v285, %v343
      %v356 = vmul.f32 %v290, %v345
      %v357 = vmul.f32 %v293, %v347
      %v358 = vmul.f32 %v298, %v349
      %v359 = vmul.f32 %v301, %v351
      %v360 = vpack.c.bf16 %v353, %v352
      %v361 = vpack.c.bf16 %v355, %v354
      %v362 = vpack.c.bf16 %v357, %v356
      %v363 = vpack.c.bf16 %v359, %v358
      %v368 = vunpack.c.l.b16 %v360
      %v369 = vunpack.c.h.b16 %v360
      %v370 = vunpack.c.l.b16 %v361
      %v371 = vunpack.c.h.b16 %v361
      %v372 = vunpack.c.l.b16 %v362
      %v373 = vunpack.c.h.b16 %v362
      %v374 = vunpack.c.l.b16 %v363
      %v375 = vunpack.c.h.b16 %v363
      %v376 = vpack.c.b16 %v368, %v368
      %v377 = vpack.c.b16 %v369, %v369
      %v378 = vpack.c.b16 %v370, %v370
      %v379 = vpack.c.b16 %v371, %v371
      %v380 = vpack.c.b16 %v372, %v372
      %v381 = vpack.c.b16 %v373, %v373
      %v382 = vpack.c.b16 %v374, %v374
      %v383 = vpack.c.b16 %v375, %v375
      %vm392 = vcmask 125952
      %393 = vst.msk [vmem:[%s172] sm:$0xf] %vm392, %v376
      %394 = vst.msk [vmem:[%s172 + $0x4] sm:$0xf] %vm392, %v377
      %395 = vst.msk [vmem:[%s172 + $0x8] sm:$0xf] %vm392, %v378
      %396 = vst.msk [vmem:[%s172 + $0xc] sm:$0xf] %vm392, %v379
      %397 = vst.msk [vmem:[%s172 + $0x10] sm:$0xf] %vm392, %v380
      %398 = vst.msk [vmem:[%s172 + $0x14] sm:$0xf] %vm392, %v381
      %399 = vst.msk [vmem:[%s172 + $0x18] sm:$0xf] %vm392, %v382
      %400 = vst.msk [vmem:[%s172 + $0x1c] sm:$0xf] %vm392, %v383
      %s401 = smul.u32 8, %s14
      %p402 = scmp.lt.s32.totalorder %s401, 15
      %s403 = scalar_select %p402, %s401, 15
      %s404 = smul.addr %s403, 4
      %s405 = scalar_lea.vmem %s3, %s404
      // Predicated region
      $region33: #{yolov5_forward.5} parent=31 // pred_check
        %p406 = pneg %p100
      $region34: #{yolov5_forward.5} parent=31 // pred_check_branch
        %408 = sbr.rel (%p406) target = $region36
      $region35: #{yolov5_forward.5} parent=31 // pred_region
        %s409 = smul.u32 8, %s14
      $region36: #{yolov5_forward.5} parent=31 // pred_fallthru
        _
    $region32: #{yolov5_forward.5} parent=5 // pred_fallthru
      _
    %p410 = scmp.le.s32.totalorder 2, %s9
    // Predicated region
    $region37: #{yolov5_forward.5} parent=5 // pred_check
      %p411 = pneg %p410
    $region38: #{yolov5_forward.5} parent=5 // pred_check_branch
      %413 = sbr.rel (%p411) target = $region40
    $region39: #{yolov5_forward.5} parent=5 // pred_region
      %s414 = ssub.s32 %s9, 2
      // Predicated region
      $region41: #{yolov5_forward.5} parent=39 // pred_check
        %p415 = pneg %p106
      $region42: #{yolov5_forward.5} parent=39 // pred_check_branch
        %417 = sbr.rel (%p415) target = $region44
      $region43: #{yolov5_forward.5} parent=39 // pred_region
        %s418 = smul.u32 8, %s15
        %p419 = scmp.lt.s32.totalorder %s418, 15
        %s420 = scalar_select %p419, %s418, 15
        %s421 = smul.addr %s420, 4
        %s422 = scalar_lea.vmem %s3, %s421
      $region44: #{yolov5_forward.5} parent=39 // pred_fallthru
        _
    $region40: #{yolov5_forward.5} parent=5 // pred_fallthru
      _
  $region6: #{yolov5_forward.5} parent=0 // loop_footer
    %s13 = sadd.s32 1, %s9
  $region7: #{yolov5_forward.5} parent=0 // loop_footer_branch
    %8 = sbr.rel target = $region3
  $region8: #{yolov5_forward.5} parent=0 // loop_exit
    _

// kernel: yolov5_forward.6
$region0: #{yolov5_forward.6}
  #allocation0 [shape = 'u32[]', space=smem, size = 0x4, offset = 0x4, fixed_abs, tag = 'smem constant byte address 0x4 - core index']
  #allocation1 [shape = 'u32[144,128]{1,0:T(1,128)}', space=vmem, size = 0x12000, scoped, tag = 'internal scratch']
  %s0 = inlined_call_operand.vmem [shape: bf16[32,144], index: 0, kind: input, shape index: {}]
  %s1 = inlined_call_operand.vmem [shape: bf16[144,32], index: 1, kind: input, shape index: {}]
  %s2 = inlined_call_operand.vmem [shape: f32[1,32], index: 2, kind: input, shape index: {}]
  %s3 = inlined_call_operand.vmem [shape: bf16[32,32], index: 3, kind: output, shape index: {}]
  %s4 = sld [smem:[#allocation0]]
  $region45: #{yolov5_forward.6} parent=0
    _
  %s6 = ssub.s32 1, %s4
  %s7 = scalar_select 0, %s6, %s4
  loop: start=0, step=1, limit=4
  $region2: #{yolov5_forward.6} parent=0 // loop_pre_header
    _
  $region3: #{yolov5_forward.6} parent=0 // loop_header
    %s9 = sphi 0, %s13
    %p10 = scmp.ge.s32.totalorder %s9, 4
    %s19 = sphi 0, %s21
    %s22 = sphi 0, %s19
    %s23 = sphi 0, %s22
    %s39 = sphi 0, %s23
    %s43 = sphi 0, %s43
    %s45 = sphi 0, %s43
    %s46 = sphi 0, %s45
    %s60 = sphi 0, %s46
    %s64 = sphi 0, %s64
    %s66 = sphi 0, %s64
    %s67 = sphi 0, %s66
    %s81 = sphi 0, %s67
    %s87 = sphi 0, %s89
    %s90 = sphi 0, %s87
    %s91 = sphi 0, %s90
    %s107 = sphi 0, %s91
  $region4: #{yolov5_forward.6} parent=0 // loop_header_branch
    %12 = sbr.rel (%p10) target = $region8
  $region5: #{yolov5_forward.6} parent=0 // loop_body
    %s14 = ssub.s32 %s9, 1
    %s15 = ssub.s32 %s9, 2
    %s16 = sadd.s32 %s9, 1
    %s17 = ssub.s32 %s9, %s16
    %p18 = scmp.eq.s32.totalorder %s17, 0
    %s20 = sadd.s32 %s19, 1
    %s21 = scalar_select %p18, %s19, %s20
    %p24 = pneg %p18
    %p25 = scmp.eq.s32.totalorder %s9, 1
    %p26 = por %p24, %p25
    %p27 = scmp.ne.s32.totalorder %s19, %s22
    %p28 = scmp.eq.s32.totalorder %s9, 0
    %p29 = por %p27, %p28
    %p30 = scmp.ne.s32.totalorder %s19, %s22
    %p31 = scmp.eq.s32.totalorder %s14, 1
    %p32 = por %p30, %p31
    %p33 = scmp.ne.s32.totalorder %s22, %s23
    %p34 = scmp.eq.s32.totalorder %s14, 0
    %p35 = por %p33, %p34
    %p36 = scmp.ne.s32.totalorder %s22, %s23
    %p37 = scmp.eq.s32.totalorder %s15, 1
    %p38 = por %p36, %p37
    %p40 = scmp.ne.s32.totalorder %s23, %s39
    %p41 = scmp.eq.s32.totalorder %s15, 0
    %p42 = por %p40, %p41
    %s44 = sadd.s32 %s43, 1
    %p47 = scmp.eq.s32.totalorder %s9, 1
    %p48 = scmp.ne.s32.totalorder %s43, %s45
    %p49 = scmp.eq.s32.totalorder %s9, 0
    %p50 = por %p48, %p49
    %p51 = scmp.ne.s32.totalorder %s43, %s45
    %p52 = scmp.eq.s32.totalorder %s14, 1
    %p53 = por %p51, %p52
    %p54 = scmp.ne.s32.totalorder %s45, %s46
    %p55 = scmp.eq.s32.totalorder %s14, 0
    %p56 = por %p54, %p55
    %p57 = scmp.ne.s32.totalorder %s45, %s46
    %p58 = scmp.eq.s32.totalorder %s15, 1
    %p59 = por %p57, %p58
    %p61 = scmp.ne.s32.totalorder %s46, %s60
    %p62 = scmp.eq.s32.totalorder %s15, 0
    %p63 = por %p61, %p62
    %s65 = sadd.s32 %s64, 1
    %p68 = scmp.eq.s32.totalorder %s9, 1
    %p69 = scmp.ne.s32.totalorder %s64, %s66
    %p70 = scmp.eq.s32.totalorder %s9, 0
    %p71 = por %p69, %p70
    %p72 = scmp.ne.s32.totalorder %s64, %s66
    %p73 = scmp.eq.s32.totalorder %s14, 1
    %p74 = por %p72, %p73
    %p75 = scmp.ne.s32.totalorder %s66, %s67
    %p76 = scmp.eq.s32.totalorder %s14, 0
    %p77 = por %p75, %p76
    %p78 = scmp.ne.s32.totalorder %s66, %s67
    %p79 = scmp.eq.s32.totalorder %s15, 1
    %p80 = por %p78, %p79
    %p82 = scmp.ne.s32.totalorder %s67, %s81
    %p83 = scmp.eq.s32.totalorder %s15, 0
    %p84 = por %p82, %p83
    %s85 = ssub.s32 %s9, %s16
    %p86 = scmp.eq.s32.totalorder %s85, 0
    %s88 = sadd.s32 %s87, 1
    %s89 = scalar_select %p86, %s87, %s88
    %p92 = pneg %p86
    %p93 = scmp.eq.s32.totalorder %s9, 1
    %p94 = por %p92, %p93
    %p95 = scmp.ne.s32.totalorder %s87, %s90
    %p96 = scmp.eq.s32.totalorder %s9, 0
    %p97 = por %p95, %p96
    %p98 = scmp.ne.s32.totalorder %s87, %s90
    %p99 = scmp.eq.s32.totalorder %s14, 1
    %p100 = por %p98, %p99
    %p101 = scmp.ne.s32.totalorder %s90, %s91
    %p102 = scmp.eq.s32.totalorder %s14, 0
    %p103 = por %p101, %p102
    %p104 = scmp.ne.s32.totalorder %s90, %s91
    %p105 = scmp.eq.s32.totalorder %s15, 1
    %p106 = por %p104, %p105
    %p108 = scmp.ne.s32.totalorder %s91, %s107
    %p109 = scmp.eq.s32.totalorder %s15, 0
    %p110 = por %p108, %p109
    %p111 = scmp.le.s32.totalorder 1, %s9
    %p112 = scmp.lt.s32.totalorder %s9, 3
    %p113 = pnand %p111, %p112
    %p114 = pneg %p113
    // Predicated region
    $region9: #{yolov5_forward.6} parent=5 // pred_check
      _
    $region10: #{yolov5_forward.6} parent=5 // pred_check_branch
      %116 = sbr.rel (%p113) target = $region12
    $region11: #{yolov5_forward.6} parent=5 // pred_region
      %s117 = ssub.s32 %s9, 1
      // Predicated region
      $region13: #{yolov5_forward.6} parent=11 // pred_check
        %p118 = pneg %p56
      $region14: #{yolov5_forward.6} parent=11 // pred_check_branch
        %120 = sbr.rel (%p118) target = $region16
      $region15: #{yolov5_forward.6} parent=11 // pred_region
        _
      $region16: #{yolov5_forward.6} parent=11 // pred_fallthru
        _
      // Predicated region
      $region17: #{yolov5_forward.6} parent=11 // pred_check
        %p121 = pneg %p77
      $region18: #{yolov5_forward.6} parent=11 // pred_check_branch
        %123 = sbr.rel (%p121) target = $region20
      $region19: #{yolov5_forward.6} parent=11 // pred_region
        _
      $region20: #{yolov5_forward.6} parent=11 // pred_fallthru
        _
    $region12: #{yolov5_forward.6} parent=5 // pred_fallthru
      _
    %p124 = scmp.lt.s32.totalorder %s9, 2
    // Predicated region
    $region21: #{yolov5_forward.6} parent=5 // pred_check
      %p125 = pneg %p124
    $region22: #{yolov5_forward.6} parent=5 // pred_check_branch
      %127 = sbr.rel (%p125) target = $region24
    $region23: #{yolov5_forward.6} parent=5 // pred_region
      // Predicated region
      $region25: #{yolov5_forward.6} parent=23 // pred_check
        %p128 = pneg %p29
      $region26: #{yolov5_forward.6} parent=23 // pred_check_branch
        %130 = sbr.rel (%p128) target = $region28
      $region27: #{yolov5_forward.6} parent=23 // pred_region
        %s131 = smul.u32 2, %s9
        %p132 = scmp.lt.s32.totalorder %s131, 3
        %s133 = scalar_select %p132, %s131, 3
        %s134 = smul.addr %s133, 2
        %s135 = smul.addr %s134, 4
        %s136 = scalar_lea.vmem %s0, %s135
        %s137 = smul.u32 2, %s9
      $region28: #{yolov5_forward.6} parent=23 // pred_fallthru
        _
    $region24: #{yolov5_forward.6} parent=5 // pred_fallthru
      _
    %p138 = scmp.le.s32.totalorder 1, %s9
    %p139 = scmp.lt.s32.totalorder %s9, 3
    %p140 = pnand %p138, %p139
    %p141 = pneg %p140
    // Predicated region
    $region29: #{yolov5_forward.6} parent=5 // pred_check
      _
    $region30: #{yolov5_forward.6} parent=5 // pred_check_branch
      %143 = sbr.rel (%p140) target = $region32
    $region31: #{yolov5_forward.6} parent=5 // pred_region
      %s144 = ssub.s32 %s9, 1
      %s145 = smul.u32 2, %s14
      %p146 = scmp.lt.s32.totalorder %s145, 3
      %s147 = scalar_select %p146, %s145, 3
      %s148 = smul.addr %s147, 2
      %s149 = smul.addr %s148, 4
      %s150 = scalar_lea.vmem %s0, %s149
      %p151 = pneg %p35
      %p152 = pneg %p32
      %p153 = pneg %p56
      %p154 = pneg %p53
      %p155 = pneg %p77
      %p156 = pneg %p74
      %p157 = pneg %p103
      %p158 = pneg %p100
      %s159 = smul.u32 2, %s14
      %p160 = scmp.lt.s32.totalorder %s159, 3
      %s161 = scalar_select %p160, %s159, 3
      %s162 = smul.addr %s161, 4
      %s163 = scalar_lea.vmem %s3, %s162
      %s164 = smul.u32 2, %s14
      %p165 = scmp.lt.s32.totalorder %s164, 3
      %s166 = scalar_select %p165, %s164, 3
      %s167 = smul.addr %s166, 2
      %s168 = smul.addr %s167, 4
      %s169 = scalar_lea.vmem %s0, %s168
      %s170 = smul.u32 2, %s14
      %s171 = smul.u32 2, %s14
      %p172 = scmp.lt.s32.totalorder %s171, 3
      %s173 = scalar_select %p172, %s171, 3
      %s174 = smul.addr %s173, 4
      %s175 = scalar_lea.vmem %s3, %s174
      %s176 = smul.u32 2, %s14
      %v178 = vld [vmem:[%s169] sm:$0xff]
      %v179 = vld [vmem:[%s169 + $0x8] sm:$0xff]
      %v180 = vld [vmem:[%s1] sm:$0xf]
      %v181 = vld [vmem:[%s1 + $0x4] sm:$0xf]
      %v182 = vld [vmem:[%s1 + $0x8] sm:$0xf]
      %v183 = vld [vmem:[%s1 + $0xc] sm:$0xf]
      %v184 = vld [vmem:[%s1 + $0x10] sm:$0xf]
      %v185 = vld [vmem:[%s1 + $0x14] sm:$0xf]
      %v186 = vld [vmem:[%s1 + $0x18] sm:$0xf]
      %v187 = vld [vmem:[%s1 + $0x1c] sm:$0xf]
      %v188 = vld [vmem:[%s1 + $0x20] sm:$0xf]
      %v189 = vld [vmem:[%s1 + $0x24] sm:$0xf]
      %v190 = vld [vmem:[%s1 + $0x28] sm:$0xf]
      %v191 = vld [vmem:[%s1 + $0x2c] sm:$0xf]
      %v192 = vld [vmem:[%s1 + $0x30] sm:$0xf]
      %v193 = vld [vmem:[%s1 + $0x34] sm:$0xf]
      %v194 = vld [vmem:[%s1 + $0x38] sm:$0xf]
      %v195 = vld [vmem:[%s1 + $0x3c] sm:$0xf]
      %v196 = vld [vmem:[%s1 + $0x40] sm:$0xf]
      %v197 = vld [vmem:[%s1 + $0x44] sm:$0xf]
      %v198 = vld [vmem:[%s2] sm:$0x1]
      %v200 = vlaneseq
      %v201 = vshrl.u32 %v200, 7
      %v202 = vsub.s32 0, %v201
      %v203 = vrot.slane %v198, %v202
      %v207 = vunpack.c.l.b16 %v178
      %v208 = vunpack.c.h.b16 %v178
      %v209 = vunpack.c.l.b16 %v179
      %v210 = vunpack.c.h.b16 %v179
      %v211 = vpack.c.b16 %v209, %v207
      %v212 = vpack.c.b16 %v210, %v208
      %v232 = vunpack.c.l.b16 %v180
      %v233 = vunpack.c.l.b16 %v181
      %v234 = vunpack.c.l.b16 %v182
      %v235 = vunpack.c.l.b16 %v183
      %v236 = vunpack.c.l.b16 %v184
      %v237 = vunpack.c.l.b16 %v185
      %v238 = vunpack.c.l.b16 %v186
      %v239 = vunpack.c.l.b16 %v187
      %v240 = vunpack.c.l.b16 %v188
      %v241 = vunpack.c.l.b16 %v189
      %v242 = vunpack.c.l.b16 %v190
      %v243 = vunpack.c.l.b16 %v191
      %v244 = vunpack.c.l.b16 %v192
      %v245 = vunpack.c.l.b16 %v193
      %v246 = vunpack.c.l.b16 %v194
      %v247 = vunpack.c.l.b16 %v195
      %v248 = vunpack.c.l.b16 %v196
      %v249 = vunpack.c.l.b16 %v197
      %v250 = vpack.c.b16 %v233, %v232
      %v251 = vpack.c.b16 %v235, %v234
      %v252 = vpack.c.b16 %v237, %v236
      %v253 = vpack.c.b16 %v239, %v238
      %v254 = vpack.c.b16 %v241, %v240
      %v255 = vpack.c.b16 %v243, %v242
      %v256 = vpack.c.b16 %v245, %v244
      %v257 = vpack.c.b16 %v247, %v246
      %v258 = vpack.c.b16 %v249, %v248
      %vm268 = vcmask 130048
      %v270 = vsel %vm268, %v212, 0
      %272 = vmatprep.subr.bf16.mxu0 0
      %273 = vmatpush1.bf16.msra.mxu0 %v250
      %274 = vmatprep.subr.bf16.mxu0 0
      %275 = vmatpush1.bf16.msra.mxu0 %v251
      %276 = vmatprep.subr.bf16.mxu0 0
      %277 = vmatpush1.bf16.msra.mxu0 %v252
      %278 = vmatprep.subr.bf16.mxu0 0
      %279 = vmatpush1.bf16.msra.mxu0 %v253
      %280 = vmatprep.subr.bf16.mxu0 0
      %281 = vmatpush1.bf16.msra.mxu0 %v254
      %282 = vmatprep.subr.bf16.mxu0 0
      %283 = vmatpush1.bf16.msra.mxu0 %v255
      %284 = vmatprep.subr.bf16.mxu0 0
      %285 = vmatpush1.bf16.msra.mxu0 %v256
      %286 = vmatprep.subr.bf16.mxu0 0
      %287 = vmatpush1.bf16.msra.mxu0 %v257
      %288 = vmatprep.subr.bf16.mxu0 0
      %289 = vmatpush1.bf16.msra.mxu0 %v258
      %290 = vmatprep.subr.bf16.mxu0 0
      %291 = vmatpush1.bf16.msra.mxu0 0
      %292 = vmatprep.subr.bf16.mxu0 0
      %293 = vmatpush1.bf16.msra.mxu0 0
      %294 = vmatprep.subr.bf16.mxu0 0
      %295 = vmatpush1.bf16.msra.mxu0 0
      %296 = vmatprep.subr.bf16.mxu0 0
      %297 = vmatpush1.bf16.msra.mxu0 0
      %298 = vmatprep.subr.bf16.mxu0 0
      %299 = vmatpush1.bf16.msra.mxu0 0
      %300 = vmatprep.subr.bf16.mxu0 0
      %301 = vmatpush1.bf16.msra.mxu0 0
      %302 = vmatprep.subr.bf16.mxu0 0
      %303 = vmatpush1.bf16.msra.mxu0 0
      %304 = vmatprep.mubr.bf16.mxu0 %v270
      %305 = vmatmul.mubr.bf16.gmra.mrb[0].mxu0 %v211
      %v306 = vpop.f32.mrb[0].mxu0
      %v307 = vadd.f32 %v203, %v306
      %v308 = vpop.f32.mrb[0].mxu0
      %v309 = vpop.f32.mrb[0].mxu0
      %v310 = vadd.f32 %v203, %v309
      %v311 = vpop.f32.mrb[0].mxu0
      %312 = vdwg.mxu0
      %v313 = vxor.u32 %v307, 2147483648
      %v314 = vxor.u32 %v310, 2147483648
      %v315 = vmul.f32 %v313, 1.442695
      %v316 = vpow.pop %v315
      %v317 = vmul.f32 %v314, 1.442695
      %v318 = vpow.pop %v317
      %v319 = vadd.f32 %v316, 1.0
      %v320 = vadd.f32 %v318, 1.0
      %v321 = vrcp.pop %v319
      %v322 = vmul.f32 1.0, %v321
      %v323 = vrcp.pop %v320
      %v324 = vmul.f32 1.0, %v323
      %v325 = vmul.f32 %v307, %v322
      %v326 = vmul.f32 %v310, %v324
      %v327 = vpack.c.bf16 %v326, %v325
      %v329 = vunpack.c.l.b16 %v327
      %v330 = vunpack.c.h.b16 %v327
      %v331 = vpack.c.b16 %v329, %v329
      %v332 = vpack.c.b16 %v330, %v330
      %vm335 = vcmask 257024
      %336 = vst.msk [vmem:[%s175] sm:$0xf] %vm335, %v331
      %337 = vst.msk [vmem:[%s175 + $0x4] sm:$0xf] %vm335, %v332
      %s338 = smul.u32 2, %s14
      %p339 = scmp.lt.s32.totalorder %s338, 3
      %s340 = scalar_select %p339, %s338, 3
      %s341 = smul.addr %s340, 4
      %s342 = scalar_lea.vmem %s3, %s341
      // Predicated region
      $region33: #{yolov5_forward.6} parent=31 // pred_check
        %p343 = pneg %p100
      $region34: #{yolov5_forward.6} parent=31 // pred_check_branch
        %345 = sbr.rel (%p343) target = $region36
      $region35: #{yolov5_forward.6} parent=31 // pred_region
        %s346 = smul.u32 2, %s14
      $region36: #{yolov5_forward.6} parent=31 // pred_fallthru
        _
    $region32: #{yolov5_forward.6} parent=5 // pred_fallthru
      _
    %p347 = scmp.le.s32.totalorder 2, %s9
    // Predicated region
    $region37: #{yolov5_forward.6} parent=5 // pred_check
      %p348 = pneg %p347
    $region38: #{yolov5_forward.6} parent=5 // pred_check_branch
      %350 = sbr.rel (%p348) target = $region40
    $region39: #{yolov5_forward.6} parent=5 // pred_region
      %s351 = ssub.s32 %s9, 2
      // Predicated region
      $region41: #{yolov5_forward.6} parent=39 // pred_check
        %p352 = pneg %p106
      $region42: #{yolov5_forward.6} parent=39 // pred_check_branch
        %354 = sbr.rel (%p352) target = $region44
      $region43: #{yolov5_forward.6} parent=39 // pred_region
        %s355 = smul.u32 2, %s15
        %p356 = scmp.lt.s32.totalorder %s355, 3
        %s357 = scalar_select %p356, %s355, 3
        %s358 = smul.addr %s357, 4
        %s359 = scalar_lea.vmem %s3, %s358
      $region44: #{yolov5_forward.6} parent=39 // pred_fallthru
        _
    $region40: #{yolov5_forward.6} parent=5 // pred_fallthru
      _
  $region6: #{yolov5_forward.6} parent=0 // loop_footer
    %s13 = sadd.s32 1, %s9
  $region7: #{yolov5_forward.6} parent=0 // loop_footer_branch
    %8 = sbr.rel target = $region3
  $region8: #{yolov5_forward.6} parent=0 // loop_exit
    _

// kernel: yolov5_forward.9
$region0: #{yolov5_forward.9}
  #allocation0 [shape = 'u32[]', space=smem, size = 0x4, offset = 0x4, fixed_abs, tag = 'smem constant byte address 0x4 - core index']
  #allocation1 [shape = 'u32[144,128]{1,0:T(1,128)}', space=vmem, size = 0x12000, scoped, tag = 'internal scratch']
  %s0 = inlined_call_operand.vmem [shape: bf16[2,16,32], index: 0, kind: input, shape index: {}]
  %s1 = inlined_call_operand.vmem [shape: bf16[32,48], index: 1, kind: input, shape index: {}]
  %s2 = inlined_call_operand.vmem [shape: f32[1,48], index: 2, kind: input, shape index: {}]
  %s3 = inlined_call_operand.vmem [shape: f32[2,16,48], index: 3, kind: output, shape index: {}]
  %s4 = sld [smem:[#allocation0]]
  $region45: #{yolov5_forward.9} parent=0
    _
  %s6 = ssub.s32 1, %s4
  %s7 = scalar_select 0, %s6, %s4
  loop: start=0, step=1, limit=4
  $region2: #{yolov5_forward.9} parent=0 // loop_pre_header
    _
  $region3: #{yolov5_forward.9} parent=0 // loop_header
    %s9 = sphi 0, %s13
    %p10 = scmp.ge.s32.totalorder %s9, 4
    %s19 = sphi 0, %s21
    %s22 = sphi 0, %s19
    %s23 = sphi 0, %s22
    %s39 = sphi 0, %s23
    %s43 = sphi 0, %s43
    %s45 = sphi 0, %s43
    %s46 = sphi 0, %s45
    %s60 = sphi 0, %s46
    %s64 = sphi 0, %s64
    %s66 = sphi 0, %s64
    %s67 = sphi 0, %s66
    %s81 = sphi 0, %s67
    %s87 = sphi 0, %s89
    %s90 = sphi 0, %s87
    %s91 = sphi 0, %s90
    %s107 = sphi 0, %s91
  $region4: #{yolov5_forward.9} parent=0 // loop_header_branch
    %12 = sbr.rel (%p10) target = $region8
  $region5: #{yolov5_forward.9} parent=0 // loop_body
    %s14 = ssub.s32 %s9, 1
    %s15 = ssub.s32 %s9, 2
    %s16 = sadd.s32 %s9, 1
    %s17 = ssub.s32 %s9, %s16
    %p18 = scmp.eq.s32.totalorder %s17, 0
    %s20 = sadd.s32 %s19, 1
    %s21 = scalar_select %p18, %s19, %s20
    %p24 = pneg %p18
    %p25 = scmp.eq.s32.totalorder %s9, 1
    %p26 = por %p24, %p25
    %p27 = scmp.ne.s32.totalorder %s19, %s22
    %p28 = scmp.eq.s32.totalorder %s9, 0
    %p29 = por %p27, %p28
    %p30 = scmp.ne.s32.totalorder %s19, %s22
    %p31 = scmp.eq.s32.totalorder %s14, 1
    %p32 = por %p30, %p31
    %p33 = scmp.ne.s32.totalorder %s22, %s23
    %p34 = scmp.eq.s32.totalorder %s14, 0
    %p35 = por %p33, %p34
    %p36 = scmp.ne.s32.totalorder %s22, %s23
    %p37 = scmp.eq.s32.totalorder %s15, 1
    %p38 = por %p36, %p37
    %p40 = scmp.ne.s32.totalorder %s23, %s39
    %p41 = scmp.eq.s32.totalorder %s15, 0
    %p42 = por %p40, %p41
    %s44 = sadd.s32 %s43, 1
    %p47 = scmp.eq.s32.totalorder %s9, 1
    %p48 = scmp.ne.s32.totalorder %s43, %s45
    %p49 = scmp.eq.s32.totalorder %s9, 0
    %p50 = por %p48, %p49
    %p51 = scmp.ne.s32.totalorder %s43, %s45
    %p52 = scmp.eq.s32.totalorder %s14, 1
    %p53 = por %p51, %p52
    %p54 = scmp.ne.s32.totalorder %s45, %s46
    %p55 = scmp.eq.s32.totalorder %s14, 0
    %p56 = por %p54, %p55
    %p57 = scmp.ne.s32.totalorder %s45, %s46
    %p58 = scmp.eq.s32.totalorder %s15, 1
    %p59 = por %p57, %p58
    %p61 = scmp.ne.s32.totalorder %s46, %s60
    %p62 = scmp.eq.s32.totalorder %s15, 0
    %p63 = por %p61, %p62
    %s65 = sadd.s32 %s64, 1
    %p68 = scmp.eq.s32.totalorder %s9, 1
    %p69 = scmp.ne.s32.totalorder %s64, %s66
    %p70 = scmp.eq.s32.totalorder %s9, 0
    %p71 = por %p69, %p70
    %p72 = scmp.ne.s32.totalorder %s64, %s66
    %p73 = scmp.eq.s32.totalorder %s14, 1
    %p74 = por %p72, %p73
    %p75 = scmp.ne.s32.totalorder %s66, %s67
    %p76 = scmp.eq.s32.totalorder %s14, 0
    %p77 = por %p75, %p76
    %p78 = scmp.ne.s32.totalorder %s66, %s67
    %p79 = scmp.eq.s32.totalorder %s15, 1
    %p80 = por %p78, %p79
    %p82 = scmp.ne.s32.totalorder %s67, %s81
    %p83 = scmp.eq.s32.totalorder %s15, 0
    %p84 = por %p82, %p83
    %s85 = ssub.s32 %s9, %s16
    %p86 = scmp.eq.s32.totalorder %s85, 0
    %s88 = sadd.s32 %s87, 1
    %s89 = scalar_select %p86, %s87, %s88
    %p92 = pneg %p86
    %p93 = scmp.eq.s32.totalorder %s9, 1
    %p94 = por %p92, %p93
    %p95 = scmp.ne.s32.totalorder %s87, %s90
    %p96 = scmp.eq.s32.totalorder %s9, 0
    %p97 = por %p95, %p96
    %p98 = scmp.ne.s32.totalorder %s87, %s90
    %p99 = scmp.eq.s32.totalorder %s14, 1
    %p100 = por %p98, %p99
    %p101 = scmp.ne.s32.totalorder %s90, %s91
    %p102 = scmp.eq.s32.totalorder %s14, 0
    %p103 = por %p101, %p102
    %p104 = scmp.ne.s32.totalorder %s90, %s91
    %p105 = scmp.eq.s32.totalorder %s15, 1
    %p106 = por %p104, %p105
    %p108 = scmp.ne.s32.totalorder %s91, %s107
    %p109 = scmp.eq.s32.totalorder %s15, 0
    %p110 = por %p108, %p109
    %p111 = scmp.le.s32.totalorder 1, %s9
    %p112 = scmp.lt.s32.totalorder %s9, 3
    %p113 = pnand %p111, %p112
    %p114 = pneg %p113
    // Predicated region
    $region9: #{yolov5_forward.9} parent=5 // pred_check
      _
    $region10: #{yolov5_forward.9} parent=5 // pred_check_branch
      %116 = sbr.rel (%p113) target = $region12
    $region11: #{yolov5_forward.9} parent=5 // pred_region
      %s117 = ssub.s32 %s9, 1
      // Predicated region
      $region13: #{yolov5_forward.9} parent=11 // pred_check
        %p118 = pneg %p56
      $region14: #{yolov5_forward.9} parent=11 // pred_check_branch
        %120 = sbr.rel (%p118) target = $region16
      $region15: #{yolov5_forward.9} parent=11 // pred_region
        _
      $region16: #{yolov5_forward.9} parent=11 // pred_fallthru
        _
      // Predicated region
      $region17: #{yolov5_forward.9} parent=11 // pred_check
        %p121 = pneg %p77
      $region18: #{yolov5_forward.9} parent=11 // pred_check_branch
        %123 = sbr.rel (%p121) target = $region20
      $region19: #{yolov5_forward.9} parent=11 // pred_region
        _
      $region20: #{yolov5_forward.9} parent=11 // pred_fallthru
        _
    $region12: #{yolov5_forward.9} parent=5 // pred_fallthru
      _
    %p124 = scmp.lt.s32.totalorder %s9, 2
    // Predicated region
    $region21: #{yolov5_forward.9} parent=5 // pred_check
      %p125 = pneg %p124
    $region22: #{yolov5_forward.9} parent=5 // pred_check_branch
      %127 = sbr.rel (%p125) target = $region24
    $region23: #{yolov5_forward.9} parent=5 // pred_region
      // Predicated region
      $region25: #{yolov5_forward.9} parent=23 // pred_check
        %p128 = pneg %p29
      $region26: #{yolov5_forward.9} parent=23 // pred_check_branch
        %130 = sbr.rel (%p128) target = $region28
      $region27: #{yolov5_forward.9} parent=23 // pred_region
        %p131 = scmp.lt.s32.totalorder %s9, 1
        %s132 = scalar_select %p131, %s9, 1
        %s133 = smul.addr %s132, 2
        %s134 = smul.addr %s133, 4
        %s135 = scalar_lea.vmem %s0, %s134
      $region28: #{yolov5_forward.9} parent=23 // pred_fallthru
        _
    $region24: #{yolov5_forward.9} parent=5 // pred_fallthru
      _
    %p136 = scmp.le.s32.totalorder 1, %s9
    %p137 = scmp.lt.s32.totalorder %s9, 3
    %p138 = pnand %p136, %p137
    %p139 = pneg %p138
    // Predicated region
    $region29: #{yolov5_forward.9} parent=5 // pred_check
      _
    $region30: #{yolov5_forward.9} parent=5 // pred_check_branch
      %141 = sbr.rel (%p138) target = $region32
    $region31: #{yolov5_forward.9} parent=5 // pred_region
      %s142 = ssub.s32 %s9, 1
      %p143 = scmp.lt.s32.totalorder %s14, 1
      %s144 = scalar_select %p143, %s14, 1
      %s145 = smul.addr %s144, 2
      %s146 = smul.addr %s145, 4
      %s147 = scalar_lea.vmem %s0, %s146
      %p148 = pneg %p35
      %p149 = pneg %p32
      %p150 = pneg %p56
      %p151 = pneg %p53
      %p152 = pneg %p77
      %p153 = pneg %p74
      %p154 = pneg %p103
      %p155 = pneg %p100
      %p156 = scmp.lt.s32.totalorder %s14, 1
      %s157 = scalar_select %p156, %s14, 1
      %s158 = smul.addr %s157, 2
      %s159 = smul.addr %s158, 8
      %s160 = scalar_lea.vmem %s3, %s159
      %p161 = scmp.lt.s32.totalorder %s14, 1
      %s162 = scalar_select %p161, %s14, 1
      %s163 = smul.addr %s162, 2
      %s164 = smul.addr %s163, 4
      %s165 = scalar_lea.vmem %s0, %s164
      %p166 = scmp.lt.s32.totalorder %s14, 1
      %s167 = scalar_select %p166, %s14, 1
      %s168 = smul.addr %s167, 2
      %s169 = smul.addr %s168, 8
      %s170 = scalar_lea.vmem %s3, %s169
      %v172 = vld [vmem:[%s165] sm:$0xf]
      %v173 = vld [vmem:[%s165 + $0x4] sm:$0xf]
      %v174 = vld [vmem:[%s1] sm:$0xf]
      %v175 = vld [vmem:[%s1 + $0x4] sm:$0xf]
      %v176 = vld [vmem:[%s1 + $0x8] sm:$0xf]
      %v177 = vld [vmem:[%s1 + $0xc] sm:$0xf]
      %v178 = vld [vmem:[%s2] sm:$0x1]
      %v180 = vlaneseq
      %v181 = vshrl.u32 %v180, 7
      %v182 = vsub.s32 0, %v181
      %v183 = vrot.slane %v178, %v182
      %v187 = vunpack.c.l.b16 %v172
      %v188 = vunpack.c.l.b16 %v173
      %v189 = vpack.c.b16 %v188, %v187
      %v194 = vunpack.c.l.b16 %v174
      %v195 = vunpack.c.l.b16 %v175
      %v196 = vunpack.c.l.b16 %v176
      %v197 = vunpack.c.l.b16 %v177
      %v198 = vpack.c.b16 %v195, %v194
      %v199 = vpack.c.b16 %v197, %v196
      %vm202 = vcmask 261120
      %v204 = vsel %vm202, %v189, 0
      %206 = vmatprep.subr.bf16.mxu0 0
      %207 = vmatpush1.bf16.msra.mxu0 %v198
      %208 = vmatprep.subr.bf16.mxu0 0
      %209 = vmatpush1.bf16.msra.mxu0 %v199
      %210 = vmatprep.subr.bf16.mxu0 0
      %211 = vmatpush1.bf16.msra.mxu0 0
      %212 = vmatprep.subr.bf16.mxu0 0
      %213 = vmatpush1.bf16.msra.mxu0 0
      %214 = vmatprep.subr.bf16.mxu0 0
      %215 = vmatpush1.bf16.msra.mxu0 0
      %216 = vmatprep.subr.bf16.mxu0 0
      %217 = vmatpush1.bf16.msra.mxu0 0
      %218 = vmatprep.subr.bf16.mxu0 0
      %219 = vmatpush1.bf16.msra.mxu0 0
      %220 = vmatprep.subr.bf16.mxu0 0
      %221 = vmatpush1.bf16.msra.mxu0 0
      %222 = vmatprep.subr.bf16.mxu0 0
      %223 = vmatpush1.bf16.msra.mxu0 0
      %224 = vmatprep.subr.bf16.mxu0 0
      %225 = vmatpush1.bf16.msra.mxu0 0
      %226 = vmatprep.subr.bf16.mxu0 0
      %227 = vmatpush1.bf16.msra.mxu0 0
      %228 = vmatprep.subr.bf16.mxu0 0
      %229 = vmatpush1.bf16.msra.mxu0 0
      %230 = vmatprep.subr.bf16.mxu0 0
      %231 = vmatpush1.bf16.msra.mxu0 0
      %232 = vmatprep.subr.bf16.mxu0 0
      %233 = vmatpush1.bf16.msra.mxu0 0
      %234 = vmatprep.subr.bf16.mxu0 0
      %235 = vmatpush1.bf16.msra.mxu0 0
      %236 = vmatprep.subr.bf16.mxu0 0
      %237 = vmatpush1.bf16.msra.mxu0 0
      %238 = vmatprep.mubr.bf16.mxu0 0
      %239 = vmatmul.mubr.bf16.gmra.mrb[0].mxu0 %v204
      %v240 = vpop.f32.mrb[0].mxu0
      %v241 = vadd.f32 %v183, %v240
      %v242 = vpop.f32.mrb[0].mxu0
      %v243 = vpop.f32.mrb[0].mxu0
      %v244 = vadd.f32 %v183, %v243
      %v245 = vpop.f32.mrb[0].mxu0
      %246 = vdwg.mxu0
      %v247 = vxor.u32 %v241, 2147483648
      %v248 = vxor.u32 %v244, 2147483648
      %v249 = vmul.f32 %v247, 1.442695
      %v250 = vpow.pop %v249
      %v251 = vmul.f32 %v248, 1.442695
      %v252 = vpow.pop %v251
      %v253 = vadd.f32 %v250, 1.0
      %v254 = vadd.f32 %v252, 1.0
      %v255 = vrcp.pop %v253
      %v256 = vmul.f32 1.0, %v255
      %v257 = vrcp.pop %v254
      %v258 = vmul.f32 1.0, %v257
      %v259 = vlaneseq
      %v260 = vshrl.u32 %v259, 7
      %v261 = vadd.s32 %v260, 8
      %v262 = vcvt.s32.f32 %v260
      %v263 = vcvt.s32.f32 %v261
      %v264 = vlaneseq
      %v265 = vand.u32 %v264, 127
      %v266 = vcvt.s32.f32 %v265
      %v267 = vrcp.pop 4.0
      %v268 = vmul.f32 %v262, %v267
      %v269 = vmul.f32 %v263, %v267
      %v270 = vfloor.f32 %v268
      %v271 = vfloor.f32 %v269
      %v272 = vmul.f32 %v270, 4.0
      %v273 = vmul.f32 %v271, 4.0
      %v274 = vsub.f32 %v262, %v272
      %v275 = vsub.f32 %v263, %v273
      %v276 = vrcp.pop 16.0
      %v277 = vmul.f32 %v266, %v276
      %v278 = vfloor.f32 %v277
      %v279 = vmul.f32 %v278, 16.0
      %v280 = vsub.f32 %v266, %v279
      %vm281 = vcmp.eq.f32.partialorder %v280, 0.0
      %v282 = vsel %vm281, %v274, %v270
      %v283 = vsel %vm281, %v275, %v271
      %vm284 = vcmp.eq.f32.partialorder %v278, 0.0
      %vm285 = vcmp.eq.f32.partialorder %v278, 1.0
      %v286 = vsel %vm285, 16.0, 33.0
      %v287 = vsel %vm284, 10.0, %v286
      %v288 = vsel %vm285, 30.0, 23.0
      %v289 = vsel %vm284, 13.0, %v288
      %vm290 = vcmp.eq.f32.partialorder %v280, 2.0
      %v291 = vsel %vm290, %v287, %v289
      %v292 = vmul.f32 %v256, 2.0
      %v293 = vmul.f32 %v258, 2.0
      %v294 = vsub.f32 %v292, 0.5
      %v295 = vsub.f32 %v293, 0.5
      %v296 = vadd.f32 %v294, %v282
      %v297 = vadd.f32 %v295, %v283
      %v298 = vmul.f32 %v296, 4.0
      %v299 = vmul.f32 %v297, 4.0
      %v300 = vmul.f32 %v292, %v292
      %v301 = vmul.f32 %v293, %v293
      %v302 = vmul.f32 %v300, %v291
      %v303 = vmul.f32 %v301, %v291
      %vm304 = vcmp.lt.f32.partialorder %v280, 2.0
      %vm305 = vcmp.lt.f32.partialorder %v280, 4.0
      %v306 = vsel %vm305, %v302, %v256
      %v307 = vsel %vm305, %v303, %v258
      %v308 = vsel %vm304, %v298, %v306
      %v309 = vsel %vm304, %v299, %v307
      %vm310 = vcmask 392192
      %311 = vst.msk [vmem:[%s170] sm:$0xff] %vm310, %v308
      %312 = vst.msk [vmem:[%s170 + $0x8] sm:$0xff] %vm310, %v309
      %p313 = scmp.lt.s32.totalorder %s14, 1
      %s314 = scalar_select %p313, %s14, 1
      %s315 = smul.addr %s314, 2
      %s316 = smul.addr %s315, 8
      %s317 = scalar_lea.vmem %s3, %s316
      // Predicated region
      $region33: #{yolov5_forward.9} parent=31 // pred_check
        %p318 = pneg %p100
      $region34: #{yolov5_forward.9} parent=31 // pred_check_branch
        %320 = sbr.rel (%p318) target = $region36
      $region35: #{yolov5_forward.9} parent=31 // pred_region
        _
      $region36: #{yolov5_forward.9} parent=31 // pred_fallthru
        _
    $region32: #{yolov5_forward.9} parent=5 // pred_fallthru
      _
    %p321 = scmp.le.s32.totalorder 2, %s9
    // Predicated region
    $region37: #{yolov5_forward.9} parent=5 // pred_check
      %p322 = pneg %p321
    $region38: #{yolov5_forward.9} parent=5 // pred_check_branch
      %324 = sbr.rel (%p322) target = $region40
    $region39: #{yolov5_forward.9} parent=5 // pred_region
      %s325 = ssub.s32 %s9, 2
      // Predicated region
      $region41: #{yolov5_forward.9} parent=39 // pred_check
        %p326 = pneg %p106
      $region42: #{yolov5_forward.9} parent=39 // pred_check_branch
        %328 = sbr.rel (%p326) target = $region44
      $region43: #{yolov5_forward.9} parent=39 // pred_region
        %p329 = scmp.lt.s32.totalorder %s15, 1
        %s330 = scalar_select %p329, %s15, 1
        %s331 = smul.addr %s330, 2
        %s332 = smul.addr %s331, 8
        %s333 = scalar_lea.vmem %s3, %s332
      $region44: #{yolov5_forward.9} parent=39 // pred_fallthru
        _
    $region40: #{yolov5_forward.9} parent=5 // pred_fallthru
      _
  $region6: #{yolov5_forward.9} parent=0 // loop_footer
    %s13 = sadd.s32 1, %s9
  $region7: #{yolov5_forward.9} parent=0 // loop_footer_branch
    %8 = sbr.rel target = $region3
  $region8: #{yolov5_forward.9} parent=0 // loop_exit
    _

// kernel: yolov5_forward.8
$region0: #{yolov5_forward.8}
  #allocation0 [shape = 'u32[]', space=smem, size = 0x4, offset = 0x4, fixed_abs, tag = 'smem constant byte address 0x4 - core index']
  #allocation1 [shape = 'u32[144,128]{1,0:T(1,128)}', space=vmem, size = 0x12000, scoped, tag = 'internal scratch']
  #allocation2 [shape = 'f32[32,16]{1,0:T(8,128)}', space=vmem, size = 0x4000, scoped, tag = 'scratch operand']
  %s0 = inlined_call_operand.vmem [shape: bf16[2,16,32], index: 0, kind: input, shape index: {}]
  %s1 = inlined_call_operand.vmem [shape: bf16[32,16], index: 1, kind: input, shape index: {}]
  %s2 = inlined_call_operand.vmem [shape: f32[1,16], index: 2, kind: input, shape index: {}]
  %s3 = inlined_call_operand.vmem [shape: bf16[16,32], index: 3, kind: input, shape index: {}]
  %s4 = inlined_call_operand.vmem [shape: bf16[16,32], index: 4, kind: input, shape index: {}]
  %s5 = inlined_call_operand.vmem [shape: bf16[16,32], index: 5, kind: input, shape index: {}]
  %s6 = inlined_call_operand.vmem [shape: bf16[16,32], index: 6, kind: input, shape index: {}]
  %s7 = inlined_call_operand.vmem [shape: f32[1,32], index: 7, kind: input, shape index: {}]
  %s8 = inlined_call_operand.vmem [shape: bf16[2,16,32], index: 8, kind: output, shape index: {}]
  %s9 = sld [smem:[#allocation0]]
  $region65: #{yolov5_forward.8} parent=0
    _
  %s11 = ssub.s32 1, %s9
  %s12 = scalar_select 0, %s11, %s9
  loop: start=0, step=1, limit=4
  $region2: #{yolov5_forward.8} parent=0 // loop_pre_header
    _
  $region3: #{yolov5_forward.8} parent=0 // loop_header
    %s14 = sphi 0, %s18
    %p15 = scmp.ge.s32.totalorder %s14, 4
    %s24 = sphi 0, %s26
    %s27 = sphi 0, %s24
    %s28 = sphi 0, %s27
    %s44 = sphi 0, %s28
    %s48 = sphi 0, %s48
    %s50 = sphi 0, %s48
    %s51 = sphi 0, %s50
    %s65 = sphi 0, %s51
    %s69 = sphi 0, %s69
    %s71 = sphi 0, %s69
    %s72 = sphi 0, %s71
    %s86 = sphi 0, %s72
    %s90 = sphi 0, %s90
    %s92 = sphi 0, %s90
    %s93 = sphi 0, %s92
    %s107 = sphi 0, %s93
    %s111 = sphi 0, %s111
    %s113 = sphi 0, %s111
    %s114 = sphi 0, %s113
    %s128 = sphi 0, %s114
    %s132 = sphi 0, %s132
    %s134 = sphi 0, %s132
    %s135 = sphi 0, %s134
    %s149 = sphi 0, %s135
    %s153 = sphi 0, %s153
    %s155 = sphi 0, %s153
    %s156 = sphi 0, %s155
    %s170 = sphi 0, %s156
    %s174 = sphi 0, %s174
    %s176 = sphi 0, %s174
    %s177 = sphi 0, %s176
    %s191 = sphi 0, %s177
    %s197 = sphi 0, %s199
    %s200 = sphi 0, %s197
    %s201 = sphi 0, %s200
    %s217 = sphi 0, %s201
  $region4: #{yolov5_forward.8} parent=0 // loop_header_branch
    %17 = sbr.rel (%p15) target = $region8
  $region5: #{yolov5_forward.8} parent=0 // loop_body
    %s19 = ssub.s32 %s14, 1
    %s20 = ssub.s32 %s14, 2
    %s21 = sadd.s32 %s14, 1
    %s22 = ssub.s32 %s14, %s21
    %p23 = scmp.eq.s32.totalorder %s22, 0
    %s25 = sadd.s32 %s24, 1
    %s26 = scalar_select %p23, %s24, %s25
    %p29 = pneg %p23
    %p30 = scmp.eq.s32.totalorder %s14, 1
    %p31 = por %p29, %p30
    %p32 = scmp.ne.s32.totalorder %s24, %s27
    %p33 = scmp.eq.s32.totalorder %s14, 0
    %p34 = por %p32, %p33
    %p35 = scmp.ne.s32.totalorder %s24, %s27
    %p36 = scmp.eq.s32.totalorder %s19, 1
    %p37 = por %p35, %p36
    %p38 = scmp.ne.s32.totalorder %s27, %s28
    %p39 = scmp.eq.s32.totalorder %s19, 0
    %p40 = por %p38, %p39
    %p41 = scmp.ne.s32.totalorder %s27, %s28
    %p42 = scmp.eq.s32.totalorder %s20, 1
    %p43 = por %p41, %p42
    %p45 = scmp.ne.s32.totalorder %s28, %s44
    %p46 = scmp.eq.s32.totalorder %s20, 0
    %p47 = por %p45, %p46
    %s49 = sadd.s32 %s48, 1
    %p52 = scmp.eq.s32.totalorder %s14, 1
    %p53 = scmp.ne.s32.totalorder %s48, %s50
    %p54 = scmp.eq.s32.totalorder %s14, 0
    %p55 = por %p53, %p54
    %p56 = scmp.ne.s32.totalorder %s48, %s50
    %p57 = scmp.eq.s32.totalorder %s19, 1
    %p58 = por %p56, %p57
    %p59 = scmp.ne.s32.totalorder %s50, %s51
    %p60 = scmp.eq.s32.totalorder %s19, 0
    %p61 = por %p59, %p60
    %p62 = scmp.ne.s32.totalorder %s50, %s51
    %p63 = scmp.eq.s32.totalorder %s20, 1
    %p64 = por %p62, %p63
    %p66 = scmp.ne.s32.totalorder %s51, %s65
    %p67 = scmp.eq.s32.totalorder %s20, 0
    %p68 = por %p66, %p67
    %s70 = sadd.s32 %s69, 1
    %p73 = scmp.eq.s32.totalorder %s14, 1
    %p74 = scmp.ne.s32.totalorder %s69, %s71
    %p75 = scmp.eq.s32.totalorder %s14, 0
    %p76 = por %p74, %p75
    %p77 = scmp.ne.s32.totalorder %s69, %s71
    %p78 = scmp.eq.s32.totalorder %s19, 1
    %p79 = por %p77, %p78
    %p80 = scmp.ne.s32.totalorder %s71, %s72
    %p81 = scmp.eq.s32.totalorder %s19, 0
    %p82 = por %p80, %p81
    %p83 = scmp.ne.s32.totalorder %s71, %s72
    %p84 = scmp.eq.s32.totalorder %s20, 1
    %p85 = por %p83, %p84
    %p87 = scmp.ne.s32.totalorder %s72, %s86
    %p88 = scmp.eq.s32.totalorder %s20, 0
    %p89 = por %p87, %p88
    %s91 = sadd.s32 %s90, 1
    %p94 = scmp.eq.s32.totalorder %s14, 1
    %p95 = scmp.ne.s32.totalorder %s90, %s92
    %p96 = scmp.eq.s32.totalorder %s14, 0
    %p97 = por %p95, %p96
    %p98 = scmp.ne.s32.totalorder %s90, %s92
    %p99 = scmp.eq.s32.totalorder %s19, 1
    %p100 = por %p98, %p99
    %p101 = scmp.ne.s32.totalorder %s92, %s93
    %p102 = scmp.eq.s32.totalorder %s19, 0
    %p103 = por %p101, %p102
    %p104 = scmp.ne.s32.totalorder %s92, %s93
    %p105 = scmp.eq.s32.totalorder %s20, 1
    %p106 = por %p104, %p105
    %p108 = scmp.ne.s32.totalorder %s93, %s107
    %p109 = scmp.eq.s32.totalorder %s20, 0
    %p110 = por %p108, %p109
    %s112 = sadd.s32 %s111, 1
    %p115 = scmp.eq.s32.totalorder %s14, 1
    %p116 = scmp.ne.s32.totalorder %s111, %s113
    %p117 = scmp.eq.s32.totalorder %s14, 0
    %p118 = por %p116, %p117
    %p119 = scmp.ne.s32.totalorder %s111, %s113
    %p120 = scmp.eq.s32.totalorder %s19, 1
    %p121 = por %p119, %p120
    %p122 = scmp.ne.s32.totalorder %s113, %s114
    %p123 = scmp.eq.s32.totalorder %s19, 0
    %p124 = por %p122, %p123
    %p125 = scmp.ne.s32.totalorder %s113, %s114
    %p126 = scmp.eq.s32.totalorder %s20, 1
    %p127 = por %p125, %p126
    %p129 = scmp.ne.s32.totalorder %s114, %s128
    %p130 = scmp.eq.s32.totalorder %s20, 0
    %p131 = por %p129, %p130
    %s133 = sadd.s32 %s132, 1
    %p136 = scmp.eq.s32.totalorder %s14, 1
    %p137 = scmp.ne.s32.totalorder %s132, %s134
    %p138 = scmp.eq.s32.totalorder %s14, 0
    %p139 = por %p137, %p138
    %p140 = scmp.ne.s32.totalorder %s132, %s134
    %p141 = scmp.eq.s32.totalorder %s19, 1
    %p142 = por %p140, %p141
    %p143 = scmp.ne.s32.totalorder %s134, %s135
    %p144 = scmp.eq.s32.totalorder %s19, 0
    %p145 = por %p143, %p144
    %p146 = scmp.ne.s32.totalorder %s134, %s135
    %p147 = scmp.eq.s32.totalorder %s20, 1
    %p148 = por %p146, %p147
    %p150 = scmp.ne.s32.totalorder %s135, %s149
    %p151 = scmp.eq.s32.totalorder %s20, 0
    %p152 = por %p150, %p151
    %s154 = sadd.s32 %s153, 1
    %p157 = scmp.eq.s32.totalorder %s14, 1
    %p158 = scmp.ne.s32.totalorder %s153, %s155
    %p159 = scmp.eq.s32.totalorder %s14, 0
    %p160 = por %p158, %p159
    %p161 = scmp.ne.s32.totalorder %s153, %s155
    %p162 = scmp.eq.s32.totalorder %s19, 1
    %p163 = por %p161, %p162
    %p164 = scmp.ne.s32.totalorder %s155, %s156
    %p165 = scmp.eq.s32.totalorder %s19, 0
    %p166 = por %p164, %p165
    %p167 = scmp.ne.s32.totalorder %s155, %s156
    %p168 = scmp.eq.s32.totalorder %s20, 1
    %p169 = por %p167, %p168
    %p171 = scmp.ne.s32.totalorder %s156, %s170
    %p172 = scmp.eq.s32.totalorder %s20, 0
    %p173 = por %p171, %p172
    %s175 = sadd.s32 %s174, 1
    %p178 = scmp.eq.s32.totalorder %s14, 1
    %p179 = scmp.ne.s32.totalorder %s174, %s176
    %p180 = scmp.eq.s32.totalorder %s14, 0
    %p181 = por %p179, %p180
    %p182 = scmp.ne.s32.totalorder %s174, %s176
    %p183 = scmp.eq.s32.totalorder %s19, 1
    %p184 = por %p182, %p183
    %p185 = scmp.ne.s32.totalorder %s176, %s177
    %p186 = scmp.eq.s32.totalorder %s19, 0
    %p187 = por %p185, %p186
    %p188 = scmp.ne.s32.totalorder %s176, %s177
    %p189 = scmp.eq.s32.totalorder %s20, 1
    %p190 = por %p188, %p189
    %p192 = scmp.ne.s32.totalorder %s177, %s191
    %p193 = scmp.eq.s32.totalorder %s20, 0
    %p194 = por %p192, %p193
    %s195 = ssub.s32 %s14, %s21
    %p196 = scmp.eq.s32.totalorder %s195, 0
    %s198 = sadd.s32 %s197, 1
    %s199 = scalar_select %p196, %s197, %s198
    %p202 = pneg %p196
    %p203 = scmp.eq.s32.totalorder %s14, 1
    %p204 = por %p202, %p203
    %p205 = scmp.ne.s32.totalorder %s197, %s200
    %p206 = scmp.eq.s32.totalorder %s14, 0
    %p207 = por %p205, %p206
    %p208 = scmp.ne.s32.totalorder %s197, %s200
    %p209 = scmp.eq.s32.totalorder %s19, 1
    %p210 = por %p208, %p209
    %p211 = scmp.ne.s32.totalorder %s200, %s201
    %p212 = scmp.eq.s32.totalorder %s19, 0
    %p213 = por %p211, %p212
    %p214 = scmp.ne.s32.totalorder %s200, %s201
    %p215 = scmp.eq.s32.totalorder %s20, 1
    %p216 = por %p214, %p215
    %p218 = scmp.ne.s32.totalorder %s201, %s217
    %p219 = scmp.eq.s32.totalorder %s20, 0
    %p220 = por %p218, %p219
    %p221 = scmp.le.s32.totalorder 1, %s14
    %p222 = scmp.lt.s32.totalorder %s14, 3
    %p223 = pnand %p221, %p222
    %p224 = pneg %p223
    // Predicated region
    $region9: #{yolov5_forward.8} parent=5 // pred_check
      _
    $region10: #{yolov5_forward.8} parent=5 // pred_check_branch
      %226 = sbr.rel (%p223) target = $region12
    $region11: #{yolov5_forward.8} parent=5 // pred_region
      %s227 = ssub.s32 %s14, 1
      // Predicated region
      $region13: #{yolov5_forward.8} parent=11 // pred_check
        %p228 = pneg %p61
      $region14: #{yolov5_forward.8} parent=11 // pred_check_branch
        %230 = sbr.rel (%p228) target = $region16
      $region15: #{yolov5_forward.8} parent=11 // pred_region
        _
      $region16: #{yolov5_forward.8} parent=11 // pred_fallthru
        _
      // Predicated region
      $region17: #{yolov5_forward.8} parent=11 // pred_check
        %p231 = pneg %p82
      $region18: #{yolov5_forward.8} parent=11 // pred_check_branch
        %233 = sbr.rel (%p231) target = $region20
      $region19: #{yolov5_forward.8} parent=11 // pred_region
        _
      $region20: #{yolov5_forward.8} parent=11 // pred_fallthru
        _
      // Predicated region
      $region21: #{yolov5_forward.8} parent=11 // pred_check
        %p234 = pneg %p103
      $region22: #{yolov5_forward.8} parent=11 // pred_check_branch
        %236 = sbr.rel (%p234) target = $region24
      $region23: #{yolov5_forward.8} parent=11 // pred_region
        _
      $region24: #{yolov5_forward.8} parent=11 // pred_fallthru
        _
      // Predicated region
      $region25: #{yolov5_forward.8} parent=11 // pred_check
        %p237 = pneg %p124
      $region26: #{yolov5_forward.8} parent=11 // pred_check_branch
        %239 = sbr.rel (%p237) target = $region28
      $region27: #{yolov5_forward.8} parent=11 // pred_region
        _
      $region28: #{yolov5_forward.8} parent=11 // pred_fallthru
        _
      // Predicated region
      $region29: #{yolov5_forward.8} parent=11 // pred_check
        %p240 = pneg %p145
      $region30: #{yolov5_forward.8} parent=11 // pred_check_branch
        %242 = sbr.rel (%p240) target = $region32
      $region31: #{yolov5_forward.8} parent=11 // pred_region
        _
      $region32: #{yolov5_forward.8} parent=11 // pred_fallthru
        _
      // Predicated region
      $region33: #{yolov5_forward.8} parent=11 // pred_check
        %p243 = pneg %p166
      $region34: #{yolov5_forward.8} parent=11 // pred_check_branch
        %245 = sbr.rel (%p243) target = $region36
      $region35: #{yolov5_forward.8} parent=11 // pred_region
        _
      $region36: #{yolov5_forward.8} parent=11 // pred_fallthru
        _
      // Predicated region
      $region37: #{yolov5_forward.8} parent=11 // pred_check
        %p246 = pneg %p187
      $region38: #{yolov5_forward.8} parent=11 // pred_check_branch
        %248 = sbr.rel (%p246) target = $region40
      $region39: #{yolov5_forward.8} parent=11 // pred_region
        _
      $region40: #{yolov5_forward.8} parent=11 // pred_fallthru
        _
    $region12: #{yolov5_forward.8} parent=5 // pred_fallthru
      _
    %p249 = scmp.lt.s32.totalorder %s14, 2
    // Predicated region
    $region41: #{yolov5_forward.8} parent=5 // pred_check
      %p250 = pneg %p249
    $region42: #{yolov5_forward.8} parent=5 // pred_check_branch
      %252 = sbr.rel (%p250) target = $region44
    $region43: #{yolov5_forward.8} parent=5 // pred_region
      // Predicated region
      $region45: #{yolov5_forward.8} parent=43 // pred_check
        %p253 = pneg %p34
      $region46: #{yolov5_forward.8} parent=43 // pred_check_branch
        %255 = sbr.rel (%p253) target = $region48
      $region47: #{yolov5_forward.8} parent=43 // pred_region
        %p256 = scmp.lt.s32.totalorder %s14, 1
        %s257 = scalar_select %p256, %s14, 1
        %s258 = smul.addr %s257, 2
        %s259 = smul.addr %s258, 4
        %s260 = scalar_lea.vmem %s0, %s259
      $region48: #{yolov5_forward.8} parent=43 // pred_fallthru
        _
    $region44: #{yolov5_forward.8} parent=5 // pred_fallthru
      _
    %p261 = scmp.le.s32.totalorder 1, %s14
    %p262 = scmp.lt.s32.totalorder %s14, 3
    %p263 = pnand %p261, %p262
    %p264 = pneg %p263
    // Predicated region
    $region49: #{yolov5_forward.8} parent=5 // pred_check
      _
    $region50: #{yolov5_forward.8} parent=5 // pred_check_branch
      %266 = sbr.rel (%p263) target = $region52
    $region51: #{yolov5_forward.8} parent=5 // pred_region
      %s267 = ssub.s32 %s14, 1
      %p268 = scmp.lt.s32.totalorder %s19, 1
      %s269 = scalar_select %p268, %s19, 1
      %s270 = smul.addr %s269, 2
      %s271 = smul.addr %s270, 4
      %s272 = scalar_lea.vmem %s0, %s271
      %p273 = pneg %p40
      %p274 = pneg %p37
      %p275 = pneg %p61
      %p276 = pneg %p58
      %p277 = pneg %p82
      %p278 = pneg %p79
      %p279 = pneg %p103
      %p280 = pneg %p100
      %p281 = pneg %p124
      %p282 = pneg %p121
      %p283 = pneg %p145
      %p284 = pneg %p142
      %p285 = pneg %p166
      %p286 = pneg %p163
      %p287 = pneg %p187
      %p288 = pneg %p184
      %p289 = pneg %p213
      %p290 = pneg %p210
      %p291 = scmp.lt.s32.totalorder %s19, 1
      %s292 = scalar_select %p291, %s19, 1
      %s293 = smul.addr %s292, 2
      %s294 = smul.addr %s293, 4
      %s295 = scalar_lea.vmem %s8, %s294
      %p296 = scmp.lt.s32.totalorder %s19, 1
      %s297 = scalar_select %p296, %s19, 1
      %s298 = smul.addr %s297, 2
      %s299 = smul.addr %s298, 4
      %s300 = scalar_lea.vmem %s0, %s299
      %p301 = scmp.lt.s32.totalorder %s19, 1
      %s302 = scalar_select %p301, %s19, 1
      %s303 = smul.addr %s302, 2
      %s304 = smul.addr %s303, 4
      %s305 = scalar_lea.vmem %s8, %s304
      %v307 = vld [vmem:[%s300] sm:$0xf]
      %v308 = vld [vmem:[%s300 + $0x4] sm:$0xf]
      %v309 = vld [vmem:[%s1] sm:$0xf]
      %v310 = vld [vmem:[%s1 + $0x4] sm:$0xf]
      %v311 = vld [vmem:[%s1 + $0x8] sm:$0xf]
      %v312 = vld [vmem:[%s1 + $0xc] sm:$0xf]
      %v313 = vld [vmem:[%s2] sm:$0x1]
      %v315 = vlaneseq
      %v316 = vshrl.u32 %v315, 7
      %v317 = vsub.s32 0, %v316
      %v318 = vrot.slane %v313, %v317
      %v322 = vunpack.c.l.b16 %v307
      %v323 = vunpack.c.l.b16 %v308
      %v324 = vpack.c.b16 %v323, %v322
      %v329 = vunpack.c.l.b16 %v309
      %v330 = vunpack.c.l.b16 %v310
      %v331 = vunpack.c.l.b16 %v311
      %v332 = vunpack.c.l.b16 %v312
      %v333 = vpack.c.b16 %v330, %v329
      %v334 = vpack.c.b16 %v332, %v331
      %vm337 = vcmask 261120
      %v339 = vsel %vm337, %v324, 0
      %341 = vmatprep.subr.bf16.mxu0 0
      %342 = vmatpush1.bf16.msra.mxu0 %v333
      %343 = vmatprep.subr.bf16.mxu0 0
      %344 = vmatpush1.bf16.msra.mxu0 %v334
      %345 = vmatprep.subr.bf16.mxu0 0
      %346 = vmatpush1.bf16.msra.mxu0 0
      %347 = vmatprep.subr.bf16.mxu0 0
      %348 = vmatpush1.bf16.msra.mxu0 0
      %349 = vmatprep.subr.bf16.mxu0 0
      %350 = vmatpush1.bf16.msra.mxu0 0
      %351 = vmatprep.subr.bf16.mxu0 0
      %352 = vmatpush1.bf16.msra.mxu0 0
      %353 = vmatprep.subr.bf16.mxu0 0
      %354 = vmatpush1.bf16.msra.mxu0 0
      %355 = vmatprep.subr.bf16.mxu0 0
      %356 = vmatpush1.bf16.msra.mxu0 0
      %357 = vmatprep.subr.bf16.mxu0 0
      %358 = vmatpush1.bf16.msra.mxu0 0
      %359 = vmatprep.subr.bf16.mxu0 0
      %360 = vmatpush1.bf16.msra.mxu0 0
      %361 = vmatprep.subr.bf16.mxu0 0
      %362 = vmatpush1.bf16.msra.mxu0 0
      %363 = vmatprep.subr.bf16.mxu0 0
      %364 = vmatpush1.bf16.msra.mxu0 0
      %365 = vmatprep.subr.bf16.mxu0 0
      %366 = vmatpush1.bf16.msra.mxu0 0
      %367 = vmatprep.subr.bf16.mxu0 0
      %368 = vmatpush1.bf16.msra.mxu0 0
      %369 = vmatprep.subr.bf16.mxu0 0
      %370 = vmatpush1.bf16.msra.mxu0 0
      %371 = vmatprep.subr.bf16.mxu0 0
      %372 = vmatpush1.bf16.msra.mxu0 0
      %373 = vmatprep.mubr.bf16.mxu0 0
      %374 = vmatmul.mubr.bf16.gmra.mrb[0].mxu0 %v339
      %v375 = vpop.f32.mrb[0].mxu0
      %v376 = vadd.f32 %v318, %v375
      %v377 = vpop.f32.mrb[0].mxu0
      %v378 = vpop.f32.mrb[0].mxu0
      %v379 = vadd.f32 %v318, %v378
      %v380 = vpop.f32.mrb[0].mxu0
      %381 = vdwg.mxu0
      %v382 = vxor.u32 %v376, 2147483648
      %v383 = vxor.u32 %v379, 2147483648
      %v384 = vmul.f32 %v382, 1.442695
      %v385 = vpow.pop %v384
      %v386 = vmul.f32 %v383, 1.442695
      %v387 = vpow.pop %v386
      %v388 = vadd.f32 %v385, 1.0
      %v389 = vadd.f32 %v387, 1.0
      %v390 = vrcp.pop %v388
      %v391 = vmul.f32 1.0, %v390
      %v392 = vrcp.pop %v389
      %v393 = vmul.f32 1.0, %v392
      %v394 = vmul.f32 %v376, %v391
      %v395 = vmul.f32 %v379, %v393
      %v396 = vlaneseq
      %v397 = vshrl.u32 %v396, 7
      %v398 = vadd.s32 %v397, 8
      %v399 = vcvt.s32.f32 %v397
      %v400 = vcvt.s32.f32 %v398
      %v401 = vrcp.pop 4.0
      %v402 = vmul.f32 %v399, %v401
      %v403 = vmul.f32 %v400, %v401
      %v404 = vfloor.f32 %v402
      %v405 = vfloor.f32 %v403
      %v406 = vmul.f32 %v404, 4.0
      %v407 = vmul.f32 %v405, 4.0
      %v408 = vsub.f32 %v399, %v406
      %v409 = vsub.f32 %v400, %v407
      %vm410 = vcmask 130048
      %411 = vst.msk [vmem:[#allocation2] sm:$0xff] %vm410, 0.0
      %412 = vst.msk [vmem:[#allocation2 + $0x8] sm:$0xff] %vm410, 0.0
      %413 = vst.msk [vmem:[#allocation2 + $0x10] sm:$0xff] %vm410, 0.0
      %414 = vst.msk [vmem:[#allocation2 + $0x18] sm:$0xff] %vm410, 0.0
      %415 = vst.msk [vmem:[#allocation2 + $0x8] sm:$0xff] %vm410, %v394
      %416 = vst.msk [vmem:[#allocation2 + $0x10] sm:$0xff] %vm410, %v395
      %v417 = vld [vmem:[#allocation2] sm:$0xff]
      %v418 = vld [vmem:[#allocation2 + $0x8] sm:$0xff]
      %v419 = vadd.f32 %v404, -2.0
      %v420 = vadd.f32 %v405, -2.0
      %vm421 = vcmp.ge.f32.partialorder %v419, 0.0
      %vm422 = vcmp.ge.f32.partialorder %v420, 0.0
      %vm423 = vcmp.lt.f32.partialorder %v419, 4.0
      %vm424 = vcmp.lt.f32.partialorder %v420, 4.0
      %vm425 = vmand %vm421, %vm423
      %vm426 = vmand %vm422, %vm424
      %v427 = vsel %vm425, 1, 0
      %v428 = vsel %vm426, 1, 0
      %vm429 = vcmp.eq.s32.totalorder %v427, 1
      %vm430 = vcmp.eq.s32.totalorder %v428, 1
      %v431 = vsel %vm429, %v417, -inf
      %v432 = vsel %vm430, %v418, -inf
      %v433 = vmax.f32 %v394, %v431
      %v434 = vmax.f32 %v395, %v432
      %v435 = vld [vmem:[#allocation2 + $0x4] sm:$0xff]
      %v436 = vld [vmem:[#allocation2 + $0xc] sm:$0xff]
      %v437 = vadd.f32 %v404, -1.0
      %v438 = vadd.f32 %v405, -1.0
      %vm439 = vcmp.ge.f32.partialorder %v437, 0.0
      %vm440 = vcmp.ge.f32.partialorder %v438, 0.0
      %vm441 = vcmp.lt.f32.partialorder %v437, 4.0
      %vm442 = vcmp.lt.f32.partialorder %v438, 4.0
      %vm443 = vmand %vm439, %vm441
      %vm444 = vmand %vm440, %vm442
      %v445 = vsel %vm443, 1, 0
      %v446 = vsel %vm444, 1, 0
      %vm447 = vcmp.eq.s32.totalorder %v445, 1
      %vm448 = vcmp.eq.s32.totalorder %v446, 1
      %v449 = vsel %vm447, %v435, -inf
      %v450 = vsel %vm448, %v436, -inf
      %v451 = vmax.f32 %v433, %v449
      %v452 = vmax.f32 %v434, %v450
      %v453 = vld [vmem:[#allocation2 + $0x14] sm:$0xff]
      %v454 = vadd.f32 %v404, 1.0
      %v455 = vadd.f32 %v405, 1.0
      %vm456 = vcmp.ge.f32.partialorder %v454, 0.0
      %vm457 = vcmp.ge.f32.partialorder %v455, 0.0
      %vm458 = vcmp.lt.f32.partialorder %v454, 4.0
      %vm459 = vcmp.lt.f32.partialorder %v455, 4.0
      %vm460 = vmand %vm456, %vm458
      %vm461 = vmand %vm457, %vm459
      %v462 = vsel %vm460, 1, 0
      %v463 = vsel %vm461, 1, 0
      %vm464 = vcmp.eq.s32.totalorder %v462, 1
      %vm465 = vcmp.eq.s32.totalorder %v463, 1
      %v466 = vsel %vm464, %v436, -inf
      %v467 = vsel %vm465, %v453, -inf
      %v468 = vmax.f32 %v451, %v466
      %v469 = vmax.f32 %v452, %v467
      %v470 = vld [vmem:[#allocation2 + $0x10] sm:$0xff]
      %v471 = vld [vmem:[#allocation2 + $0x18] sm:$0xff]
      %v472 = vadd.f32 %v404, 2.0
      %v473 = vadd.f32 %v405, 2.0
      %vm474 = vcmp.ge.f32.partialorder %v472, 0.0
      %vm475 = vcmp.ge.f32.partialorder %v473, 0.0
      %vm476 = vcmp.lt.f32.partialorder %v472, 4.0
      %vm477 = vcmp.lt.f32.partialorder %v473, 4.0
      %vm478 = vmand %vm474, %vm476
      %vm479 = vmand %vm475, %vm477
      %v480 = vsel %vm478, 1, 0
      %v481 = vsel %vm479, 1, 0
      %vm482 = vcmp.eq.s32.totalorder %v480, 1
      %vm483 = vcmp.eq.s32.totalorder %v481, 1
      %v484 = vsel %vm482, %v470, -inf
      %v485 = vsel %vm483, %v471, -inf
      %v486 = vmax.f32 %v468, %v484
      %v487 = vmax.f32 %v469, %v485
      %488 = vst.msk [vmem:[#allocation2 + $0x8] sm:$0xff] %vm410, %v486
      %489 = vst.msk [vmem:[#allocation2 + $0x10] sm:$0xff] %vm410, %v487
      %v490 = vld [vmem:[#allocation2 + $0x6] sm:$0xff]
      %v491 = vld [vmem:[#allocation2 + $0xe] sm:$0xff]
      %v492 = vadd.f32 %v408, -2.0
      %v493 = vadd.f32 %v409, -2.0
      %vm494 = vcmp.ge.f32.partialorder %v492, 0.0
      %vm495 = vcmp.ge.f32.partialorder %v493, 0.0
      %vm496 = vcmp.lt.f32.partialorder %v492, 4.0
      %vm497 = vcmp.lt.f32.partialorder %v493, 4.0
      %vm498 = vmand %vm494, %vm496
      %vm499 = vmand %vm495, %vm497
      %v500 = vsel %vm498, 1, 0
      %v501 = vsel %vm499, 1, 0
      %vm502 = vcmp.eq.s32.totalorder %v500, 1
      %vm503 = vcmp.eq.s32.totalorder %v501, 1
      %v504 = vsel %vm502, %v490, -inf
      %v505 = vsel %vm503, %v491, -inf
      %v506 = vmax.f32 %v486, %v504
      %v507 = vmax.f32 %v487, %v505
      %v508 = vld [vmem:[#allocation2 + $0x7] sm:$0xff]
      %v509 = vld [vmem:[#allocation2 + $0xf] sm:$0xff]
      %v510 = vadd.f32 %v408, -1.0
      %v511 = vadd.f32 %v409, -1.0
      %vm512 = vcmp.ge.f32.partialorder %v510, 0.0
      %vm513 = vcmp.ge.f32.partialorder %v511, 0.0
      %vm514 = vcmp.lt.f32.partialorder %v510, 4.0
      %vm515 = vcmp.lt.f32.partialorder %v511, 4.0
      %vm516 = vmand %vm512, %vm514
      %vm517 = vmand %vm513, %vm515
      %v518 = vsel %vm516, 1, 0
      %v519 = vsel %vm517, 1, 0
      %vm520 = vcmp.eq.s32.totalorder %v518, 1
      %vm521 = vcmp.eq.s32.totalorder %v519, 1
      %v522 = vsel %vm520, %v508, -inf
      %v523 = vsel %vm521, %v509, -inf
      %v524 = vmax.f32 %v506, %v522
      %v525 = vmax.f32 %v507, %v523
      %v526 = vld [vmem:[#allocation2 + $0x9] sm:$0xff]
      %v527 = vld [vmem:[#allocation2 + $0x11] sm:$0xff]
      %v528 = vadd.f32 %v408, 1.0
      %v529 = vadd.f32 %v409, 1.0
      %vm530 = vcmp.ge.f32.partialorder %v528, 0.0
      %vm531 = vcmp.ge.f32.partialorder %v529, 0.0
      %vm532 = vcmp.lt.f32.partialorder %v528, 4.0
      %vm533 = vcmp.lt.f32.partialorder %v529, 4.0
      %vm534 = vmand %vm530, %vm532
      %vm535 = vmand %vm531, %vm533
      %v536 = vsel %vm534, 1, 0
      %v537 = vsel %vm535, 1, 0
      %vm538 = vcmp.eq.s32.totalorder %v536, 1
      %vm539 = vcmp.eq.s32.totalorder %v537, 1
      %v540 = vsel %vm538, %v526, -inf
      %v541 = vsel %vm539, %v527, -inf
      %v542 = vmax.f32 %v524, %v540
      %v543 = vmax.f32 %v525, %v541
      %v544 = vld [vmem:[#allocation2 + $0xa] sm:$0xff]
      %v545 = vld [vmem:[#allocation2 + $0x12] sm:$0xff]
      %v546 = vadd.f32 %v408, 2.0
      %v547 = vadd.f32 %v409, 2.0
      %vm548 = vcmp.ge.f32.partialorder %v546, 0.0
      %vm549 = vcmp.ge.f32.partialorder %v547, 0.0
      %vm550 = vcmp.lt.f32.partialorder %v546, 4.0
      %vm551 = vcmp.lt.f32.partialorder %v547, 4.0
      %vm552 = vmand %vm548, %vm550
      %vm553 = vmand %vm549, %vm551
      %v554 = vsel %vm552, 1, 0
      %v555 = vsel %vm553, 1, 0
      %vm556 = vcmp.eq.s32.totalorder %v554, 1
      %vm557 = vcmp.eq.s32.totalorder %v555, 1
      %v558 = vsel %vm556, %v544, -inf
      %v559 = vsel %vm557, %v545, -inf
      %v560 = vmax.f32 %v542, %v558
      %v561 = vmax.f32 %v543, %v559
      %562 = vst.msk [vmem:[#allocation2 + $0x8] sm:$0xff] %vm410, %v560
      %563 = vst.msk [vmem:[#allocation2 + $0x10] sm:$0xff] %vm410, %v561
      %v564 = vld [vmem:[#allocation2] sm:$0xff]
      %v565 = vld [vmem:[#allocation2 + $0x8] sm:$0xff]
      %v566 = vsel %vm429, %v564, -inf
      %v567 = vsel %vm430, %v565, -inf
      %v568 = vmax.f32 %v560, %v566
      %v569 = vmax.f32 %v561, %v567
      %v570 = vld [vmem:[#allocation2 + $0x4] sm:$0xff]
      %v571 = vld [vmem:[#allocation2 + $0xc] sm:$0xff]
      %v572 = vsel %vm447, %v570, -inf
      %v573 = vsel %vm448, %v571, -inf
      %v574 = vmax.f32 %v568, %v572
      %v575 = vmax.f32 %v569, %v573
      %v576 = vld [vmem:[#allocation2 + $0x14] sm:$0xff]
      %v577 = vsel %vm464, %v571, -inf
      %v578 = vsel %vm465, %v576, -inf
      %v579 = vmax.f32 %v574, %v577
      %v580 = vmax.f32 %v575, %v578
      %v581 = vld [vmem:[#allocation2 + $0x10] sm:$0xff]
      %v582 = vld [vmem:[#allocation2 + $0x18] sm:$0xff]
      %v583 = vsel %vm482, %v581, -inf
      %v584 = vsel %vm483, %v582, -inf
      %v585 = vmax.f32 %v579, %v583
      %v586 = vmax.f32 %v580, %v584
      %587 = vst.msk [vmem:[#allocation2 + $0x8] sm:$0xff] %vm410, %v585
      %588 = vst.msk [vmem:[#allocation2 + $0x10] sm:$0xff] %vm410, %v586
      %v589 = vld [vmem:[#allocation2 + $0x6] sm:$0xff]
      %v590 = vld [vmem:[#allocation2 + $0xe] sm:$0xff]
      %v591 = vsel %vm502, %v589, -inf
      %v592 = vsel %vm503, %v590, -inf
      %v593 = vmax.f32 %v585, %v591
      %v594 = vmax.f32 %v586, %v592
      %v595 = vld [vmem:[#allocation2 + $0x7] sm:$0xff]
      %v596 = vld [vmem:[#allocation2 + $0xf] sm:$0xff]
      %v597 = vsel %vm520, %v595, -inf
      %v598 = vsel %vm521, %v596, -inf
      %v599 = vmax.f32 %v593, %v597
      %v600 = vmax.f32 %v594, %v598
      %v601 = vld [vmem:[#allocation2 + $0x9] sm:$0xff]
      %v602 = vld [vmem:[#allocation2 + $0x11] sm:$0xff]
      %v603 = vsel %vm538, %v601, -inf
      %v604 = vsel %vm539, %v602, -inf
      %v605 = vmax.f32 %v599, %v603
      %v606 = vmax.f32 %v600, %v604
      %v607 = vld [vmem:[#allocation2 + $0xa] sm:$0xff]
      %v608 = vld [vmem:[#allocation2 + $0x12] sm:$0xff]
      %v609 = vsel %vm556, %v607, -inf
      %v610 = vsel %vm557, %v608, -inf
      %v611 = vmax.f32 %v605, %v609
      %v612 = vmax.f32 %v606, %v610
      %613 = vst.msk [vmem:[#allocation2 + $0x8] sm:$0xff] %vm410, %v611
      %614 = vst.msk [vmem:[#allocation2 + $0x10] sm:$0xff] %vm410, %v612
      %v615 = vld [vmem:[#allocation2] sm:$0xff]
      %v616 = vld [vmem:[#allocation2 + $0x8] sm:$0xff]
      %v617 = vsel %vm429, %v615, -inf
      %v618 = vsel %vm430, %v616, -inf
      %v619 = vmax.f32 %v611, %v617
      %v620 = vmax.f32 %v612, %v618
      %v621 = vld [vmem:[#allocation2 + $0x4] sm:$0xff]
      %v622 = vld [vmem:[#allocation2 + $0xc] sm:$0xff]
      %v623 = vsel %vm447, %v621, -inf
      %v624 = vsel %vm448, %v622, -inf
      %v625 = vmax.f32 %v619, %v623
      %v626 = vmax.f32 %v620, %v624
      %v627 = vld [vmem:[#allocation2 + $0x14] sm:$0xff]
      %v628 = vsel %vm464, %v622, -inf
      %v629 = vsel %vm465, %v627, -inf
      %v630 = vmax.f32 %v625, %v628
      %v631 = vmax.f32 %v626, %v629
      %v632 = vld [vmem:[#allocation2 + $0x10] sm:$0xff]
      %v633 = vld [vmem:[#allocation2 + $0x18] sm:$0xff]
      %v634 = vsel %vm482, %v632, -inf
      %v635 = vsel %vm483, %v633, -inf
      %v636 = vmax.f32 %v630, %v634
      %v637 = vmax.f32 %v631, %v635
      %638 = vst.msk [vmem:[#allocation2 + $0x8] sm:$0xff] %vm410, %v636
      %639 = vst.msk [vmem:[#allocation2 + $0x10] sm:$0xff] %vm410, %v637
      %v640 = vld [vmem:[#allocation2 + $0x6] sm:$0xff]
      %v641 = vld [vmem:[#allocation2 + $0xe] sm:$0xff]
      %v642 = vsel %vm502, %v640, -inf
      %v643 = vsel %vm503, %v641, -inf
      %v644 = vmax.f32 %v636, %v642
      %v645 = vmax.f32 %v637, %v643
      %v646 = vld [vmem:[#allocation2 + $0x7] sm:$0xff]
      %v647 = vld [vmem:[#allocation2 + $0xf] sm:$0xff]
      %v648 = vsel %vm520, %v646, -inf
      %v649 = vsel %vm521, %v647, -inf
      %v650 = vmax.f32 %v644, %v648
      %v651 = vmax.f32 %v645, %v649
      %v652 = vld [vmem:[#allocation2 + $0x9] sm:$0xff]
      %v653 = vld [vmem:[#allocation2 + $0x11] sm:$0xff]
      %v654 = vsel %vm538, %v652, -inf
      %v655 = vsel %vm539, %v653, -inf
      %v656 = vmax.f32 %v650, %v654
      %v657 = vmax.f32 %v651, %v655
      %v658 = vld [vmem:[#allocation2 + $0xa] sm:$0xff]
      %v659 = vld [vmem:[#allocation2 + $0x12] sm:$0xff]
      %v660 = vsel %vm556, %v658, -inf
      %v661 = vsel %vm557, %v659, -inf
      %v662 = vmax.f32 %v656, %v660
      %v663 = vmax.f32 %v657, %v661
      %v664 = vpack.c.bf16 %v395, %v394
      %v665 = vld [vmem:[%s3] sm:$0xf]
      %v666 = vld [vmem:[%s3 + $0x4] sm:$0xf]
      %v667 = vpack.c.bf16 %v561, %v560
      %v668 = vld [vmem:[%s4] sm:$0xf]
      %v669 = vld [vmem:[%s4 + $0x4] sm:$0xf]
      %v672 = vunpack.c.l.b16 %v668
      %v673 = vunpack.c.l.b16 %v669
      %v674 = vpack.c.b16 %v673, %v672
      %v677 = vsel %vm410, %v667, 0
      %679 = vmatprep.subr.bf16.mxu0 0
      %680 = vmatpush1.bf16.msra.mxu0 %v674
      %681 = vmatprep.subr.bf16.mxu0 0
      %682 = vmatpush1.bf16.msra.mxu0 0
      %683 = vmatprep.subr.bf16.mxu0 0
      %684 = vmatpush1.bf16.msra.mxu0 0
      %685 = vmatprep.subr.bf16.mxu0 0
      %686 = vmatpush1.bf16.msra.mxu0 0
      %687 = vmatprep.subr.bf16.mxu0 0
      %688 = vmatpush1.bf16.msra.mxu0 0
      %689 = vmatprep.subr.bf16.mxu0 0
      %690 = vmatpush1.bf16.msra.mxu0 0
      %691 = vmatprep.subr.bf16.mxu0 0
      %692 = vmatpush1.bf16.msra.mxu0 0
      %693 = vmatprep.subr.bf16.mxu0 0
      %694 = vmatpush1.bf16.msra.mxu0 0
      %695 = vmatprep.subr.bf16.mxu0 0
      %696 = vmatpush1.bf16.msra.mxu0 0
      %697 = vmatprep.subr.bf16.mxu0 0
      %698 = vmatpush1.bf16.msra.mxu0 0
      %699 = vmatprep.subr.bf16.mxu0 0
      %700 = vmatpush1.bf16.msra.mxu0 0
      %701 = vmatprep.subr.bf16.mxu0 0
      %702 = vmatpush1.bf16.msra.mxu0 0
      %703 = vmatprep.subr.bf16.mxu0 0
      %704 = vmatpush1.bf16.msra.mxu0 0
      %705 = vmatprep.subr.bf16.mxu0 0
      %706 = vmatpush1.bf16.msra.mxu0 0
      %707 = vmatprep.subr.bf16.mxu0 0
      %708 = vmatpush1.bf16.msra.mxu0 0
      %709 = vmatprep.subr.bf16.mxu0 0
      %710 = vmatpush1.bf16.msra.mxu0 0
      %711 = vmatprep.mubr.bf16.mxu0 0
      %712 = vmatmul.mubr.bf16.gmra.mrb[0].mxu0 %v677
      %v713 = vpop.f32.mrb[0].mxu0
      %v714 = vadd.f32 0.0, %v713
      %v715 = vpop.f32.mrb[0].mxu0
      %v716 = vpop.f32.mrb[0].mxu0
      %v717 = vadd.f32 0.0, %v716
      %v718 = vpop.f32.mrb[0].mxu0
      %719 = vdwg.mxu0
      %v722 = vunpack.c.l.b16 %v665
      %v723 = vunpack.c.l.b16 %v666
      %v724 = vpack.c.b16 %v723, %v722
      %v727 = vsel %vm410, %v664, 0
      %729 = vmatprep.subr.bf16.mxu0 0
      %730 = vmatpush1.bf16.msra.mxu0 %v724
      %731 = vmatprep.subr.bf16.mxu0 0
      %732 = vmatpush1.bf16.msra.mxu0 0
      %733 = vmatprep.subr.bf16.mxu0 0
      %734 = vmatpush1.bf16.msra.mxu0 0
      %735 = vmatprep.subr.bf16.mxu0 0
      %736 = vmatpush1.bf16.msra.mxu0 0
      %737 = vmatprep.subr.bf16.mxu0 0
      %738 = vmatpush1.bf16.msra.mxu0 0
      %739 = vmatprep.subr.bf16.mxu0 0
      %740 = vmatpush1.bf16.msra.mxu0 0
      %741 = vmatprep.subr.bf16.mxu0 0
      %742 = vmatpush1.bf16.msra.mxu0 0
      %743 = vmatprep.subr.bf16.mxu0 0
      %744 = vmatpush1.bf16.msra.mxu0 0
      %745 = vmatprep.subr.bf16.mxu0 0
      %746 = vmatpush1.bf16.msra.mxu0 0
      %747 = vmatprep.subr.bf16.mxu0 0
      %748 = vmatpush1.bf16.msra.mxu0 0
      %749 = vmatprep.subr.bf16.mxu0 0
      %750 = vmatpush1.bf16.msra.mxu0 0
      %751 = vmatprep.subr.bf16.mxu0 0
      %752 = vmatpush1.bf16.msra.mxu0 0
      %753 = vmatprep.subr.bf16.mxu0 0
      %754 = vmatpush1.bf16.msra.mxu0 0
      %755 = vmatprep.subr.bf16.mxu0 0
      %756 = vmatpush1.bf16.msra.mxu0 0
      %757 = vmatprep.subr.bf16.mxu0 0
      %758 = vmatpush1.bf16.msra.mxu0 0
      %759 = vmatprep.subr.bf16.mxu0 0
      %760 = vmatpush1.bf16.msra.mxu0 0
      %761 = vmatprep.mubr.bf16.mxu0 0
      %762 = vmatmul.mubr.bf16.gmra.mrb[0].mxu0 %v727
      %v763 = vpop.f32.mrb[0].mxu0
      %v764 = vadd.f32 %v714, %v763
      %v765 = vpop.f32.mrb[0].mxu0
      %v766 = vpop.f32.mrb[0].mxu0
      %v767 = vadd.f32 %v717, %v766
      %v768 = vpop.f32.mrb[0].mxu0
      %769 = vdwg.mxu0
      %v770 = vpack.c.bf16 %v612, %v611
      %v771 = vld [vmem:[%s5] sm:$0xf]
      %v772 = vld [vmem:[%s5 + $0x4] sm:$0xf]
      %v775 = vunpack.c.l.b16 %v771
      %v776 = vunpack.c.l.b16 %v772
      %v777 = vpack.c.b16 %v776, %v775
      %v780 = vsel %vm410, %v770, 0
      %782 = vmatprep.subr.bf16.mxu0 0
      %783 = vmatpush1.bf16.msra.mxu0 %v777
      %784 = vmatprep.subr.bf16.mxu0 0
      %785 = vmatpush1.bf16.msra.mxu0 0
      %786 = vmatprep.subr.bf16.mxu0 0
      %787 = vmatpush1.bf16.msra.mxu0 0
      %788 = vmatprep.subr.bf16.mxu0 0
      %789 = vmatpush1.bf16.msra.mxu0 0
      %790 = vmatprep.subr.bf16.mxu0 0
      %791 = vmatpush1.bf16.msra.mxu0 0
      %792 = vmatprep.subr.bf16.mxu0 0
      %793 = vmatpush1.bf16.msra.mxu0 0
      %794 = vmatprep.subr.bf16.mxu0 0
      %795 = vmatpush1.bf16.msra.mxu0 0
      %796 = vmatprep.subr.bf16.mxu0 0
      %797 = vmatpush1.bf16.msra.mxu0 0
      %798 = vmatprep.subr.bf16.mxu0 0
      %799 = vmatpush1.bf16.msra.mxu0 0
      %800 = vmatprep.subr.bf16.mxu0 0
      %801 = vmatpush1.bf16.msra.mxu0 0
      %802 = vmatprep.subr.bf16.mxu0 0
      %803 = vmatpush1.bf16.msra.mxu0 0
      %804 = vmatprep.subr.bf16.mxu0 0
      %805 = vmatpush1.bf16.msra.mxu0 0
      %806 = vmatprep.subr.bf16.mxu0 0
      %807 = vmatpush1.bf16.msra.mxu0 0
      %808 = vmatprep.subr.bf16.mxu0 0
      %809 = vmatpush1.bf16.msra.mxu0 0
      %810 = vmatprep.subr.bf16.mxu0 0
      %811 = vmatpush1.bf16.msra.mxu0 0
      %812 = vmatprep.subr.bf16.mxu0 0
      %813 = vmatpush1.bf16.msra.mxu0 0
      %814 = vmatprep.mubr.bf16.mxu0 0
      %815 = vmatmul.mubr.bf16.gmra.mrb[0].mxu0 %v780
      %v816 = vpop.f32.mrb[0].mxu0
      %v817 = vadd.f32 0.0, %v816
      %v818 = vpop.f32.mrb[0].mxu0
      %v819 = vpop.f32.mrb[0].mxu0
      %v820 = vadd.f32 0.0, %v819
      %v821 = vpop.f32.mrb[0].mxu0
      %822 = vdwg.mxu0
      %v823 = vadd.f32 %v764, %v817
      %v824 = vadd.f32 %v767, %v820
      %v825 = vpack.c.bf16 %v663, %v662
      %v826 = vld [vmem:[%s6] sm:$0xf]
      %v827 = vld [vmem:[%s6 + $0x4] sm:$0xf]
      %v830 = vunpack.c.l.b16 %v826
      %v831 = vunpack.c.l.b16 %v827
      %v832 = vpack.c.b16 %v831, %v830
      %v835 = vsel %vm410, %v825, 0
      %837 = vmatprep.subr.bf16.mxu0 0
      %838 = vmatpush1.bf16.msra.mxu0 %v832
      %839 = vmatprep.subr.bf16.mxu0 0
      %840 = vmatpush1.bf16.msra.mxu0 0
      %841 = vmatprep.subr.bf16.mxu0 0
      %842 = vmatpush1.bf16.msra.mxu0 0
      %843 = vmatprep.subr.bf16.mxu0 0
      %844 = vmatpush1.bf16.msra.mxu0 0
      %845 = vmatprep.subr.bf16.mxu0 0
      %846 = vmatpush1.bf16.msra.mxu0 0
      %847 = vmatprep.subr.bf16.mxu0 0
      %848 = vmatpush1.bf16.msra.mxu0 0
      %849 = vmatprep.subr.bf16.mxu0 0
      %850 = vmatpush1.bf16.msra.mxu0 0
      %851 = vmatprep.subr.bf16.mxu0 0
      %852 = vmatpush1.bf16.msra.mxu0 0
      %853 = vmatprep.subr.bf16.mxu0 0
      %854 = vmatpush1.bf16.msra.mxu0 0
      %855 = vmatprep.subr.bf16.mxu0 0
      %856 = vmatpush1.bf16.msra.mxu0 0
      %857 = vmatprep.subr.bf16.mxu0 0
      %858 = vmatpush1.bf16.msra.mxu0 0
      %859 = vmatprep.subr.bf16.mxu0 0
      %860 = vmatpush1.bf16.msra.mxu0 0
      %861 = vmatprep.subr.bf16.mxu0 0
      %862 = vmatpush1.bf16.msra.mxu0 0
      %863 = vmatprep.subr.bf16.mxu0 0
      %864 = vmatpush1.bf16.msra.mxu0 0
      %865 = vmatprep.subr.bf16.mxu0 0
      %866 = vmatpush1.bf16.msra.mxu0 0
      %867 = vmatprep.subr.bf16.mxu0 0
      %868 = vmatpush1.bf16.msra.mxu0 0
      %869 = vmatprep.mubr.bf16.mxu0 0
      %870 = vmatmul.mubr.bf16.gmra.mrb[0].mxu0 %v835
      %v871 = vpop.f32.mrb[0].mxu0
      %v872 = vadd.f32 0.0, %v871
      %v873 = vpop.f32.mrb[0].mxu0
      %v874 = vpop.f32.mrb[0].mxu0
      %v875 = vadd.f32 0.0, %v874
      %v876 = vpop.f32.mrb[0].mxu0
      %877 = vdwg.mxu0
      %v878 = vadd.f32 %v823, %v872
      %v879 = vadd.f32 %v824, %v875
      %v880 = vld [vmem:[%s7] sm:$0x1]
      %v882 = vlaneseq
      %v883 = vshrl.u32 %v882, 7
      %v884 = vsub.s32 0, %v883
      %v885 = vrot.slane %v880, %v884
      %v887 = vadd.f32 %v878, %v885
      %v888 = vadd.f32 %v879, %v885
      %v889 = vxor.u32 %v887, 2147483648
      %v890 = vxor.u32 %v888, 2147483648
      %v891 = vmul.f32 %v889, 1.442695
      %v892 = vpow.pop %v891
      %v893 = vmul.f32 %v890, 1.442695
      %v894 = vpow.pop %v893
      %v895 = vadd.f32 %v892, 1.0
      %v896 = vadd.f32 %v894, 1.0
      %v897 = vrcp.pop %v895
      %v898 = vmul.f32 1.0, %v897
      %v899 = vrcp.pop %v896
      %v900 = vmul.f32 1.0, %v899
      %v901 = vmul.f32 %v887, %v898
      %v902 = vmul.f32 %v888, %v900
      %v903 = vpack.c.bf16 %v902, %v901
      %v905 = vunpack.c.l.b16 %v903
      %v906 = vunpack.c.h.b16 %v903
      %v907 = vpack.c.b16 %v905, %v905
      %v908 = vpack.c.b16 %v906, %v906
      %vm911 = vcmask 257024
      %912 = vst.msk [vmem:[%s305] sm:$0xf] %vm911, %v907
      %913 = vst.msk [vmem:[%s305 + $0x4] sm:$0xf] %vm911, %v908
      %p914 = scmp.lt.s32.totalorder %s19, 1
      %s915 = scalar_select %p914, %s19, 1
      %s916 = smul.addr %s915, 2
      %s917 = smul.addr %s916, 4
      %s918 = scalar_lea.vmem %s8, %s917
      // Predicated region
      $region53: #{yolov5_forward.8} parent=51 // pred_check
        %p919 = pneg %p210
      $region54: #{yolov5_forward.8} parent=51 // pred_check_branch
        %921 = sbr.rel (%p919) target = $region56
      $region55: #{yolov5_forward.8} parent=51 // pred_region
        _
      $region56: #{yolov5_forward.8} parent=51 // pred_fallthru
        _
    $region52: #{yolov5_forward.8} parent=5 // pred_fallthru
      _
    %p922 = scmp.le.s32.totalorder 2, %s14
    // Predicated region
    $region57: #{yolov5_forward.8} parent=5 // pred_check
      %p923 = pneg %p922
    $region58: #{yolov5_forward.8} parent=5 // pred_check_branch
      %925 = sbr.rel (%p923) target = $region60
    $region59: #{yolov5_forward.8} parent=5 // pred_region
      %s926 = ssub.s32 %s14, 2
      // Predicated region
      $region61: #{yolov5_forward.8} parent=59 // pred_check
        %p927 = pneg %p216
      $region62: #{yolov5_forward.8} parent=59 // pred_check_branch
        %929 = sbr.rel (%p927) target = $region64
      $region63: #{yolov5_forward.8} parent=59 // pred_region
        %p930 = scmp.lt.s32.totalorder %s20, 1
        %s931 = scalar_select %p930, %s20, 1
        %s932 = smul.addr %s931, 2
        %s933 = smul.addr %s932, 4
        %s934 = scalar_lea.vmem %s8, %s933
      $region64: #{yolov5_forward.8} parent=59 // pred_fallthru
        _
    $region60: #{yolov5_forward.8} parent=5 // pred_fallthru
      _
  $region6: #{yolov5_forward.8} parent=0 // loop_footer
    %s18 = sadd.s32 1, %s14
  $region7: #{yolov5_forward.8} parent=0 // loop_footer_branch
    %13 = sbr.rel target = $region3
  $region8: #{yolov5_forward.8} parent=0 // loop_exit
    _

// kernel: yolov5_forward.7
$region0: #{yolov5_forward.7}
  #allocation0 [shape = 'u32[]', space=smem, size = 0x4, offset = 0x4, fixed_abs, tag = 'smem constant byte address 0x4 - core index']
  #allocation1 [shape = 'u32[144,128]{1,0:T(1,128)}', space=vmem, size = 0x12000, scoped, tag = 'internal scratch']
  #allocation2 [shape = 'f32[32,16]{1,0:T(8,128)}', space=vmem, size = 0x4000, scoped, tag = 'scratch operand']
  %s0 = inlined_call_operand.vmem [shape: bf16[2,16,32], index: 0, kind: input, shape index: {}]
  %s1 = inlined_call_operand.vmem [shape: bf16[32,16], index: 1, kind: input, shape index: {}]
  %s2 = inlined_call_operand.vmem [shape: f32[1,16], index: 2, kind: input, shape index: {}]
  %s3 = inlined_call_operand.vmem [shape: bf16[32,16], index: 3, kind: input, shape index: {}]
  %s4 = inlined_call_operand.vmem [shape: f32[1,16], index: 4, kind: input, shape index: {}]
  %s5 = inlined_call_operand.vmem [shape: bf16[16,16], index: 5, kind: input, shape index: {}]
  %s6 = inlined_call_operand.vmem [shape: f32[1,16], index: 6, kind: input, shape index: {}]
  %s7 = inlined_call_operand.vmem [shape: bf16[144,16], index: 7, kind: input, shape index: {}]
  %s8 = inlined_call_operand.vmem [shape: f32[1,16], index: 8, kind: input, shape index: {}]
  %s9 = inlined_call_operand.vmem [shape: bf16[16,32], index: 9, kind: input, shape index: {}]
  %s10 = inlined_call_operand.vmem [shape: bf16[16,32], index: 10, kind: input, shape index: {}]
  %s11 = inlined_call_operand.vmem [shape: f32[1,32], index: 11, kind: input, shape index: {}]
  %s12 = inlined_call_operand.vmem [shape: bf16[2,16,32], index: 12, kind: output, shape index: {}]
  %s13 = sld [smem:[#allocation0]]
  $region81: #{yolov5_forward.7} parent=0
    _
  %s15 = ssub.s32 1, %s13
  %s16 = scalar_select 0, %s15, %s13
  loop: start=0, step=1, limit=4
  $region2: #{yolov5_forward.7} parent=0 // loop_pre_header
    _
  $region3: #{yolov5_forward.7} parent=0 // loop_header
    %s18 = sphi 0, %s22
    %p19 = scmp.ge.s32.totalorder %s18, 4
    %s28 = sphi 0, %s30
    %s31 = sphi 0, %s28
    %s32 = sphi 0, %s31
    %s48 = sphi 0, %s32
    %s52 = sphi 0, %s52
    %s54 = sphi 0, %s52
    %s55 = sphi 0, %s54
    %s69 = sphi 0, %s55
    %s73 = sphi 0, %s73
    %s75 = sphi 0, %s73
    %s76 = sphi 0, %s75
    %s90 = sphi 0, %s76
    %s94 = sphi 0, %s94
    %s96 = sphi 0, %s94
    %s97 = sphi 0, %s96
    %s111 = sphi 0, %s97
    %s115 = sphi 0, %s115
    %s117 = sphi 0, %s115
    %s118 = sphi 0, %s117
    %s132 = sphi 0, %s118
    %s136 = sphi 0, %s136
    %s138 = sphi 0, %s136
    %s139 = sphi 0, %s138
    %s153 = sphi 0, %s139
    %s157 = sphi 0, %s157
    %s159 = sphi 0, %s157
    %s160 = sphi 0, %s159
    %s174 = sphi 0, %s160
    %s178 = sphi 0, %s178
    %s180 = sphi 0, %s178
    %s181 = sphi 0, %s180
    %s195 = sphi 0, %s181
    %s199 = sphi 0, %s199
    %s201 = sphi 0, %s199
    %s202 = sphi 0, %s201
    %s216 = sphi 0, %s202
    %s220 = sphi 0, %s220
    %s222 = sphi 0, %s220
    %s223 = sphi 0, %s222
    %s237 = sphi 0, %s223
    %s241 = sphi 0, %s241
    %s243 = sphi 0, %s241
    %s244 = sphi 0, %s243
    %s258 = sphi 0, %s244
    %s262 = sphi 0, %s262
    %s264 = sphi 0, %s262
    %s265 = sphi 0, %s264
    %s279 = sphi 0, %s265
    %s285 = sphi 0, %s287
    %s288 = sphi 0, %s285
    %s289 = sphi 0, %s288
    %s305 = sphi 0, %s289
  $region4: #{yolov5_forward.7} parent=0 // loop_header_branch
    %21 = sbr.rel (%p19) target = $region8
  $region5: #{yolov5_forward.7} parent=0 // loop_body
    %s23 = ssub.s32 %s18, 1
    %s24 = ssub.s32 %s18, 2
    %s25 = sadd.s32 %s18, 1
    %s26 = ssub.s32 %s18, %s25
    %p27 = scmp.eq.s32.totalorder %s26, 0
    %s29 = sadd.s32 %s28, 1
    %s30 = scalar_select %p27, %s28, %s29
    %p33 = pneg %p27
    %p34 = scmp.eq.s32.totalorder %s18, 1
    %p35 = por %p33, %p34
    %p36 = scmp.ne.s32.totalorder %s28, %s31
    %p37 = scmp.eq.s32.totalorder %s18, 0
    %p38 = por %p36, %p37
    %p39 = scmp.ne.s32.totalorder %s28, %s31
    %p40 = scmp.eq.s32.totalorder %s23, 1
    %p41 = por %p39, %p40
    %p42 = scmp.ne.s32.totalorder %s31, %s32
    %p43 = scmp.eq.s32.totalorder %s23, 0
    %p44 = por %p42, %p43
    %p45 = scmp.ne.s32.totalorder %s31, %s32
    %p46 = scmp.eq.s32.totalorder %s24, 1
    %p47 = por %p45, %p46
    %p49 = scmp.ne.s32.totalorder %s32, %s48
    %p50 = scmp.eq.s32.totalorder %s24, 0
    %p51 = por %p49, %p50
    %s53 = sadd.s32 %s52, 1
    %p56 = scmp.eq.s32.totalorder %s18, 1
    %p57 = scmp.ne.s32.totalorder %s52, %s54
    %p58 = scmp.eq.s32.totalorder %s18, 0
    %p59 = por %p57, %p58
    %p60 = scmp.ne.s32.totalorder %s52, %s54
    %p61 = scmp.eq.s32.totalorder %s23, 1
    %p62 = por %p60, %p61
    %p63 = scmp.ne.s32.totalorder %s54, %s55
    %p64 = scmp.eq.s32.totalorder %s23, 0
    %p65 = por %p63, %p64
    %p66 = scmp.ne.s32.totalorder %s54, %s55
    %p67 = scmp.eq.s32.totalorder %s24, 1
    %p68 = por %p66, %p67
    %p70 = scmp.ne.s32.totalorder %s55, %s69
    %p71 = scmp.eq.s32.totalorder %s24, 0
    %p72 = por %p70, %p71
    %s74 = sadd.s32 %s73, 1
    %p77 = scmp.eq.s32.totalorder %s18, 1
    %p78 = scmp.ne.s32.totalorder %s73, %s75
    %p79 = scmp.eq.s32.totalorder %s18, 0
    %p80 = por %p78, %p79
    %p81 = scmp.ne.s32.totalorder %s73, %s75
    %p82 = scmp.eq.s32.totalorder %s23, 1
    %p83 = por %p81, %p82
    %p84 = scmp.ne.s32.totalorder %s75, %s76
    %p85 = scmp.eq.s32.totalorder %s23, 0
    %p86 = por %p84, %p85
    %p87 = scmp.ne.s32.totalorder %s75, %s76
    %p88 = scmp.eq.s32.totalorder %s24, 1
    %p89 = por %p87, %p88
    %p91 = scmp.ne.s32.totalorder %s76, %s90
    %p92 = scmp.eq.s32.totalorder %s24, 0
    %p93 = por %p91, %p92
    %s95 = sadd.s32 %s94, 1
    %p98 = scmp.eq.s32.totalorder %s18, 1
    %p99 = scmp.ne.s32.totalorder %s94, %s96
    %p100 = scmp.eq.s32.totalorder %s18, 0
    %p101 = por %p99, %p100
    %p102 = scmp.ne.s32.totalorder %s94, %s96
    %p103 = scmp.eq.s32.totalorder %s23, 1
    %p104 = por %p102, %p103
    %p105 = scmp.ne.s32.totalorder %s96, %s97
    %p106 = scmp.eq.s32.totalorder %s23, 0
    %p107 = por %p105, %p106
    %p108 = scmp.ne.s32.totalorder %s96, %s97
    %p109 = scmp.eq.s32.totalorder %s24, 1
    %p110 = por %p108, %p109
    %p112 = scmp.ne.s32.totalorder %s97, %s111
    %p113 = scmp.eq.s32.totalorder %s24, 0
    %p114 = por %p112, %p113
    %s116 = sadd.s32 %s115, 1
    %p119 = scmp.eq.s32.totalorder %s18, 1
    %p120 = scmp.ne.s32.totalorder %s115, %s117
    %p121 = scmp.eq.s32.totalorder %s18, 0
    %p122 = por %p120, %p121
    %p123 = scmp.ne.s32.totalorder %s115, %s117
    %p124 = scmp.eq.s32.totalorder %s23, 1
    %p125 = por %p123, %p124
    %p126 = scmp.ne.s32.totalorder %s117, %s118
    %p127 = scmp.eq.s32.totalorder %s23, 0
    %p128 = por %p126, %p127
    %p129 = scmp.ne.s32.totalorder %s117, %s118
    %p130 = scmp.eq.s32.totalorder %s24, 1
    %p131 = por %p129, %p130
    %p133 = scmp.ne.s32.totalorder %s118, %s132
    %p134 = scmp.eq.s32.totalorder %s24, 0
    %p135 = por %p133, %p134
    %s137 = sadd.s32 %s136, 1
    %p140 = scmp.eq.s32.totalorder %s18, 1
    %p141 = scmp.ne.s32.totalorder %s136, %s138
    %p142 = scmp.eq.s32.totalorder %s18, 0
    %p143 = por %p141, %p142
    %p144 = scmp.ne.s32.totalorder %s136, %s138
    %p145 = scmp.eq.s32.totalorder %s23, 1
    %p146 = por %p144, %p145
    %p147 = scmp.ne.s32.totalorder %s138, %s139
    %p148 = scmp.eq.s32.totalorder %s23, 0
    %p149 = por %p147, %p148
    %p150 = scmp.ne.s32.totalorder %s138, %s139
    %p151 = scmp.eq.s32.totalorder %s24, 1
    %p152 = por %p150, %p151
    %p154 = scmp.ne.s32.totalorder %s139, %s153
    %p155 = scmp.eq.s32.totalorder %s24, 0
    %p156 = por %p154, %p155
    %s158 = sadd.s32 %s157, 1
    %p161 = scmp.eq.s32.totalorder %s18, 1
    %p162 = scmp.ne.s32.totalorder %s157, %s159
    %p163 = scmp.eq.s32.totalorder %s18, 0
    %p164 = por %p162, %p163
    %p165 = scmp.ne.s32.totalorder %s157, %s159
    %p166 = scmp.eq.s32.totalorder %s23, 1
    %p167 = por %p165, %p166
    %p168 = scmp.ne.s32.totalorder %s159, %s160
    %p169 = scmp.eq.s32.totalorder %s23, 0
    %p170 = por %p168, %p169
    %p171 = scmp.ne.s32.totalorder %s159, %s160
    %p172 = scmp.eq.s32.totalorder %s24, 1
    %p173 = por %p171, %p172
    %p175 = scmp.ne.s32.totalorder %s160, %s174
    %p176 = scmp.eq.s32.totalorder %s24, 0
    %p177 = por %p175, %p176
    %s179 = sadd.s32 %s178, 1
    %p182 = scmp.eq.s32.totalorder %s18, 1
    %p183 = scmp.ne.s32.totalorder %s178, %s180
    %p184 = scmp.eq.s32.totalorder %s18, 0
    %p185 = por %p183, %p184
    %p186 = scmp.ne.s32.totalorder %s178, %s180
    %p187 = scmp.eq.s32.totalorder %s23, 1
    %p188 = por %p186, %p187
    %p189 = scmp.ne.s32.totalorder %s180, %s181
    %p190 = scmp.eq.s32.totalorder %s23, 0
    %p191 = por %p189, %p190
    %p192 = scmp.ne.s32.totalorder %s180, %s181
    %p193 = scmp.eq.s32.totalorder %s24, 1
    %p194 = por %p192, %p193
    %p196 = scmp.ne.s32.totalorder %s181, %s195
    %p197 = scmp.eq.s32.totalorder %s24, 0
    %p198 = por %p196, %p197
    %s200 = sadd.s32 %s199, 1
    %p203 = scmp.eq.s32.totalorder %s18, 1
    %p204 = scmp.ne.s32.totalorder %s199, %s201
    %p205 = scmp.eq.s32.totalorder %s18, 0
    %p206 = por %p204, %p205
    %p207 = scmp.ne.s32.totalorder %s199, %s201
    %p208 = scmp.eq.s32.totalorder %s23, 1
    %p209 = por %p207, %p208
    %p210 = scmp.ne.s32.totalorder %s201, %s202
    %p211 = scmp.eq.s32.totalorder %s23, 0
    %p212 = por %p210, %p211
    %p213 = scmp.ne.s32.totalorder %s201, %s202
    %p214 = scmp.eq.s32.totalorder %s24, 1
    %p215 = por %p213, %p214
    %p217 = scmp.ne.s32.totalorder %s202, %s216
    %p218 = scmp.eq.s32.totalorder %s24, 0
    %p219 = por %p217, %p218
    %s221 = sadd.s32 %s220, 1
    %p224 = scmp.eq.s32.totalorder %s18, 1
    %p225 = scmp.ne.s32.totalorder %s220, %s222
    %p226 = scmp.eq.s32.totalorder %s18, 0
    %p227 = por %p225, %p226
    %p228 = scmp.ne.s32.totalorder %s220, %s222
    %p229 = scmp.eq.s32.totalorder %s23, 1
    %p230 = por %p228, %p229
    %p231 = scmp.ne.s32.totalorder %s222, %s223
    %p232 = scmp.eq.s32.totalorder %s23, 0
    %p233 = por %p231, %p232
    %p234 = scmp.ne.s32.totalorder %s222, %s223
    %p235 = scmp.eq.s32.totalorder %s24, 1
    %p236 = por %p234, %p235
    %p238 = scmp.ne.s32.totalorder %s223, %s237
    %p239 = scmp.eq.s32.totalorder %s24, 0
    %p240 = por %p238, %p239
    %s242 = sadd.s32 %s241, 1
    %p245 = scmp.eq.s32.totalorder %s18, 1
    %p246 = scmp.ne.s32.totalorder %s241, %s243
    %p247 = scmp.eq.s32.totalorder %s18, 0
    %p248 = por %p246, %p247
    %p249 = scmp.ne.s32.totalorder %s241, %s243
    %p250 = scmp.eq.s32.totalorder %s23, 1
    %p251 = por %p249, %p250
    %p252 = scmp.ne.s32.totalorder %s243, %s244
    %p253 = scmp.eq.s32.totalorder %s23, 0
    %p254 = por %p252, %p253
    %p255 = scmp.ne.s32.totalorder %s243, %s244
    %p256 = scmp.eq.s32.totalorder %s24, 1
    %p257 = por %p255, %p256
    %p259 = scmp.ne.s32.totalorder %s244, %s258
    %p260 = scmp.eq.s32.totalorder %s24, 0
    %p261 = por %p259, %p260
    %s263 = sadd.s32 %s262, 1
    %p266 = scmp.eq.s32.totalorder %s18, 1
    %p267 = scmp.ne.s32.totalorder %s262, %s264
    %p268 = scmp.eq.s32.totalorder %s18, 0
    %p269 = por %p267, %p268
    %p270 = scmp.ne.s32.totalorder %s262, %s264
    %p271 = scmp.eq.s32.totalorder %s23, 1
    %p272 = por %p270, %p271
    %p273 = scmp.ne.s32.totalorder %s264, %s265
    %p274 = scmp.eq.s32.totalorder %s23, 0
    %p275 = por %p273, %p274
    %p276 = scmp.ne.s32.totalorder %s264, %s265
    %p277 = scmp.eq.s32.totalorder %s24, 1
    %p278 = por %p276, %p277
    %p280 = scmp.ne.s32.totalorder %s265, %s279
    %p281 = scmp.eq.s32.totalorder %s24, 0
    %p282 = por %p280, %p281
    %s283 = ssub.s32 %s18, %s25
    %p284 = scmp.eq.s32.totalorder %s283, 0
    %s286 = sadd.s32 %s285, 1
    %s287 = scalar_select %p284, %s285, %s286
    %p290 = pneg %p284
    %p291 = scmp.eq.s32.totalorder %s18, 1
    %p292 = por %p290, %p291
    %p293 = scmp.ne.s32.totalorder %s285, %s288
    %p294 = scmp.eq.s32.totalorder %s18, 0
    %p295 = por %p293, %p294
    %p296 = scmp.ne.s32.totalorder %s285, %s288
    %p297 = scmp.eq.s32.totalorder %s23, 1
    %p298 = por %p296, %p297
    %p299 = scmp.ne.s32.totalorder %s288, %s289
    %p300 = scmp.eq.s32.totalorder %s23, 0
    %p301 = por %p299, %p300
    %p302 = scmp.ne.s32.totalorder %s288, %s289
    %p303 = scmp.eq.s32.totalorder %s24, 1
    %p304 = por %p302, %p303
    %p306 = scmp.ne.s32.totalorder %s289, %s305
    %p307 = scmp.eq.s32.totalorder %s24, 0
    %p308 = por %p306, %p307
    %p309 = scmp.le.s32.totalorder 1, %s18
    %p310 = scmp.lt.s32.totalorder %s18, 3
    %p311 = pnand %p309, %p310
    %p312 = pneg %p311
    // Predicated region
    $region9: #{yolov5_forward.7} parent=5 // pred_check
      _
    $region10: #{yolov5_forward.7} parent=5 // pred_check_branch
      %314 = sbr.rel (%p311) target = $region12
    $region11: #{yolov5_forward.7} parent=5 // pred_region
      %s315 = ssub.s32 %s18, 1
      // Predicated region
      $region13: #{yolov5_forward.7} parent=11 // pred_check
        %p316 = pneg %p65
      $region14: #{yolov5_forward.7} parent=11 // pred_check_branch
        %318 = sbr.rel (%p316) target = $region16
      $region15: #{yolov5_forward.7} parent=11 // pred_region
        _
      $region16: #{yolov5_forward.7} parent=11 // pred_fallthru
        _
      // Predicated region
      $region17: #{yolov5_forward.7} parent=11 // pred_check
        %p319 = pneg %p86
      $region18: #{yolov5_forward.7} parent=11 // pred_check_branch
        %321 = sbr.rel (%p319) target = $region20
      $region19: #{yolov5_forward.7} parent=11 // pred_region
        _
      $region20: #{yolov5_forward.7} parent=11 // pred_fallthru
        _
      // Predicated region
      $region21: #{yolov5_forward.7} parent=11 // pred_check
        %p322 = pneg %p107
      $region22: #{yolov5_forward.7} parent=11 // pred_check_branch
        %324 = sbr.rel (%p322) target = $region24
      $region23: #{yolov5_forward.7} parent=11 // pred_region
        _
      $region24: #{yolov5_forward.7} parent=11 // pred_fallthru
        _
      // Predicated region
      $region25: #{yolov5_forward.7} parent=11 // pred_check
        %p325 = pneg %p128
      $region26: #{yolov5_forward.7} parent=11 // pred_check_branch
        %327 = sbr.rel (%p325) target = $region28
      $region27: #{yolov5_forward.7} parent=11 // pred_region
        _
      $region28: #{yolov5_forward.7} parent=11 // pred_fallthru
        _
      // Predicated region
      $region29: #{yolov5_forward.7} parent=11 // pred_check
        %p328 = pneg %p149
      $region30: #{yolov5_forward.7} parent=11 // pred_check_branch
        %330 = sbr.rel (%p328) target = $region32
      $region31: #{yolov5_forward.7} parent=11 // pred_region
        _
      $region32: #{yolov5_forward.7} parent=11 // pred_fallthru
        _
      // Predicated region
      $region33: #{yolov5_forward.7} parent=11 // pred_check
        %p331 = pneg %p170
      $region34: #{yolov5_forward.7} parent=11 // pred_check_branch
        %333 = sbr.rel (%p331) target = $region36
      $region35: #{yolov5_forward.7} parent=11 // pred_region
        _
      $region36: #{yolov5_forward.7} parent=11 // pred_fallthru
        _
      // Predicated region
      $region37: #{yolov5_forward.7} parent=11 // pred_check
        %p334 = pneg %p191
      $region38: #{yolov5_forward.7} parent=11 // pred_check_branch
        %336 = sbr.rel (%p334) target = $region40
      $region39: #{yolov5_forward.7} parent=11 // pred_region
        _
      $region40: #{yolov5_forward.7} parent=11 // pred_fallthru
        _
      // Predicated region
      $region41: #{yolov5_forward.7} parent=11 // pred_check
        %p337 = pneg %p212
      $region42: #{yolov5_forward.7} parent=11 // pred_check_branch
        %339 = sbr.rel (%p337) target = $region44
      $region43: #{yolov5_forward.7} parent=11 // pred_region
        _
      $region44: #{yolov5_forward.7} parent=11 // pred_fallthru
        _
      // Predicated region
      $region45: #{yolov5_forward.7} parent=11 // pred_check
        %p340 = pneg %p233
      $region46: #{yolov5_forward.7} parent=11 // pred_check_branch
        %342 = sbr.rel (%p340) target = $region48
      $region47: #{yolov5_forward.7} parent=11 // pred_region
        _
      $region48: #{yolov5_forward.7} parent=11 // pred_fallthru
        _
      // Predicated region
      $region49: #{yolov5_forward.7} parent=11 // pred_check
        %p343 = pneg %p254
      $region50: #{yolov5_forward.7} parent=11 // pred_check_branch
        %345 = sbr.rel (%p343) target = $region52
      $region51: #{yolov5_forward.7} parent=11 // pred_region
        _
      $region52: #{yolov5_forward.7} parent=11 // pred_fallthru
        _
      // Predicated region
      $region53: #{yolov5_forward.7} parent=11 // pred_check
        %p346 = pneg %p275
      $region54: #{yolov5_forward.7} parent=11 // pred_check_branch
        %348 = sbr.rel (%p346) target = $region56
      $region55: #{yolov5_forward.7} parent=11 // pred_region
        _
      $region56: #{yolov5_forward.7} parent=11 // pred_fallthru
        _
    $region12: #{yolov5_forward.7} parent=5 // pred_fallthru
      _
    %p349 = scmp.lt.s32.totalorder %s18, 2
    // Predicated region
    $region57: #{yolov5_forward.7} parent=5 // pred_check
      %p350 = pneg %p349
    $region58: #{yolov5_forward.7} parent=5 // pred_check_branch
      %352 = sbr.rel (%p350) target = $region60
    $region59: #{yolov5_forward.7} parent=5 // pred_region
      // Predicated region
      $region61: #{yolov5_forward.7} parent=59 // pred_check
        %p353 = pneg %p38
      $region62: #{yolov5_forward.7} parent=59 // pred_check_branch
        %355 = sbr.rel (%p353) target = $region64
      $region63: #{yolov5_forward.7} parent=59 // pred_region
        %p356 = scmp.lt.s32.totalorder %s18, 1
        %s357 = scalar_select %p356, %s18, 1
        %s358 = smul.addr %s357, 2
        %s359 = smul.addr %s358, 4
        %s360 = scalar_lea.vmem %s0, %s359
      $region64: #{yolov5_forward.7} parent=59 // pred_fallthru
        _
    $region60: #{yolov5_forward.7} parent=5 // pred_fallthru
      _
    %p361 = scmp.le.s32.totalorder 1, %s18
    %p362 = scmp.lt.s32.totalorder %s18, 3
    %p363 = pnand %p361, %p362
    %p364 = pneg %p363
    // Predicated region
    $region65: #{yolov5_forward.7} parent=5 // pred_check
      _
    $region66: #{yolov5_forward.7} parent=5 // pred_check_branch
      %366 = sbr.rel (%p363) target = $region68
    $region67: #{yolov5_forward.7} parent=5 // pred_region
      %s367 = ssub.s32 %s18, 1
      %p368 = scmp.lt.s32.totalorder %s23, 1
      %s369 = scalar_select %p368, %s23, 1
      %s370 = smul.addr %s369, 2
      %s371 = smul.addr %s370, 4
      %s372 = scalar_lea.vmem %s0, %s371
      %p373 = pneg %p44
      %p374 = pneg %p41
      %p375 = pneg %p65
      %p376 = pneg %p62
      %p377 = pneg %p86
      %p378 = pneg %p83
      %p379 = pneg %p107
      %p380 = pneg %p104
      %p381 = pneg %p128
      %p382 = pneg %p125
      %p383 = pneg %p149
      %p384 = pneg %p146
      %p385 = pneg %p170
      %p386 = pneg %p167
      %p387 = pneg %p191
      %p388 = pneg %p188
      %p389 = pneg %p212
      %p390 = pneg %p209
      %p391 = pneg %p233
      %p392 = pneg %p230
      %p393 = pneg %p254
      %p394 = pneg %p251
      %p395 = pneg %p275
      %p396 = pneg %p272
      %p397 = pneg %p301
      %p398 = pneg %p298
      %p399 = scmp.lt.s32.totalorder %s23, 1
      %s400 = scalar_select %p399, %s23, 1
      %s401 = smul.addr %s400, 2
      %s402 = smul.addr %s401, 4
      %s403 = scalar_lea.vmem %s12, %s402
      %p404 = scmp.lt.s32.totalorder %s23, 1
      %s405 = scalar_select %p404, %s23, 1
      %s406 = smul.addr %s405, 2
      %s407 = smul.addr %s406, 4
      %s408 = scalar_lea.vmem %s0, %s407
      %p409 = scmp.lt.s32.totalorder %s23, 1
      %s410 = scalar_select %p409, %s23, 1
      %s411 = smul.addr %s410, 2
      %s412 = smul.addr %s411, 4
      %s413 = scalar_lea.vmem %s12, %s412
      %v415 = vld [vmem:[%s408] sm:$0xf]
      %v416 = vld [vmem:[%s408 + $0x4] sm:$0xf]
      %v417 = vld [vmem:[%s1] sm:$0xf]
      %v418 = vld [vmem:[%s1 + $0x4] sm:$0xf]
      %v419 = vld [vmem:[%s1 + $0x8] sm:$0xf]
      %v420 = vld [vmem:[%s1 + $0xc] sm:$0xf]
      %v421 = vld [vmem:[%s2] sm:$0x1]
      %v423 = vlaneseq
      %v424 = vshrl.u32 %v423, 7
      %v425 = vsub.s32 0, %v424
      %v426 = vrot.slane %v421, %v425
      %v430 = vunpack.c.l.b16 %v415
      %v431 = vunpack.c.l.b16 %v416
      %v432 = vpack.c.b16 %v431, %v430
      %v437 = vunpack.c.l.b16 %v417
      %v438 = vunpack.c.l.b16 %v418
      %v439 = vunpack.c.l.b16 %v419
      %v440 = vunpack.c.l.b16 %v420
      %v441 = vpack.c.b16 %v438, %v437
      %v442 = vpack.c.b16 %v440, %v439
      %vm445 = vcmask 261120
      %v447 = vsel %vm445, %v432, 0
      %449 = vmatprep.subr.bf16.mxu0 0
      %450 = vmatpush1.bf16.msra.mxu0 %v441
      %451 = vmatprep.subr.bf16.mxu0 0
      %452 = vmatpush1.bf16.msra.mxu0 %v442
      %453 = vmatprep.subr.bf16.mxu0 0
      %454 = vmatpush1.bf16.msra.mxu0 0
      %455 = vmatprep.subr.bf16.mxu0 0
      %456 = vmatpush1.bf16.msra.mxu0 0
      %457 = vmatprep.subr.bf16.mxu0 0
      %458 = vmatpush1.bf16.msra.mxu0 0
      %459 = vmatprep.subr.bf16.mxu0 0
      %460 = vmatpush1.bf16.msra.mxu0 0
      %461 = vmatprep.subr.bf16.mxu0 0
      %462 = vmatpush1.bf16.msra.mxu0 0
      %463 = vmatprep.subr.bf16.mxu0 0
      %464 = vmatpush1.bf16.msra.mxu0 0
      %465 = vmatprep.subr.bf16.mxu0 0
      %466 = vmatpush1.bf16.msra.mxu0 0
      %467 = vmatprep.subr.bf16.mxu0 0
      %468 = vmatpush1.bf16.msra.mxu0 0
      %469 = vmatprep.subr.bf16.mxu0 0
      %470 = vmatpush1.bf16.msra.mxu0 0
      %471 = vmatprep.subr.bf16.mxu0 0
      %472 = vmatpush1.bf16.msra.mxu0 0
      %473 = vmatprep.subr.bf16.mxu0 0
      %474 = vmatpush1.bf16.msra.mxu0 0
      %475 = vmatprep.subr.bf16.mxu0 0
      %476 = vmatpush1.bf16.msra.mxu0 0
      %477 = vmatprep.subr.bf16.mxu0 0
      %478 = vmatpush1.bf16.msra.mxu0 0
      %479 = vmatprep.subr.bf16.mxu0 0
      %480 = vmatpush1.bf16.msra.mxu0 0
      %481 = vmatprep.mubr.bf16.mxu0 0
      %482 = vmatmul.mubr.bf16.gmra.mrb[0].mxu0 %v447
      %v483 = vpop.f32.mrb[0].mxu0
      %v484 = vadd.f32 %v426, %v483
      %v485 = vpop.f32.mrb[0].mxu0
      %v486 = vpop.f32.mrb[0].mxu0
      %v487 = vadd.f32 %v426, %v486
      %v488 = vpop.f32.mrb[0].mxu0
      %489 = vdwg.mxu0
      %v490 = vxor.u32 %v484, 2147483648
      %v491 = vxor.u32 %v487, 2147483648
      %v492 = vmul.f32 %v490, 1.442695
      %v493 = vpow.pop %v492
      %v494 = vmul.f32 %v491, 1.442695
      %v495 = vpow.pop %v494
      %v496 = vadd.f32 %v493, 1.0
      %v497 = vadd.f32 %v495, 1.0
      %v498 = vrcp.pop %v496
      %v499 = vmul.f32 1.0, %v498
      %v500 = vrcp.pop %v497
      %v501 = vmul.f32 1.0, %v500
      %v502 = vmul.f32 %v484, %v499
      %v503 = vmul.f32 %v487, %v501
      %v504 = vld [vmem:[%s3] sm:$0xf]
      %v505 = vld [vmem:[%s3 + $0x4] sm:$0xf]
      %v506 = vld [vmem:[%s3 + $0x8] sm:$0xf]
      %v507 = vld [vmem:[%s3 + $0xc] sm:$0xf]
      %v508 = vld [vmem:[%s4] sm:$0x1]
      %v510 = vlaneseq
      %v511 = vshrl.u32 %v510, 7
      %v512 = vsub.s32 0, %v511
      %v513 = vrot.slane %v508, %v512
      %v519 = vunpack.c.l.b16 %v504
      %v520 = vunpack.c.l.b16 %v505
      %v521 = vunpack.c.l.b16 %v506
      %v522 = vunpack.c.l.b16 %v507
      %v523 = vpack.c.b16 %v520, %v519
      %v524 = vpack.c.b16 %v522, %v521
      %527 = vmatprep.subr.bf16.mxu0 0
      %528 = vmatpush1.bf16.msra.mxu0 %v523
      %529 = vmatprep.subr.bf16.mxu0 0
      %530 = vmatpush1.bf16.msra.mxu0 %v524
      %531 = vmatprep.subr.bf16.mxu0 0
      %532 = vmatpush1.bf16.msra.mxu0 0
      %533 = vmatprep.subr.bf16.mxu0 0
      %534 = vmatpush1.bf16.msra.mxu0 0
      %535 = vmatprep.subr.bf16.mxu0 0
      %536 = vmatpush1.bf16.msra.mxu0 0
      %537 = vmatprep.subr.bf16.mxu0 0
      %538 = vmatpush1.bf16.msra.mxu0 0
      %539 = vmatprep.subr.bf16.mxu0 0
      %540 = vmatpush1.bf16.msra.mxu0 0
      %541 = vmatprep.subr.bf16.mxu0 0
      %542 = vmatpush1.bf16.msra.mxu0 0
      %543 = vmatprep.subr.bf16.mxu0 0
      %544 = vmatpush1.bf16.msra.mxu0 0
      %545 = vmatprep.subr.bf16.mxu0 0
      %546 = vmatpush1.bf16.msra.mxu0 0
      %547 = vmatprep.subr.bf16.mxu0 0
      %548 = vmatpush1.bf16.msra.mxu0 0
      %549 = vmatprep.subr.bf16.mxu0 0
      %550 = vmatpush1.bf16.msra.mxu0 0
      %551 = vmatprep.subr.bf16.mxu0 0
      %552 = vmatpush1.bf16.msra.mxu0 0
      %553 = vmatprep.subr.bf16.mxu0 0
      %554 = vmatpush1.bf16.msra.mxu0 0
      %555 = vmatprep.subr.bf16.mxu0 0
      %556 = vmatpush1.bf16.msra.mxu0 0
      %557 = vmatprep.subr.bf16.mxu0 0
      %558 = vmatpush1.bf16.msra.mxu0 0
      %559 = vmatprep.mubr.bf16.mxu0 0
      %560 = vmatmul.mubr.bf16.gmra.mrb[0].mxu0 %v447
      %v561 = vpop.f32.mrb[0].mxu0
      %v562 = vadd.f32 %v513, %v561
      %v563 = vpop.f32.mrb[0].mxu0
      %v564 = vpop.f32.mrb[0].mxu0
      %v565 = vadd.f32 %v513, %v564
      %v566 = vpop.f32.mrb[0].mxu0
      %567 = vdwg.mxu0
      %v568 = vxor.u32 %v562, 2147483648
      %v569 = vxor.u32 %v565, 2147483648
      %v570 = vmul.f32 %v568, 1.442695
      %v571 = vpow.pop %v570
      %v572 = vmul.f32 %v569, 1.442695
      %v573 = vpow.pop %v572
      %v574 = vadd.f32 %v571, 1.0
      %v575 = vadd.f32 %v573, 1.0
      %v576 = vrcp.pop %v574
      %v577 = vmul.f32 1.0, %v576
      %v578 = vrcp.pop %v575
      %v579 = vmul.f32 1.0, %v578
      %v580 = vmul.f32 %v562, %v577
      %v581 = vmul.f32 %v565, %v579
      %v582 = vpack.c.bf16 %v503, %v502
      %v583 = vld [vmem:[%s5] sm:$0xf]
      %v584 = vld [vmem:[%s5 + $0x4] sm:$0xf]
      %v585 = vld [vmem:[%s6] sm:$0x1]
      %v587 = vlaneseq
      %v588 = vshrl.u32 %v587, 7
      %v589 = vsub.s32 0, %v588
      %v590 = vrot.slane %v585, %v589
      %v594 = vunpack.c.l.b16 %v583
      %v595 = vunpack.c.l.b16 %v584
      %v596 = vpack.c.b16 %v595, %v594
      %vm598 = vcmask 130048
      %v600 = vsel %vm598, %v582, 0
      %602 = vmatprep.subr.bf16.mxu0 0
      %603 = vmatpush1.bf16.msra.mxu0 %v596
      %604 = vmatprep.subr.bf16.mxu0 0
      %605 = vmatpush1.bf16.msra.mxu0 0
      %606 = vmatprep.subr.bf16.mxu0 0
      %607 = vmatpush1.bf16.msra.mxu0 0
      %608 = vmatprep.subr.bf16.mxu0 0
      %609 = vmatpush1.bf16.msra.mxu0 0
      %610 = vmatprep.subr.bf16.mxu0 0
      %611 = vmatpush1.bf16.msra.mxu0 0
      %612 = vmatprep.subr.bf16.mxu0 0
      %613 = vmatpush1.bf16.msra.mxu0 0
      %614 = vmatprep.subr.bf16.mxu0 0
      %615 = vmatpush1.bf16.msra.mxu0 0
      %616 = vmatprep.subr.bf16.mxu0 0
      %617 = vmatpush1.bf16.msra.mxu0 0
      %618 = vmatprep.subr.bf16.mxu0 0
      %619 = vmatpush1.bf16.msra.mxu0 0
      %620 = vmatprep.subr.bf16.mxu0 0
      %621 = vmatpush1.bf16.msra.mxu0 0
      %622 = vmatprep.subr.bf16.mxu0 0
      %623 = vmatpush1.bf16.msra.mxu0 0
      %624 = vmatprep.subr.bf16.mxu0 0
      %625 = vmatpush1.bf16.msra.mxu0 0
      %626 = vmatprep.subr.bf16.mxu0 0
      %627 = vmatpush1.bf16.msra.mxu0 0
      %628 = vmatprep.subr.bf16.mxu0 0
      %629 = vmatpush1.bf16.msra.mxu0 0
      %630 = vmatprep.subr.bf16.mxu0 0
      %631 = vmatpush1.bf16.msra.mxu0 0
      %632 = vmatprep.subr.bf16.mxu0 0
      %633 = vmatpush1.bf16.msra.mxu0 0
      %634 = vmatprep.mubr.bf16.mxu0 0
      %635 = vmatmul.mubr.bf16.gmra.mrb[0].mxu0 %v600
      %v636 = vpop.f32.mrb[0].mxu0
      %v637 = vadd.f32 %v590, %v636
      %v638 = vpop.f32.mrb[0].mxu0
      %v639 = vpop.f32.mrb[0].mxu0
      %v640 = vadd.f32 %v590, %v639
      %v641 = vpop.f32.mrb[0].mxu0
      %642 = vdwg.mxu0
      %v643 = vxor.u32 %v637, 2147483648
      %v644 = vxor.u32 %v640, 2147483648
      %v645 = vmul.f32 %v643, 1.442695
      %v646 = vpow.pop %v645
      %v647 = vmul.f32 %v644, 1.442695
      %v648 = vpow.pop %v647
      %v649 = vadd.f32 %v646, 1.0
      %v650 = vadd.f32 %v648, 1.0
      %v651 = vrcp.pop %v649
      %v652 = vmul.f32 1.0, %v651
      %v653 = vrcp.pop %v650
      %v654 = vmul.f32 1.0, %v653
      %v655 = vmul.f32 %v637, %v652
      %v656 = vmul.f32 %v640, %v654
      %657 = vst.msk [vmem:[#allocation2] sm:$0xff] %vm598, 0.0
      %658 = vst.msk [vmem:[#allocation2 + $0x8] sm:$0xff] %vm598, 0.0
      %659 = vst.msk [vmem:[#allocation2 + $0x10] sm:$0xff] %vm598, 0.0
      %660 = vst.msk [vmem:[#allocation2 + $0x18] sm:$0xff] %vm598, 0.0
      %661 = vst.msk [vmem:[#allocation2 + $0x8] sm:$0xff] %vm598, %v655
      %662 = vst.msk [vmem:[#allocation2 + $0x10] sm:$0xff] %vm598, %v656
      %v663 = vlaneseq
      %v664 = vshrl.u32 %v663, 7
      %v665 = vadd.s32 %v664, 8
      %v666 = vcvt.s32.f32 %v664
      %v667 = vcvt.s32.f32 %v665
      %v668 = vrcp.pop 4.0
      %v669 = vmul.f32 %v666, %v668
      %v670 = vmul.f32 %v667, %v668
      %v671 = vfloor.f32 %v669
      %v672 = vfloor.f32 %v670
      %v673 = vmul.f32 %v671, 4.0
      %v674 = vmul.f32 %v672, 4.0
      %v675 = vsub.f32 %v666, %v673
      %v676 = vsub.f32 %v667, %v674
      %v677 = vadd.f32 %v671, -1.0
      %v678 = vadd.f32 %v672, -1.0
      %vm679 = vcmp.ge.f32.partialorder %v677, 0.0
      %vm680 = vcmp.ge.f32.partialorder %v678, 0.0
      %vm681 = vcmp.lt.f32.partialorder %v677, 4.0
      %vm682 = vcmp.lt.f32.partialorder %v678, 4.0
      %vm683 = vmand %vm679, %vm681
      %vm684 = vmand %vm680, %vm682
      %v685 = vadd.f32 %v675, -1.0
      %v686 = vadd.f32 %v676, -1.0
      %vm687 = vcmp.ge.f32.partialorder %v685, 0.0
      %vm688 = vcmp.ge.f32.partialorder %v686, 0.0
      %vm689 = vmand %vm683, %vm687
      %vm690 = vmand %vm684, %vm688
      %vm691 = vcmp.lt.f32.partialorder %v685, 4.0
      %vm692 = vcmp.lt.f32.partialorder %v686, 4.0
      %vm693 = vmand %vm689, %vm691
      %vm694 = vmand %vm690, %vm692
      %v695 = vld [vmem:[#allocation2 + $0x3] sm:$0xff]
      %v696 = vld [vmem:[#allocation2 + $0xb] sm:$0xff]
      %v697 = vsel %vm693, 1, 0
      %v698 = vsel %vm694, 1, 0
      %vm699 = vcmp.eq.s32.totalorder %v697, 1
      %vm700 = vcmp.eq.s32.totalorder %v698, 1
      %v701 = vsel %vm699, %v695, 0.0
      %v702 = vsel %vm700, %v696, 0.0
      %v703 = vpack.c.bf16 %v702, %v701
      %v704 = vld [vmem:[%s7] sm:$0xf]
      %v705 = vld [vmem:[%s7 + $0x4] sm:$0xf]
      %v706 = vadd.f32 %v675, 0.0
      %v707 = vadd.f32 %v676, 0.0
      %vm708 = vcmp.ge.f32.partialorder %v706, 0.0
      %vm709 = vcmp.ge.f32.partialorder %v707, 0.0
      %vm710 = vmand %vm683, %vm708
      %vm711 = vmand %vm684, %vm709
      %vm712 = vcmp.lt.f32.partialorder %v706, 4.0
      %vm713 = vcmp.lt.f32.partialorder %v707, 4.0
      %vm714 = vmand %vm710, %vm712
      %vm715 = vmand %vm711, %vm713
      %v716 = vld [vmem:[#allocation2 + $0x4] sm:$0xff]
      %v717 = vld [vmem:[#allocation2 + $0xc] sm:$0xff]
      %v718 = vsel %vm714, 1, 0
      %v719 = vsel %vm715, 1, 0
      %vm720 = vcmp.eq.s32.totalorder %v718, 1
      %vm721 = vcmp.eq.s32.totalorder %v719, 1
      %v722 = vsel %vm720, %v716, 0.0
      %v723 = vsel %vm721, %v717, 0.0
      %v724 = vpack.c.bf16 %v723, %v722
      %v725 = vld [vmem:[%s7 + $0x8] sm:$0xf]
      %v726 = vld [vmem:[%s7 + $0xc] sm:$0xf]
      %v729 = vunpack.c.l.b16 %v725
      %v730 = vunpack.c.l.b16 %v726
      %v731 = vpack.c.b16 %v730, %v729
      %v734 = vsel %vm598, %v724, 0
      %736 = vmatprep.subr.bf16.mxu0 0
      %737 = vmatpush1.bf16.msra.mxu0 %v731
      %738 = vmatprep.subr.bf16.mxu0 0
      %739 = vmatpush1.bf16.msra.mxu0 0
      %740 = vmatprep.subr.bf16.mxu0 0
      %741 = vmatpush1.bf16.msra.mxu0 0
      %742 = vmatprep.subr.bf16.mxu0 0
      %743 = vmatpush1.bf16.msra.mxu0 0
      %744 = vmatprep.subr.bf16.mxu0 0
      %745 = vmatpush1.bf16.msra.mxu0 0
      %746 = vmatprep.subr.bf16.mxu0 0
      %747 = vmatpush1.bf16.msra.mxu0 0
      %748 = vmatprep.subr.bf16.mxu0 0
      %749 = vmatpush1.bf16.msra.mxu0 0
      %750 = vmatprep.subr.bf16.mxu0 0
      %751 = vmatpush1.bf16.msra.mxu0 0
      %752 = vmatprep.subr.bf16.mxu0 0
      %753 = vmatpush1.bf16.msra.mxu0 0
      %754 = vmatprep.subr.bf16.mxu0 0
      %755 = vmatpush1.bf16.msra.mxu0 0
      %756 = vmatprep.subr.bf16.mxu0 0
      %757 = vmatpush1.bf16.msra.mxu0 0
      %758 = vmatprep.subr.bf16.mxu0 0
      %759 = vmatpush1.bf16.msra.mxu0 0
      %760 = vmatprep.subr.bf16.mxu0 0
      %761 = vmatpush1.bf16.msra.mxu0 0
      %762 = vmatprep.subr.bf16.mxu0 0
      %763 = vmatpush1.bf16.msra.mxu0 0
      %764 = vmatprep.subr.bf16.mxu0 0
      %765 = vmatpush1.bf16.msra.mxu0 0
      %766 = vmatprep.subr.bf16.mxu0 0
      %767 = vmatpush1.bf16.msra.mxu0 0
      %768 = vmatprep.mubr.bf16.mxu0 0
      %769 = vmatmul.mubr.bf16.gmra.mrb[0].mxu0 %v734
      %v770 = vpop.f32.mrb[0].mxu0
      %v771 = vadd.f32 0.0, %v770
      %v772 = vpop.f32.mrb[0].mxu0
      %v773 = vpop.f32.mrb[0].mxu0
      %v774 = vadd.f32 0.0, %v773
      %v775 = vpop.f32.mrb[0].mxu0
      %776 = vdwg.mxu0
      %v779 = vunpack.c.l.b16 %v704
      %v780 = vunpack.c.l.b16 %v705
      %v781 = vpack.c.b16 %v780, %v779
      %v784 = vsel %vm598, %v703, 0
      %786 = vmatprep.subr.bf16.mxu0 0
      %787 = vmatpush1.bf16.msra.mxu0 %v781
      %788 = vmatprep.subr.bf16.mxu0 0
      %789 = vmatpush1.bf16.msra.mxu0 0
      %790 = vmatprep.subr.bf16.mxu0 0
      %791 = vmatpush1.bf16.msra.mxu0 0
      %792 = vmatprep.subr.bf16.mxu0 0
      %793 = vmatpush1.bf16.msra.mxu0 0
      %794 = vmatprep.subr.bf16.mxu0 0
      %795 = vmatpush1.bf16.msra.mxu0 0
      %796 = vmatprep.subr.bf16.mxu0 0
      %797 = vmatpush1.bf16.msra.mxu0 0
      %798 = vmatprep.subr.bf16.mxu0 0
      %799 = vmatpush1.bf16.msra.mxu0 0
      %800 = vmatprep.subr.bf16.mxu0 0
      %801 = vmatpush1.bf16.msra.mxu0 0
      %802 = vmatprep.subr.bf16.mxu0 0
      %803 = vmatpush1.bf16.msra.mxu0 0
      %804 = vmatprep.subr.bf16.mxu0 0
      %805 = vmatpush1.bf16.msra.mxu0 0
      %806 = vmatprep.subr.bf16.mxu0 0
      %807 = vmatpush1.bf16.msra.mxu0 0
      %808 = vmatprep.subr.bf16.mxu0 0
      %809 = vmatpush1.bf16.msra.mxu0 0
      %810 = vmatprep.subr.bf16.mxu0 0
      %811 = vmatpush1.bf16.msra.mxu0 0
      %812 = vmatprep.subr.bf16.mxu0 0
      %813 = vmatpush1.bf16.msra.mxu0 0
      %814 = vmatprep.subr.bf16.mxu0 0
      %815 = vmatpush1.bf16.msra.mxu0 0
      %816 = vmatprep.subr.bf16.mxu0 0
      %817 = vmatpush1.bf16.msra.mxu0 0
      %818 = vmatprep.mubr.bf16.mxu0 0
      %819 = vmatmul.mubr.bf16.gmra.mrb[0].mxu0 %v784
      %v820 = vpop.f32.mrb[0].mxu0
      %v821 = vadd.f32 %v771, %v820
      %v822 = vpop.f32.mrb[0].mxu0
      %v823 = vpop.f32.mrb[0].mxu0
      %v824 = vadd.f32 %v774, %v823
      %v825 = vpop.f32.mrb[0].mxu0
      %826 = vdwg.mxu0
      %v827 = vadd.f32 %v675, 1.0
      %v828 = vadd.f32 %v676, 1.0
      %vm829 = vcmp.ge.f32.partialorder %v827, 0.0
      %vm830 = vcmp.ge.f32.partialorder %v828, 0.0
      %vm831 = vmand %vm683, %vm829
      %vm832 = vmand %vm684, %vm830
      %vm833 = vcmp.lt.f32.partialorder %v827, 4.0
      %vm834 = vcmp.lt.f32.partialorder %v828, 4.0
      %vm835 = vmand %vm831, %vm833
      %vm836 = vmand %vm832, %vm834
      %v837 = vld [vmem:[#allocation2 + $0x5] sm:$0xff]
      %v838 = vld [vmem:[#allocation2 + $0xd] sm:$0xff]
      %v839 = vsel %vm835, 1, 0
      %v840 = vsel %vm836, 1, 0
      %vm841 = vcmp.eq.s32.totalorder %v839, 1
      %vm842 = vcmp.eq.s32.totalorder %v840, 1
      %v843 = vsel %vm841, %v837, 0.0
      %v844 = vsel %vm842, %v838, 0.0
      %v845 = vpack.c.bf16 %v844, %v843
      %v846 = vld [vmem:[%s7 + $0x10] sm:$0xf]
      %v847 = vld [vmem:[%s7 + $0x14] sm:$0xf]
      %v850 = vunpack.c.l.b16 %v846
      %v851 = vunpack.c.l.b16 %v847
      %v852 = vpack.c.b16 %v851, %v850
      %v855 = vsel %vm598, %v845, 0
      %857 = vmatprep.subr.bf16.mxu0 0
      %858 = vmatpush1.bf16.msra.mxu0 %v852
      %859 = vmatprep.subr.bf16.mxu0 0
      %860 = vmatpush1.bf16.msra.mxu0 0
      %861 = vmatprep.subr.bf16.mxu0 0
      %862 = vmatpush1.bf16.msra.mxu0 0
      %863 = vmatprep.subr.bf16.mxu0 0
      %864 = vmatpush1.bf16.msra.mxu0 0
      %865 = vmatprep.subr.bf16.mxu0 0
      %866 = vmatpush1.bf16.msra.mxu0 0
      %867 = vmatprep.subr.bf16.mxu0 0
      %868 = vmatpush1.bf16.msra.mxu0 0
      %869 = vmatprep.subr.bf16.mxu0 0
      %870 = vmatpush1.bf16.msra.mxu0 0
      %871 = vmatprep.subr.bf16.mxu0 0
      %872 = vmatpush1.bf16.msra.mxu0 0
      %873 = vmatprep.subr.bf16.mxu0 0
      %874 = vmatpush1.bf16.msra.mxu0 0
      %875 = vmatprep.subr.bf16.mxu0 0
      %876 = vmatpush1.bf16.msra.mxu0 0
      %877 = vmatprep.subr.bf16.mxu0 0
      %878 = vmatpush1.bf16.msra.mxu0 0
      %879 = vmatprep.subr.bf16.mxu0 0
      %880 = vmatpush1.bf16.msra.mxu0 0
      %881 = vmatprep.subr.bf16.mxu0 0
      %882 = vmatpush1.bf16.msra.mxu0 0
      %883 = vmatprep.subr.bf16.mxu0 0
      %884 = vmatpush1.bf16.msra.mxu0 0
      %885 = vmatprep.subr.bf16.mxu0 0
      %886 = vmatpush1.bf16.msra.mxu0 0
      %887 = vmatprep.subr.bf16.mxu0 0
      %888 = vmatpush1.bf16.msra.mxu0 0
      %889 = vmatprep.mubr.bf16.mxu0 0
      %890 = vmatmul.mubr.bf16.gmra.mrb[0].mxu0 %v855
      %v891 = vpop.f32.mrb[0].mxu0
      %v892 = vadd.f32 0.0, %v891
      %v893 = vpop.f32.mrb[0].mxu0
      %v894 = vpop.f32.mrb[0].mxu0
      %v895 = vadd.f32 0.0, %v894
      %v896 = vpop.f32.mrb[0].mxu0
      %897 = vdwg.mxu0
      %v898 = vadd.f32 %v821, %v892
      %v899 = vadd.f32 %v824, %v895
      %v900 = vadd.f32 %v671, 0.0
      %v901 = vadd.f32 %v672, 0.0
      %vm902 = vcmp.ge.f32.partialorder %v900, 0.0
      %vm903 = vcmp.ge.f32.partialorder %v901, 0.0
      %vm904 = vcmp.lt.f32.partialorder %v900, 4.0
      %vm905 = vcmp.lt.f32.partialorder %v901, 4.0
      %vm906 = vmand %vm902, %vm904
      %vm907 = vmand %vm903, %vm905
      %vm908 = vmand %vm906, %vm687
      %vm909 = vmand %vm907, %vm688
      %vm910 = vmand %vm908, %vm691
      %vm911 = vmand %vm909, %vm692
      %v912 = vld [vmem:[#allocation2 + $0x7] sm:$0xff]
      %v913 = vld [vmem:[#allocation2 + $0xf] sm:$0xff]
      %v914 = vsel %vm910, 1, 0
      %v915 = vsel %vm911, 1, 0
      %vm916 = vcmp.eq.s32.totalorder %v914, 1
      %vm917 = vcmp.eq.s32.totalorder %v915, 1
      %v918 = vsel %vm916, %v912, 0.0
      %v919 = vsel %vm917, %v913, 0.0
      %v920 = vpack.c.bf16 %v919, %v918
      %v921 = vld [vmem:[%s7 + $0x18] sm:$0xf]
      %v922 = vld [vmem:[%s7 + $0x1c] sm:$0xf]
      %v925 = vunpack.c.l.b16 %v921
      %v926 = vunpack.c.l.b16 %v922
      %v927 = vpack.c.b16 %v926, %v925
      %v930 = vsel %vm598, %v920, 0
      %932 = vmatprep.subr.bf16.mxu0 0
      %933 = vmatpush1.bf16.msra.mxu0 %v927
      %934 = vmatprep.subr.bf16.mxu0 0
      %935 = vmatpush1.bf16.msra.mxu0 0
      %936 = vmatprep.subr.bf16.mxu0 0
      %937 = vmatpush1.bf16.msra.mxu0 0
      %938 = vmatprep.subr.bf16.mxu0 0
      %939 = vmatpush1.bf16.msra.mxu0 0
      %940 = vmatprep.subr.bf16.mxu0 0
      %941 = vmatpush1.bf16.msra.mxu0 0
      %942 = vmatprep.subr.bf16.mxu0 0
      %943 = vmatpush1.bf16.msra.mxu0 0
      %944 = vmatprep.subr.bf16.mxu0 0
      %945 = vmatpush1.bf16.msra.mxu0 0
      %946 = vmatprep.subr.bf16.mxu0 0
      %947 = vmatpush1.bf16.msra.mxu0 0
      %948 = vmatprep.subr.bf16.mxu0 0
      %949 = vmatpush1.bf16.msra.mxu0 0
      %950 = vmatprep.subr.bf16.mxu0 0
      %951 = vmatpush1.bf16.msra.mxu0 0
      %952 = vmatprep.subr.bf16.mxu0 0
      %953 = vmatpush1.bf16.msra.mxu0 0
      %954 = vmatprep.subr.bf16.mxu0 0
      %955 = vmatpush1.bf16.msra.mxu0 0
      %956 = vmatprep.subr.bf16.mxu0 0
      %957 = vmatpush1.bf16.msra.mxu0 0
      %958 = vmatprep.subr.bf16.mxu0 0
      %959 = vmatpush1.bf16.msra.mxu0 0
      %960 = vmatprep.subr.bf16.mxu0 0
      %961 = vmatpush1.bf16.msra.mxu0 0
      %962 = vmatprep.subr.bf16.mxu0 0
      %963 = vmatpush1.bf16.msra.mxu0 0
      %964 = vmatprep.mubr.bf16.mxu0 0
      %965 = vmatmul.mubr.bf16.gmra.mrb[0].mxu0 %v930
      %v966 = vpop.f32.mrb[0].mxu0
      %v967 = vadd.f32 0.0, %v966
      %v968 = vpop.f32.mrb[0].mxu0
      %v969 = vpop.f32.mrb[0].mxu0
      %v970 = vadd.f32 0.0, %v969
      %v971 = vpop.f32.mrb[0].mxu0
      %972 = vdwg.mxu0
      %v973 = vadd.f32 %v898, %v967
      %v974 = vadd.f32 %v899, %v970
      %vm975 = vmand %vm906, %vm708
      %vm976 = vmand %vm907, %vm709
      %vm977 = vmand %vm975, %vm712
      %vm978 = vmand %vm976, %vm713
      %v979 = vld [vmem:[#allocation2 + $0x8] sm:$0xff]
      %v980 = vld [vmem:[#allocation2 + $0x10] sm:$0xff]
      %v981 = vsel %vm977, 1, 0
      %v982 = vsel %vm978, 1, 0
      %vm983 = vcmp.eq.s32.totalorder %v981, 1
      %vm984 = vcmp.eq.s32.totalorder %v982, 1
      %v985 = vsel %vm983, %v979, 0.0
      %v986 = vsel %vm984, %v980, 0.0
      %v987 = vpack.c.bf16 %v986, %v985
      %v988 = vld [vmem:[%s7 + $0x20] sm:$0xf]
      %v989 = vld [vmem:[%s7 + $0x24] sm:$0xf]
      %v992 = vunpack.c.l.b16 %v988
      %v993 = vunpack.c.l.b16 %v989
      %v994 = vpack.c.b16 %v993, %v992
      %v997 = vsel %vm598, %v987, 0
      %999 = vmatprep.subr.bf16.mxu0 0
      %1000 = vmatpush1.bf16.msra.mxu0 %v994
      %1001 = vmatprep.subr.bf16.mxu0 0
      %1002 = vmatpush1.bf16.msra.mxu0 0
      %1003 = vmatprep.subr.bf16.mxu0 0
      %1004 = vmatpush1.bf16.msra.mxu0 0
      %1005 = vmatprep.subr.bf16.mxu0 0
      %1006 = vmatpush1.bf16.msra.mxu0 0
      %1007 = vmatprep.subr.bf16.mxu0 0
      %1008 = vmatpush1.bf16.msra.mxu0 0
      %1009 = vmatprep.subr.bf16.mxu0 0
      %1010 = vmatpush1.bf16.msra.mxu0 0
      %1011 = vmatprep.subr.bf16.mxu0 0
      %1012 = vmatpush1.bf16.msra.mxu0 0
      %1013 = vmatprep.subr.bf16.mxu0 0
      %1014 = vmatpush1.bf16.msra.mxu0 0
      %1015 = vmatprep.subr.bf16.mxu0 0
      %1016 = vmatpush1.bf16.msra.mxu0 0
      %1017 = vmatprep.subr.bf16.mxu0 0
      %1018 = vmatpush1.bf16.msra.mxu0 0
      %1019 = vmatprep.subr.bf16.mxu0 0
      %1020 = vmatpush1.bf16.msra.mxu0 0
      %1021 = vmatprep.subr.bf16.mxu0 0
      %1022 = vmatpush1.bf16.msra.mxu0 0
      %1023 = vmatprep.subr.bf16.mxu0 0
      %1024 = vmatpush1.bf16.msra.mxu0 0
      %1025 = vmatprep.subr.bf16.mxu0 0
      %1026 = vmatpush1.bf16.msra.mxu0 0
      %1027 = vmatprep.subr.bf16.mxu0 0
      %1028 = vmatpush1.bf16.msra.mxu0 0
      %1029 = vmatprep.subr.bf16.mxu0 0
      %1030 = vmatpush1.bf16.msra.mxu0 0
      %1031 = vmatprep.mubr.bf16.mxu0 0
      %1032 = vmatmul.mubr.bf16.gmra.mrb[0].mxu0 %v997
      %v1033 = vpop.f32.mrb[0].mxu0
      %v1034 = vadd.f32 0.0, %v1033
      %v1035 = vpop.f32.mrb[0].mxu0
      %v1036 = vpop.f32.mrb[0].mxu0
      %v1037 = vadd.f32 0.0, %v1036
      %v1038 = vpop.f32.mrb[0].mxu0
      %1039 = vdwg.mxu0
      %v1040 = vadd.f32 %v973, %v1034
      %v1041 = vadd.f32 %v974, %v1037
      %vm1042 = vmand %vm906, %vm829
      %vm1043 = vmand %vm907, %vm830
      %vm1044 = vmand %vm1042, %vm833
      %vm1045 = vmand %vm1043, %vm834
      %v1046 = vld [vmem:[#allocation2 + $0x9] sm:$0xff]
      %v1047 = vld [vmem:[#allocation2 + $0x11] sm:$0xff]
      %v1048 = vsel %vm1044, 1, 0
      %v1049 = vsel %vm1045, 1, 0
      %vm1050 = vcmp.eq.s32.totalorder %v1048, 1
      %vm1051 = vcmp.eq.s32.totalorder %v1049, 1
      %v1052 = vsel %vm1050, %v1046, 0.0
      %v1053 = vsel %vm1051, %v1047, 0.0
      %v1054 = vpack.c.bf16 %v1053, %v1052
      %v1055 = vld [vmem:[%s7 + $0x28] sm:$0xf]
      %v1056 = vld [vmem:[%s7 + $0x2c] sm:$0xf]
      %v1059 = vunpack.c.l.b16 %v1055
      %v1060 = vunpack.c.l.b16 %v1056
      %v1061 = vpack.c.b16 %v1060, %v1059
      %v1064 = vsel %vm598, %v1054, 0
      %1066 = vmatprep.subr.bf16.mxu0 0
      %1067 = vmatpush1.bf16.msra.mxu0 %v1061
      %1068 = vmatprep.subr.bf16.mxu0 0
      %1069 = vmatpush1.bf16.msra.mxu0 0
      %1070 = vmatprep.subr.bf16.mxu0 0
      %1071 = vmatpush1.bf16.msra.mxu0 0
      %1072 = vmatprep.subr.bf16.mxu0 0
      %1073 = vmatpush1.bf16.msra.mxu0 0
      %1074 = vmatprep.subr.bf16.mxu0 0
      %1075 = vmatpush1.bf16.msra.mxu0 0
      %1076 = vmatprep.subr.bf16.mxu0 0
      %1077 = vmatpush1.bf16.msra.mxu0 0
      %1078 = vmatprep.subr.bf16.mxu0 0
      %1079 = vmatpush1.bf16.msra.mxu0 0
      %1080 = vmatprep.subr.bf16.mxu0 0
      %1081 = vmatpush1.bf16.msra.mxu0 0
      %1082 = vmatprep.subr.bf16.mxu0 0
      %1083 = vmatpush1.bf16.msra.mxu0 0
      %1084 = vmatprep.subr.bf16.mxu0 0
      %1085 = vmatpush1.bf16.msra.mxu0 0
      %1086 = vmatprep.subr.bf16.mxu0 0
      %1087 = vmatpush1.bf16.msra.mxu0 0
      %1088 = vmatprep.subr.bf16.mxu0 0
      %1089 = vmatpush1.bf16.msra.mxu0 0
      %1090 = vmatprep.subr.bf16.mxu0 0
      %1091 = vmatpush1.bf16.msra.mxu0 0
      %1092 = vmatprep.subr.bf16.mxu0 0
      %1093 = vmatpush1.bf16.msra.mxu0 0
      %1094 = vmatprep.subr.bf16.mxu0 0
      %1095 = vmatpush1.bf16.msra.mxu0 0
      %1096 = vmatprep.subr.bf16.mxu0 0
      %1097 = vmatpush1.bf16.msra.mxu0 0
      %1098 = vmatprep.mubr.bf16.mxu0 0
      %1099 = vmatmul.mubr.bf16.gmra.mrb[0].mxu0 %v1064
      %v1100 = vpop.f32.mrb[0].mxu0
      %v1101 = vadd.f32 0.0, %v1100
      %v1102 = vpop.f32.mrb[0].mxu0
      %v1103 = vpop.f32.mrb[0].mxu0
      %v1104 = vadd.f32 0.0, %v1103
      %v1105 = vpop.f32.mrb[0].mxu0
      %1106 = vdwg.mxu0
      %v1107 = vadd.f32 %v1040, %v1101
      %v1108 = vadd.f32 %v1041, %v1104
      %v1109 = vadd.f32 %v671, 1.0
      %v1110 = vadd.f32 %v672, 1.0
      %vm1111 = vcmp.ge.f32.partialorder %v1109, 0.0
      %vm1112 = vcmp.ge.f32.partialorder %v1110, 0.0
      %vm1113 = vcmp.lt.f32.partialorder %v1109, 4.0
      %vm1114 = vcmp.lt.f32.partialorder %v1110, 4.0
      %vm1115 = vmand %vm1111, %vm1113
      %vm1116 = vmand %vm1112, %vm1114
      %vm1117 = vmand %vm1115, %vm687
      %vm1118 = vmand %vm1116, %vm688
      %vm1119 = vmand %vm1117, %vm691
      %vm1120 = vmand %vm1118, %vm692
      %v1121 = vld [vmem:[#allocation2 + $0xb] sm:$0xff]
      %v1122 = vld [vmem:[#allocation2 + $0x13] sm:$0xff]
      %v1123 = vsel %vm1119, 1, 0
      %v1124 = vsel %vm1120, 1, 0
      %vm1125 = vcmp.eq.s32.totalorder %v1123, 1
      %vm1126 = vcmp.eq.s32.totalorder %v1124, 1
      %v1127 = vsel %vm1125, %v1121, 0.0
      %v1128 = vsel %vm1126, %v1122, 0.0
      %v1129 = vpack.c.bf16 %v1128, %v1127
      %v1130 = vld [vmem:[%s7 + $0x30] sm:$0xf]
      %v1131 = vld [vmem:[%s7 + $0x34] sm:$0xf]
      %v1134 = vunpack.c.l.b16 %v1130
      %v1135 = vunpack.c.l.b16 %v1131
      %v1136 = vpack.c.b16 %v1135, %v1134
      %v1139 = vsel %vm598, %v1129, 0
      %1141 = vmatprep.subr.bf16.mxu0 0
      %1142 = vmatpush1.bf16.msra.mxu0 %v1136
      %1143 = vmatprep.subr.bf16.mxu0 0
      %1144 = vmatpush1.bf16.msra.mxu0 0
      %1145 = vmatprep.subr.bf16.mxu0 0
      %1146 = vmatpush1.bf16.msra.mxu0 0
      %1147 = vmatprep.subr.bf16.mxu0 0
      %1148 = vmatpush1.bf16.msra.mxu0 0
      %1149 = vmatprep.subr.bf16.mxu0 0
      %1150 = vmatpush1.bf16.msra.mxu0 0
      %1151 = vmatprep.subr.bf16.mxu0 0
      %1152 = vmatpush1.bf16.msra.mxu0 0
      %1153 = vmatprep.subr.bf16.mxu0 0
      %1154 = vmatpush1.bf16.msra.mxu0 0
      %1155 = vmatprep.subr.bf16.mxu0 0
      %1156 = vmatpush1.bf16.msra.mxu0 0
      %1157 = vmatprep.subr.bf16.mxu0 0
      %1158 = vmatpush1.bf16.msra.mxu0 0
      %1159 = vmatprep.subr.bf16.mxu0 0
      %1160 = vmatpush1.bf16.msra.mxu0 0
      %1161 = vmatprep.subr.bf16.mxu0 0
      %1162 = vmatpush1.bf16.msra.mxu0 0
      %1163 = vmatprep.subr.bf16.mxu0 0
      %1164 = vmatpush1.bf16.msra.mxu0 0
      %1165 = vmatprep.subr.bf16.mxu0 0
      %1166 = vmatpush1.bf16.msra.mxu0 0
      %1167 = vmatprep.subr.bf16.mxu0 0
      %1168 = vmatpush1.bf16.msra.mxu0 0
      %1169 = vmatprep.subr.bf16.mxu0 0
      %1170 = vmatpush1.bf16.msra.mxu0 0
      %1171 = vmatprep.subr.bf16.mxu0 0
      %1172 = vmatpush1.bf16.msra.mxu0 0
      %1173 = vmatprep.mubr.bf16.mxu0 0
      %1174 = vmatmul.mubr.bf16.gmra.mrb[0].mxu0 %v1139
      %v1175 = vpop.f32.mrb[0].mxu0
      %v1176 = vadd.f32 0.0, %v1175
      %v1177 = vpop.f32.mrb[0].mxu0
      %v1178 = vpop.f32.mrb[0].mxu0
      %v1179 = vadd.f32 0.0, %v1178
      %v1180 = vpop.f32.mrb[0].mxu0
      %1181 = vdwg.mxu0
      %v1182 = vadd.f32 %v1107, %v1176
      %v1183 = vadd.f32 %v1108, %v1179
      %vm1184 = vmand %vm1115, %vm708
      %vm1185 = vmand %vm1116, %vm709
      %vm1186 = vmand %vm1184, %vm712
      %vm1187 = vmand %vm1185, %vm713
      %v1188 = vld [vmem:[#allocation2 + $0xc] sm:$0xff]
      %v1189 = vld [vmem:[#allocation2 + $0x14] sm:$0xff]
      %v1190 = vsel %vm1186, 1, 0
      %v1191 = vsel %vm1187, 1, 0
      %vm1192 = vcmp.eq.s32.totalorder %v1190, 1
      %vm1193 = vcmp.eq.s32.totalorder %v1191, 1
      %v1194 = vsel %vm1192, %v1188, 0.0
      %v1195 = vsel %vm1193, %v1189, 0.0
      %v1196 = vpack.c.bf16 %v1195, %v1194
      %v1197 = vld [vmem:[%s7 + $0x38] sm:$0xf]
      %v1198 = vld [vmem:[%s7 + $0x3c] sm:$0xf]
      %v1201 = vunpack.c.l.b16 %v1197
      %v1202 = vunpack.c.l.b16 %v1198
      %v1203 = vpack.c.b16 %v1202, %v1201
      %v1206 = vsel %vm598, %v1196, 0
      %1208 = vmatprep.subr.bf16.mxu0 0
      %1209 = vmatpush1.bf16.msra.mxu0 %v1203
      %1210 = vmatprep.subr.bf16.mxu0 0
      %1211 = vmatpush1.bf16.msra.mxu0 0
      %1212 = vmatprep.subr.bf16.mxu0 0
      %1213 = vmatpush1.bf16.msra.mxu0 0
      %1214 = vmatprep.subr.bf16.mxu0 0
      %1215 = vmatpush1.bf16.msra.mxu0 0
      %1216 = vmatprep.subr.bf16.mxu0 0
      %1217 = vmatpush1.bf16.msra.mxu0 0
      %1218 = vmatprep.subr.bf16.mxu0 0
      %1219 = vmatpush1.bf16.msra.mxu0 0
      %1220 = vmatprep.subr.bf16.mxu0 0
      %1221 = vmatpush1.bf16.msra.mxu0 0
      %1222 = vmatprep.subr.bf16.mxu0 0
      %1223 = vmatpush1.bf16.msra.mxu0 0
      %1224 = vmatprep.subr.bf16.mxu0 0
      %1225 = vmatpush1.bf16.msra.mxu0 0
      %1226 = vmatprep.subr.bf16.mxu0 0
      %1227 = vmatpush1.bf16.msra.mxu0 0
      %1228 = vmatprep.subr.bf16.mxu0 0
      %1229 = vmatpush1.bf16.msra.mxu0 0
      %1230 = vmatprep.subr.bf16.mxu0 0
      %1231 = vmatpush1.bf16.msra.mxu0 0
      %1232 = vmatprep.subr.bf16.mxu0 0
      %1233 = vmatpush1.bf16.msra.mxu0 0
      %1234 = vmatprep.subr.bf16.mxu0 0
      %1235 = vmatpush1.bf16.msra.mxu0 0
      %1236 = vmatprep.subr.bf16.mxu0 0
      %1237 = vmatpush1.bf16.msra.mxu0 0
      %1238 = vmatprep.subr.bf16.mxu0 0
      %1239 = vmatpush1.bf16.msra.mxu0 0
      %1240 = vmatprep.mubr.bf16.mxu0 0
      %1241 = vmatmul.mubr.bf16.gmra.mrb[0].mxu0 %v1206
      %v1242 = vpop.f32.mrb[0].mxu0
      %v1243 = vadd.f32 0.0, %v1242
      %v1244 = vpop.f32.mrb[0].mxu0
      %v1245 = vpop.f32.mrb[0].mxu0
      %v1246 = vadd.f32 0.0, %v1245
      %v1247 = vpop.f32.mrb[0].mxu0
      %1248 = vdwg.mxu0
      %v1249 = vadd.f32 %v1182, %v1243
      %v1250 = vadd.f32 %v1183, %v1246
      %vm1251 = vmand %vm1115, %vm829
      %vm1252 = vmand %vm1116, %vm830
      %vm1253 = vmand %vm1251, %vm833
      %vm1254 = vmand %vm1252, %vm834
      %v1255 = vld [vmem:[#allocation2 + $0xd] sm:$0xff]
      %v1256 = vld [vmem:[#allocation2 + $0x15] sm:$0xff]
      %v1257 = vsel %vm1253, 1, 0
      %v1258 = vsel %vm1254, 1, 0
      %vm1259 = vcmp.eq.s32.totalorder %v1257, 1
      %vm1260 = vcmp.eq.s32.totalorder %v1258, 1
      %v1261 = vsel %vm1259, %v1255, 0.0
      %v1262 = vsel %vm1260, %v1256, 0.0
      %v1263 = vpack.c.bf16 %v1262, %v1261
      %v1264 = vld [vmem:[%s7 + $0x40] sm:$0xf]
      %v1265 = vld [vmem:[%s7 + $0x44] sm:$0xf]
      %v1268 = vunpack.c.l.b16 %v1264
      %v1269 = vunpack.c.l.b16 %v1265
      %v1270 = vpack.c.b16 %v1269, %v1268
      %v1273 = vsel %vm598, %v1263, 0
      %1275 = vmatprep.subr.bf16.mxu0 0
      %1276 = vmatpush1.bf16.msra.mxu0 %v1270
      %1277 = vmatprep.subr.bf16.mxu0 0
      %1278 = vmatpush1.bf16.msra.mxu0 0
      %1279 = vmatprep.subr.bf16.mxu0 0
      %1280 = vmatpush1.bf16.msra.mxu0 0
      %1281 = vmatprep.subr.bf16.mxu0 0
      %1282 = vmatpush1.bf16.msra.mxu0 0
      %1283 = vmatprep.subr.bf16.mxu0 0
      %1284 = vmatpush1.bf16.msra.mxu0 0
      %1285 = vmatprep.subr.bf16.mxu0 0
      %1286 = vmatpush1.bf16.msra.mxu0 0
      %1287 = vmatprep.subr.bf16.mxu0 0
      %1288 = vmatpush1.bf16.msra.mxu0 0
      %1289 = vmatprep.subr.bf16.mxu0 0
      %1290 = vmatpush1.bf16.msra.mxu0 0
      %1291 = vmatprep.subr.bf16.mxu0 0
      %1292 = vmatpush1.bf16.msra.mxu0 0
      %1293 = vmatprep.subr.bf16.mxu0 0
      %1294 = vmatpush1.bf16.msra.mxu0 0
      %1295 = vmatprep.subr.bf16.mxu0 0
      %1296 = vmatpush1.bf16.msra.mxu0 0
      %1297 = vmatprep.subr.bf16.mxu0 0
      %1298 = vmatpush1.bf16.msra.mxu0 0
      %1299 = vmatprep.subr.bf16.mxu0 0
      %1300 = vmatpush1.bf16.msra.mxu0 0
      %1301 = vmatprep.subr.bf16.mxu0 0
      %1302 = vmatpush1.bf16.msra.mxu0 0
      %1303 = vmatprep.subr.bf16.mxu0 0
      %1304 = vmatpush1.bf16.msra.mxu0 0
      %1305 = vmatprep.subr.bf16.mxu0 0
      %1306 = vmatpush1.bf16.msra.mxu0 0
      %1307 = vmatprep.mubr.bf16.mxu0 0
      %1308 = vmatmul.mubr.bf16.gmra.mrb[0].mxu0 %v1273
      %v1309 = vpop.f32.mrb[0].mxu0
      %v1310 = vadd.f32 0.0, %v1309
      %v1311 = vpop.f32.mrb[0].mxu0
      %v1312 = vpop.f32.mrb[0].mxu0
      %v1313 = vadd.f32 0.0, %v1312
      %v1314 = vpop.f32.mrb[0].mxu0
      %1315 = vdwg.mxu0
      %v1316 = vadd.f32 %v1249, %v1310
      %v1317 = vadd.f32 %v1250, %v1313
      %v1318 = vld [vmem:[%s8] sm:$0x1]
      %v1320 = vlaneseq
      %v1321 = vshrl.u32 %v1320, 7
      %v1322 = vsub.s32 0, %v1321
      %v1323 = vrot.slane %v1318, %v1322
      %v1325 = vadd.f32 %v1316, %v1323
      %v1326 = vadd.f32 %v1317, %v1323
      %v1327 = vxor.u32 %v1325, 2147483648
      %v1328 = vxor.u32 %v1326, 2147483648
      %v1329 = vmul.f32 %v1327, 1.442695
      %v1330 = vpow.pop %v1329
      %v1331 = vmul.f32 %v1328, 1.442695
      %v1332 = vpow.pop %v1331
      %v1333 = vadd.f32 %v1330, 1.0
      %v1334 = vadd.f32 %v1332, 1.0
      %v1335 = vrcp.pop %v1333
      %v1336 = vmul.f32 1.0, %v1335
      %v1337 = vrcp.pop %v1334
      %v1338 = vmul.f32 1.0, %v1337
      %v1339 = vmul.f32 %v1325, %v1336
      %v1340 = vmul.f32 %v1326, %v1338
      %v1341 = vadd.f32 %v502, %v1339
      %v1342 = vadd.f32 %v503, %v1340
      %v1343 = vpack.c.bf16 %v1342, %v1341
      %v1344 = vld [vmem:[%s9] sm:$0xf]
      %v1345 = vld [vmem:[%s9 + $0x4] sm:$0xf]
      %v1346 = vpack.c.bf16 %v581, %v580
      %v1347 = vld [vmem:[%s10] sm:$0xf]
      %v1348 = vld [vmem:[%s10 + $0x4] sm:$0xf]
      %v1351 = vunpack.c.l.b16 %v1347
      %v1352 = vunpack.c.l.b16 %v1348
      %v1353 = vpack.c.b16 %v1352, %v1351
      %v1356 = vsel %vm598, %v1346, 0
      %1358 = vmatprep.subr.bf16.mxu0 0
      %1359 = vmatpush1.bf16.msra.mxu0 %v1353
      %1360 = vmatprep.subr.bf16.mxu0 0
      %1361 = vmatpush1.bf16.msra.mxu0 0
      %1362 = vmatprep.subr.bf16.mxu0 0
      %1363 = vmatpush1.bf16.msra.mxu0 0
      %1364 = vmatprep.subr.bf16.mxu0 0
      %1365 = vmatpush1.bf16.msra.mxu0 0
      %1366 = vmatprep.subr.bf16.mxu0 0
      %1367 = vmatpush1.bf16.msra.mxu0 0
      %1368 = vmatprep.subr.bf16.mxu0 0
      %1369 = vmatpush1.bf16.msra.mxu0 0
      %1370 = vmatprep.subr.bf16.mxu0 0
      %1371 = vmatpush1.bf16.msra.mxu0 0
      %1372 = vmatprep.subr.bf16.mxu0 0
      %1373 = vmatpush1.bf16.msra.mxu0 0
      %1374 = vmatprep.subr.bf16.mxu0 0
      %1375 = vmatpush1.bf16.msra.mxu0 0
      %1376 = vmatprep.subr.bf16.mxu0 0
      %1377 = vmatpush1.bf16.msra.mxu0 0
      %1378 = vmatprep.subr.bf16.mxu0 0
      %1379 = vmatpush1.bf16.msra.mxu0 0
      %1380 = vmatprep.subr.bf16.mxu0 0
      %1381 = vmatpush1.bf16.msra.mxu0 0
      %1382 = vmatprep.subr.bf16.mxu0 0
      %1383 = vmatpush1.bf16.msra.mxu0 0
      %1384 = vmatprep.subr.bf16.mxu0 0
      %1385 = vmatpush1.bf16.msra.mxu0 0
      %1386 = vmatprep.subr.bf16.mxu0 0
      %1387 = vmatpush1.bf16.msra.mxu0 0
      %1388 = vmatprep.subr.bf16.mxu0 0
      %1389 = vmatpush1.bf16.msra.mxu0 0
      %1390 = vmatprep.mubr.bf16.mxu0 0
      %1391 = vmatmul.mubr.bf16.gmra.mrb[0].mxu0 %v1356
      %v1392 = vpop.f32.mrb[0].mxu0
      %v1393 = vadd.f32 0.0, %v1392
      %v1394 = vpop.f32.mrb[0].mxu0
      %v1395 = vpop.f32.mrb[0].mxu0
      %v1396 = vadd.f32 0.0, %v1395
      %v1397 = vpop.f32.mrb[0].mxu0
      %1398 = vdwg.mxu0
      %v1401 = vunpack.c.l.b16 %v1344
      %v1402 = vunpack.c.l.b16 %v1345
      %v1403 = vpack.c.b16 %v1402, %v1401
      %v1406 = vsel %vm598, %v1343, 0
      %1408 = vmatprep.subr.bf16.mxu0 0
      %1409 = vmatpush1.bf16.msra.mxu0 %v1403
      %1410 = vmatprep.subr.bf16.mxu0 0
      %1411 = vmatpush1.bf16.msra.mxu0 0
      %1412 = vmatprep.subr.bf16.mxu0 0
      %1413 = vmatpush1.bf16.msra.mxu0 0
      %1414 = vmatprep.subr.bf16.mxu0 0
      %1415 = vmatpush1.bf16.msra.mxu0 0
      %1416 = vmatprep.subr.bf16.mxu0 0
      %1417 = vmatpush1.bf16.msra.mxu0 0
      %1418 = vmatprep.subr.bf16.mxu0 0
      %1419 = vmatpush1.bf16.msra.mxu0 0
      %1420 = vmatprep.subr.bf16.mxu0 0
      %1421 = vmatpush1.bf16.msra.mxu0 0
      %1422 = vmatprep.subr.bf16.mxu0 0
      %1423 = vmatpush1.bf16.msra.mxu0 0
      %1424 = vmatprep.subr.bf16.mxu0 0
      %1425 = vmatpush1.bf16.msra.mxu0 0
      %1426 = vmatprep.subr.bf16.mxu0 0
      %1427 = vmatpush1.bf16.msra.mxu0 0
      %1428 = vmatprep.subr.bf16.mxu0 0
      %1429 = vmatpush1.bf16.msra.mxu0 0
      %1430 = vmatprep.subr.bf16.mxu0 0
      %1431 = vmatpush1.bf16.msra.mxu0 0
      %1432 = vmatprep.subr.bf16.mxu0 0
      %1433 = vmatpush1.bf16.msra.mxu0 0
      %1434 = vmatprep.subr.bf16.mxu0 0
      %1435 = vmatpush1.bf16.msra.mxu0 0
      %1436 = vmatprep.subr.bf16.mxu0 0
      %1437 = vmatpush1.bf16.msra.mxu0 0
      %1438 = vmatprep.subr.bf16.mxu0 0
      %1439 = vmatpush1.bf16.msra.mxu0 0
      %1440 = vmatprep.mubr.bf16.mxu0 0
      %1441 = vmatmul.mubr.bf16.gmra.mrb[0].mxu0 %v1406
      %v1442 = vpop.f32.mrb[0].mxu0
      %v1443 = vadd.f32 %v1393, %v1442
      %v1444 = vpop.f32.mrb[0].mxu0
      %v1445 = vpop.f32.mrb[0].mxu0
      %v1446 = vadd.f32 %v1396, %v1445
      %v1447 = vpop.f32.mrb[0].mxu0
      %1448 = vdwg.mxu0
      %v1449 = vld [vmem:[%s11] sm:$0x1]
      %v1451 = vlaneseq
      %v1452 = vshrl.u32 %v1451, 7
      %v1453 = vsub.s32 0, %v1452
      %v1454 = vrot.slane %v1449, %v1453
      %v1456 = vadd.f32 %v1443, %v1454
      %v1457 = vadd.f32 %v1446, %v1454
      %v1458 = vxor.u32 %v1456, 2147483648
      %v1459 = vxor.u32 %v1457, 2147483648
      %v1460 = vmul.f32 %v1458, 1.442695
      %v1461 = vpow.pop %v1460
      %v1462 = vmul.f32 %v1459, 1.442695
      %v1463 = vpow.pop %v1462
      %v1464 = vadd.f32 %v1461, 1.0
      %v1465 = vadd.f32 %v1463, 1.0
      %v1466 = vrcp.pop %v1464
      %v1467 = vmul.f32 1.0, %v1466
      %v1468 = vrcp.pop %v1465
      %v1469 = vmul.f32 1.0, %v1468
      %v1470 = vmul.f32 %v1456, %v1467
      %v1471 = vmul.f32 %v1457, %v1469
      %v1472 = vpack.c.bf16 %v1471, %v1470
      %v1474 = vunpack.c.l.b16 %v1472
      %v1475 = vunpack.c.h.b16 %v1472
      %v1476 = vpack.c.b16 %v1474, %v1474
      %v1477 = vpack.c.b16 %v1475, %v1475
      %vm1480 = vcmask 257024
      %1481 = vst.msk [vmem:[%s413] sm:$0xf] %vm1480, %v1476
      %1482 = vst.msk [vmem:[%s413 + $0x4] sm:$0xf] %vm1480, %v1477
      %p1483 = scmp.lt.s32.totalorder %s23, 1
      %s1484 = scalar_select %p1483, %s23, 1
      %s1485 = smul.addr %s1484, 2
      %s1486 = smul.addr %s1485, 4
      %s1487 = scalar_lea.vmem %s12, %s1486
      // Predicated region
      $region69: #{yolov5_forward.7} parent=67 // pred_check
        %p1488 = pneg %p298
      $region70: #{yolov5_forward.7} parent=67 // pred_check_branch
        %1490 = sbr.rel (%p1488) target = $region72
      $region71: #{yolov5_forward.7} parent=67 // pred_region
        _
      $region72: #{yolov5_forward.7} parent=67 // pred_fallthru
        _
    $region68: #{yolov5_forward.7} parent=5 // pred_fallthru
      _
    %p1491 = scmp.le.s32.totalorder 2, %s18
    // Predicated region
    $region73: #{yolov5_forward.7} parent=5 // pred_check
      %p1492 = pneg %p1491
    $region74: #{yolov5_forward.7} parent=5 // pred_check_branch
      %1494 = sbr.rel (%p1492) target = $region76
    $region75: #{yolov5_forward.7} parent=5 // pred_region
      %s1495 = ssub.s32 %s18, 2
      // Predicated region
      $region77: #{yolov5_forward.7} parent=75 // pred_check
        %p1496 = pneg %p304
      $region78: #{yolov5_forward.7} parent=75 // pred_check_branch
        %1498 = sbr.rel (%p1496) target = $region80
      $region79: #{yolov5_forward.7} parent=75 // pred_region
        %p1499 = scmp.lt.s32.totalorder %s24, 1
        %s1500 = scalar_select %p1499, %s24, 1
        %s1501 = smul.addr %s1500, 2
        %s1502 = smul.addr %s1501, 4
        %s1503 = scalar_lea.vmem %s12, %s1502
      $region80: #{yolov5_forward.7} parent=75 // pred_fallthru
        _
    $region76: #{yolov5_forward.7} parent=5 // pred_fallthru
      _
  $region6: #{yolov5_forward.7} parent=0 // loop_footer
    %s22 = sadd.s32 1, %s18
  $region7: #{yolov5_forward.7} parent=0 // loop_footer_branch
    %17 = sbr.rel target = $region3
  $region8: #{yolov5_forward.7} parent=0 // loop_exit
    _

</llo_original>
